<compile_context>
chip_gen: v6e
topology: v6e:2x2x1
jax: 0.10.0
libtpu: 0.0.40
codegen_flags: <defaults>
</compile_context>

<pallas_src>
import functools
import math

import jax
import jax.numpy as jnp
from jax import lax
from jax.experimental import pallas as pl
from jax.experimental.pallas import tpu as pltpu


def _pick_tile(n, preferred):
    """Largest tile <= preferred that divides n (falls back to the full dim -> always legal)."""
    for t in (preferred, 512, 256, 128, 64, 32, 16, 8):
        if t <= n and n % t == 0:
            return t
    return n


# --------------------------------------------------------------------------- #
# Kernel 1: fused linear projection + head split:  (B,S,K) -> (B,H,S,d_k)
# --------------------------------------------------------------------------- #

def _proj_heads_kernel(x_ref, w_ref, b_ref, o_ref, acc_ref):
    k = pl.program_id(3)                      # K-reduction axis (innermost, "arbitrary")

    @pl.when(k == 0)
    def _init():
        acc_ref[...] = jnp.zeros_like(acc_ref)

    acc_ref[...] += jnp.dot(x_ref[0], w_ref[0], preferred_element_type=jnp.float32)

    @pl.when(k == pl.num_programs(3) - 1)
    def _finalize():
        o_ref[0, 0] = (acc_ref[...] + b_ref[0].astype(jnp.float32)).astype(o_ref.dtype)


def linear_to_heads(x, w, b, n_heads, *, ts_pref=256, tk_pref=512):
    """y = x @ w + b, written directly in (B, n_heads, S, d_k) layout."""
    B, S, K = x.shape
    N = w.shape[1]
    assert N % n_heads == 0
    d_k = N // n_heads
    ts = _pick_tile(S, ts_pref)
    tk = _pick_tile(K, tk_pref)

    # One-time layout plumbing on the (small) weight so every block is (8,128)-legal.
    w_h = w.reshape(K, n_heads, d_k).transpose(1, 0, 2)   # (H, K, d_k)
    b_h = b.reshape(n_heads, 1, d_k)                      # (H, 1, d_k)

    return pl.pallas_call(
        _proj_heads_kernel,
        out_shape=jax.ShapeDtypeStruct((B, n_heads, S, d_k), x.dtype),
        grid=(B, n_heads, S // ts, K // tk),
        in_specs=[
            pl.BlockSpec((1, ts, tk), lambda b_, h, si, ki: (b_, si, ki)),
            pl.BlockSpec((1, tk, d_k), lambda b_, h, si, ki: (h, ki, 0)),
            pl.BlockSpec((1, 1, d_k), lambda b_, h, si, ki: (h, 0, 0)),
        ],
        out_specs=pl.BlockSpec((1, 1, ts, d_k), lambda b_, h, si, ki: (b_, h, si, 0)),
        scratch_shapes=[pltpu.VMEM((ts, d_k), jnp.float32)],
        compiler_params=pltpu.CompilerParams(
            dimension_semantics=("parallel", "parallel", "parallel", "arbitrary")),
    )(x, w_h, b_h)


# --------------------------------------------------------------------------- #
# Kernel 2: fused scaled-dot-product attention (flash-style online softmax)
# --------------------------------------------------------------------------- #

def _flash_attn_kernel(q_ref, k_ref, v_ref, o_ref, m_ref, l_ref, acc_ref,
                       *, scale, dropout_p, train, seed):
    kv = pl.program_id(3)                     # KV reduction axis (innermost, "arbitrary")

    @pl.when(kv == 0)
    def _init():
        m_ref[...] = jnp.full_like(m_ref, -jnp.inf)
        l_ref[...] = jnp.zeros_like(l_ref)
        acc_ref[...] = jnp.zeros_like(acc_ref)

    # Pre-scale q (tq x d_k muls) instead of scaling the scores (tq x tkv muls).
    q = q_ref[0, 0].astype(jnp.float32) * scale   # (tq, d_k)
    k = k_ref[0, 0].astype(jnp.float32)           # (tkv, d_k)
    v = v_ref[0, 0]                               # (tkv, d_k)

    # scores = q_scaled @ k^T; contraction over d_k, no explicit transpose.
    s = lax.dot_general(q, k, (((1,), (1,)), ((), ())),
                        preferred_element_type=jnp.float32)

    m_prev = m_ref[...]
    m_new = jnp.maximum(m_prev, s.max(axis=-1, keepdims=True))
    alpha = jnp.exp(m_prev - m_new)
    p = jnp.exp(s - m_new)
    l_ref[...] = alpha * l_ref[...] + p.sum(axis=-1, keepdims=True)

    if train and dropout_p > 0.0:
        # Inverted dropout on the attention probabilities (torch: dropout(softmax(s)) @ v).
        # Integer-threshold compare on raw PRNG bits; RNG stream differs from torch's.
        pltpu.prng_seed(seed
                        + pl.program_id(0) * 7919 + pl.program_id(1) * 104729
                        + pl.program_id(2) * 1299709 + kv * 15485863)
        bits = pltpu.bitcast(pltpu.prng_random_bits(p.shape), jnp.uint32)
        thresh = jnp.uint32(int(dropout_p * (2 ** 32)))
        p = jnp.where(bits >= thresh, p * (1.0 / (1.0 - dropout_p)), 0.0)

    acc_ref[...] = alpha * acc_ref[...] + jnp.dot(
        p.astype(v.dtype), v, preferred_element_type=jnp.float32)
    m_ref[...] = m_new

    @pl.when(kv == pl.num_programs(3) - 1)
    def _finalize():
        o_ref[0, 0] = (acc_ref[...] / l_ref[...]).astype(o_ref.dtype)


def flash_attention(q, k, v, *, dropout_p=0.0, train=False, seed=0,
                    tq_pref=256, tkv_pref=256):
    B, H, S, Dk = q.shape
    tq = _pick_tile(S, tq_pref)
    tkv = _pick_tile(S, tkv_pref)
    kernel = functools.partial(_flash_attn_kernel, scale=1.0 / math.sqrt(Dk),
                               dropout_p=dropout_p, train=train, seed=seed)
    q_map = lambda b, h, qi, ki: (b, h, qi, 0)
    kv_map = lambda b, h, qi, ki: (b, h, ki, 0)
    return pl.pallas_call(
        kernel,
        out_shape=jax.ShapeDtypeStruct((B, H, S, Dk), q.dtype),
        grid=(B, H, S // tq, S // tkv),
        in_specs=[
            pl.BlockSpec((1, 1, tq, Dk), q_map),
            pl.BlockSpec((1, 1, tkv, Dk), kv_map),
            pl.BlockSpec((1, 1, tkv, Dk), kv_map),
        ],
        out_specs=pl.BlockSpec((1, 1, tq, Dk), q_map),
        scratch_shapes=[
            pltpu.VMEM((tq, 1), jnp.float32),    # running max m
            pltpu.VMEM((tq, 1), jnp.float32),    # running denom l
            pltpu.VMEM((tq, Dk), jnp.float32),   # output accumulator
        ],
        compiler_params=pltpu.CompilerParams(
            dimension_semantics=("parallel", "parallel", "parallel", "arbitrary")),
    )(q, k, v)


# --------------------------------------------------------------------------- #
# Kernel 3: fused head-merge + output projection:  (B,H,S,d_k) -> (B,S,d_model)
# --------------------------------------------------------------------------- #

def _merge_proj_kernel(a_ref, w_ref, b_ref, o_ref, acc_ref):
    h = pl.program_id(3)                      # head reduction axis (innermost, "arbitrary")

    @pl.when(h == 0)
    def _init():
        acc_ref[...] = jnp.zeros_like(acc_ref)

    acc_ref[...] += jnp.dot(a_ref[0, 0], w_ref[0], preferred_element_type=jnp.float32)

    @pl.when(h == pl.num_programs(3) - 1)
    def _finalize():
        o_ref[0] = (acc_ref[...] + b_ref[...].astype(jnp.float32)).astype(o_ref.dtype)


def merge_heads_linear(ctx, w, b, *, ts_pref=256, tn_pref=256):
    """out[b, s, :] = concat_heads(ctx)[b, s, :] @ w + b."""
    B, H, S, Dk = ctx.shape
    N = w.shape[1]
    ts = _pick_tile(S, ts_pref)
    tn = _pick_tile(N, tn_pref)
    w_h = w.reshape(H, Dk, N)                  # rows of W grouped per head
    b2 = b.reshape(1, N)
    return pl.pallas_call(
        _merge_proj_kernel,
        out_shape=jax.ShapeDtypeStruct((B, S, N), ctx.dtype),
        grid=(B, S // ts, N // tn, H),
        in_specs=[
            pl.BlockSpec((1, 1, ts, Dk), lambda b_, si, ni, h: (b_, h, si, 0)),
            pl.BlockSpec((1, Dk, tn), lambda b_, si, ni, h: (h, 0, ni)),
            pl.BlockSpec((1, tn), lambda b_, si, ni, h: (0, ni)),
        ],
        out_specs=pl.BlockSpec((1, ts, tn), lambda b_, si, ni, h: (b_, si, ni)),
        scratch_shapes=[pltpu.VMEM((ts, tn), jnp.float32)],
        compiler_params=pltpu.CompilerParams(
            dimension_semantics=("parallel", "parallel", "parallel", "arbitrary")),
    )(ctx, w_h, b2)


# --------------------------------------------------------------------------- #
# Module-level wrapper
# --------------------------------------------------------------------------- #

def multi_headed_attention(params, query, key, value, mask=None,
                           *, n_heads, dropout_p=0.1, train=False, seed=0):
    """query/key/value: (B, S, d_model) -> (B, S, d_model)."""
    # TODO(synk): attention-mask path (masked_fill(mask==0, -1e9)) and materializing
    #             self.attn are not implemented in the flash kernel; this port runs mask=None.
    assert mask is None, "mask not supported by this Pallas port"
    q = linear_to_heads(query, params["wq"], params["bq"], n_heads)
    k = linear_to_heads(key, params["wk"], params["bk"], n_heads)
    v = linear_to_heads(value, params["wv"], params["bv"], n_heads)
    ctx = flash_attention(q, k, v, dropout_p=dropout_p, train=train, seed=seed)
    return merge_heads_linear(ctx, params["wo"], params["bo"])


# --------------------------------------------------------------------------- #
# Demo / self-check
# --------------------------------------------------------------------------- #

if __name__ == "__main__":
    B, S, D_MODEL, N_HEADS = 2, 256, 256, 2       # lane-dense: d_model=256, d_k=128
    D_K = D_MODEL // N_HEADS

    key0 = jax.random.PRNGKey(0)
    kq, kk, kv_, *wkeys = jax.random.split(key0, 3 + 8)

    def init_linear(kw, kb, fan_in, fan_out):
        w = jax.random.normal(kw, (fan_in, fan_out), jnp.float32) / jnp.sqrt(fan_in)
        b = jax.random.normal(kb, (fan_out,), jnp.float32) * 0.02
        return w, b

    wq, bq = init_linear(wkeys[0], wkeys[1], D_MODEL, D_MODEL)
    wk, bk = init_linear(wkeys[2], wkeys[3], D_MODEL, D_MODEL)
    wv, bv = init_linear(wkeys[4], wkeys[5], D_MODEL, D_MODEL)
    wo, bo = init_linear(wkeys[6], wkeys[7], D_MODEL, D_MODEL)
    params = dict(wq=wq, bq=bq, wk=wk, bk=bk, wv=wv, bv=bv, wo=wo, bo=bo)

    x_q = jax.random.normal(kq, (B, S, D_MODEL), jnp.float32)
    x_k = jax.random.normal(kk, (B, S, D_MODEL), jnp.float32)
    x_v = jax.random.normal(kv_, (B, S, D_MODEL), jnp.float32)

    # Eval mode (dropout = identity), matching module.eval() semantics.
    mha = jax.jit(functools.partial(multi_headed_attention,
                                    n_heads=N_HEADS, dropout_p=0.1, train=False))
    out = mha(params, x_q, x_k, x_v)
    out = jax.block_until_ready(out)

    # Pure-JAX reference (torch semantics).
    def ref_mha(q_in, k_in, v_in):
        def lin(x, w, b):
            return x @ w + b

        def split(x):
            return x.reshape(B, S, N_HEADS, D_K).transpose(0, 2, 1, 3)

        q = split(lin(q_in, wq, bq))
        k = split(lin(k_in, wk, bk))
        v = split(lin(v_in, wv, bv))
        s = jnp.einsum("bhqd,bhkd->bhqk", q, k) / jnp.sqrt(D_K)
        p = jax.nn.softmax(s, axis=-1)
        ctx = jnp.einsum("bhqk,bhkd->bhqd", p, v)
        ctx = ctx.transpose(0, 2, 1, 3).reshape(B, S, D_MODEL)
        return lin(ctx, wo, bo)

    ref = ref_mha(x_q, x_k, x_v)
    assert out.shape == (B, S, D_MODEL)
    err = float(jnp.max(jnp.abs(out - ref)))
    assert jnp.allclose(out, ref, atol=2e-3, rtol=2e-3), f"mismatch vs reference: {err}"
    print("KERNEL_OK")
</pallas_src>

<mosaic_0001>
module attributes {stable_mosaic.version = 11 : i64} {
  func.func @_proj_heads_kernel(%arg0: i32, %arg1: i32, %arg2: i32, %arg3: i32, %arg4: memref<1x256x256xf32, #tpu.memory_space<vmem>>, %arg5: memref<1x256x128xf32, #tpu.memory_space<vmem>>, %arg6: memref<1x1x128xf32, #tpu.memory_space<vmem>>, %arg7: memref<1x1x256x128xf32, #tpu.memory_space<vmem>>, %arg8: memref<256x128xf32, #tpu.memory_space<vmem>>) attributes {dimension_semantics = [#tpu.dimension_semantics<parallel>, #tpu.dimension_semantics<parallel>, #tpu.dimension_semantics<parallel>, #tpu.dimension_semantics<arbitrary>], iteration_bounds = array<i64: 2, 2, 1, 1>, scalar_prefetch = 0 : i64, scratch_operands = 1 : i64, tpu.core_type = #tpu.core_type<tc>, window_params = [{transform_indices = @transform_0, window_bounds = array<i64: 1, 256, 256>}, {transform_indices = @transform_1, window_bounds = array<i64: 1, 256, 128>}, {transform_indices = @transform_2, window_bounds = array<i64: 1, 1, 128>}, {transform_indices = @transform_3, window_bounds = array<i64: 1, 1, 256, 128>}]} {
    %c0_i32 = arith.constant 0 : i32
    %0 = arith.cmpi eq, %arg3, %c0_i32 : i32
    %1 = arith.extui %0 : i1 to i32
    %c0_i32_0 = arith.constant 0 : i32
    %2 = arith.cmpi ne, %1, %c0_i32_0 : i32
    scf.if %2 {
      %cst_12 = arith.constant 0.000000e+00 : f32
      %14 = vector.broadcast %cst_12 : f32 to vector<256x128xf32>
      %c0_13 = arith.constant 0 : index
      %c0_14 = arith.constant 0 : index
      %15 = vector.load %arg8[%c0_13, %c0_14] : memref<256x128xf32, #tpu.memory_space<vmem>>, vector<256x128xf32>
      tpu.vector_store %arg8[%c0_13, %c0_14], %14 {strides = array<i32>} : memref<256x128xf32, #tpu.memory_space<vmem>>, vector<256x128xf32>,
    } else {
    }
    %c0 = arith.constant 0 : index
    %c0_1 = arith.constant 0 : index
    %3 = vector.load %arg8[%c0, %c0_1] : memref<256x128xf32, #tpu.memory_space<vmem>>, vector<256x128xf32>
    %c0_2 = arith.constant 0 : index
    %c0_3 = arith.constant 0 : index
    %c0_4 = arith.constant 0 : index
    %4 = vector.load %arg4[%c0_2, %c0_3, %c0_4] : memref<1x256x256xf32, #tpu.memory_space<vmem>>, vector<1x256x256xf32>
    %5 = vector.shape_cast %4 : vector<1x256x256xf32> to vector<256x256xf32>
    %c0_5 = arith.constant 0 : index
    %c0_6 = arith.constant 0 : index
    %c0_7 = arith.constant 0 : index
    %6 = vector.load %arg5[%c0_5, %c0_6, %c0_7] : memref<1x256x128xf32, #tpu.memory_space<vmem>>, vector<1x256x128xf32>
    %7 = vector.shape_cast %6 : vector<1x256x128xf32> to vector<256x128xf32>
    %cst = arith.constant dense<0.000000e+00> : vector<256x128xf32>
    %8 = tpu.matmul %5, %7, %cst {dimension_numbers = #tpu.dot_dimension_numbers<[1], [0], [0], [1], [0, 0, 1, 1], [], []>} : vector<256x256xf32>, vector<256x128xf32>, vector<256x128xf32> -> vector<256x128xf32>
    %9 = arith.addf %3, %8 : vector<256x128xf32>
    %c0_8 = arith.constant 0 : index
    %c0_9 = arith.constant 0 : index
    %10 = vector.load %arg8[%c0_8, %c0_9] : memref<256x128xf32, #tpu.memory_space<vmem>>, vector<256x128xf32>
    tpu.vector_store %arg8[%c0_8, %c0_9], %9 {strides = array<i32>} : memref<256x128xf32, #tpu.memory_space<vmem>>, vector<256x128xf32>,
    %c0_i32_10 = arith.constant 0 : i32
    %11 = arith.cmpi eq, %arg3, %c0_i32_10 : i32
    %12 = arith.extui %11 : i1 to i32
    %c0_i32_11 = arith.constant 0 : i32
    %13 = arith.cmpi ne, %12, %c0_i32_11 : i32
    scf.if %13 {
      %c0_12 = arith.constant 0 : index
      %c0_13 = arith.constant 0 : index
      %14 = vector.load %arg8[%c0_12, %c0_13] : memref<256x128xf32, #tpu.memory_space<vmem>>, vector<256x128xf32>
      %c0_14 = arith.constant 0 : index
      %c0_15 = arith.constant 0 : index
      %c0_16 = arith.constant 0 : index
      %15 = vector.load %arg6[%c0_14, %c0_15, %c0_16] : memref<1x1x128xf32, #tpu.memory_space<vmem>>, vector<1x1x128xf32>
      %16 = vector.shape_cast %15 : vector<1x1x128xf32> to vector<1x128xf32>
      %17 = vector.broadcast %16 : vector<1x128xf32> to vector<256x128xf32>
      %18 = arith.addf %14, %17 : vector<256x128xf32>
      %c0_17 = arith.constant 0 : index
      %c0_18 = arith.constant 0 : index
      %c0_19 = arith.constant 0 : index
      %c0_20 = arith.constant 0 : index
      %19 = vector.load %arg7[%c0_17, %c0_18, %c0_19, %c0_20] : memref<1x1x256x128xf32, #tpu.memory_space<vmem>>, vector<1x1x256x128xf32>
      %20 = vector.shape_cast %19 : vector<1x1x256x128xf32> to vector<256x128xf32>
      %21 = vector.shape_cast %18 : vector<256x128xf32> to vector<1x1x256x128xf32>
      tpu.vector_store %arg7[%c0_17, %c0_18, %c0_19, %c0_20], %21 {strides = array<i32>} : memref<1x1x256x128xf32, #tpu.memory_space<vmem>>, vector<1x1x256x128xf32>,
    } else {
    }
    return
  }
  func.func @transform_0(%arg0: i32, %arg1: i32, %arg2: i32, %arg3: i32) -> (i32, i32, i32) {
    %c0_i32 = arith.constant 0 : i32
    return %arg0, %arg2, %arg3 : i32, i32, i32
  }
  func.func @transform_1(%arg0: i32, %arg1: i32, %arg2: i32, %arg3: i32) -> (i32, i32, i32) {
    %c0_i32 = arith.constant 0 : i32
    %c0_i32_0 = arith.constant 0 : i32
    return %arg1, %arg3, %c0_i32 : i32, i32, i32
  }
  func.func @transform_2(%arg0: i32, %arg1: i32, %arg2: i32, %arg3: i32) -> (i32, i32, i32) {
    %c0_i32 = arith.constant 0 : i32
    %c0_i32_0 = arith.constant 0 : i32
    %c0_i32_1 = arith.constant 0 : i32
    return %arg1, %c0_i32, %c0_i32_0 : i32, i32, i32
  }
  func.func @transform_3(%arg0: i32, %arg1: i32, %arg2: i32, %arg3: i32) -> (i32, i32, i32, i32) {
    %c0_i32 = arith.constant 0 : i32
    %c0_i32_0 = arith.constant 0 : i32
    return %arg0, %arg1, %arg2, %c0_i32 : i32, i32, i32, i32
  }
}

module attributes {stable_mosaic.version = 11 : i64} {
  func.func @_flash_attn_kernel(%arg0: i32, %arg1: i32, %arg2: i32, %arg3: i32, %arg4: memref<1x1x256x128xf32, #tpu.memory_space<vmem>>, %arg5: memref<1x1x256x128xf32, #tpu.memory_space<vmem>>, %arg6: memref<1x1x256x128xf32, #tpu.memory_space<vmem>>, %arg7: memref<1x1x256x128xf32, #tpu.memory_space<vmem>>, %arg8: memref<256x1xf32, #tpu.memory_space<vmem>>, %arg9: memref<256x1xf32, #tpu.memory_space<vmem>>, %arg10: memref<256x128xf32, #tpu.memory_space<vmem>>) attributes {dimension_semantics = [#tpu.dimension_semantics<parallel>, #tpu.dimension_semantics<parallel>, #tpu.dimension_semantics<parallel>, #tpu.dimension_semantics<arbitrary>], iteration_bounds = array<i64: 2, 2, 1, 1>, scalar_prefetch = 0 : i64, scratch_operands = 3 : i64, tpu.core_type = #tpu.core_type<tc>, window_params = [{transform_indices = @transform_0, window_bounds = array<i64: 1, 1, 256, 128>}, {transform_indices = @transform_1, window_bounds = array<i64: 1, 1, 256, 128>}, {transform_indices = @transform_2, window_bounds = array<i64: 1, 1, 256, 128>}, {transform_indices = @transform_3, window_bounds = array<i64: 1, 1, 256, 128>}]} {
    %c0_i32 = arith.constant 0 : i32
    %0 = arith.cmpi eq, %arg3, %c0_i32 : i32
    %1 = arith.extui %0 : i1 to i32
    %c0_i32_0 = arith.constant 0 : i32
    %2 = arith.cmpi ne, %1, %c0_i32_0 : i32
    scf.if %2 {
      %cst_30 = arith.constant 0xFF800000 : f32
      %37 = vector.broadcast %cst_30 : f32 to vector<256x1xf32>
      %c0_31 = arith.constant 0 : index
      %c0_32 = arith.constant 0 : index
      %38 = vector.load %arg8[%c0_31, %c0_32] : memref<256x1xf32, #tpu.memory_space<vmem>>, vector<256x1xf32>
      tpu.vector_store %arg8[%c0_31, %c0_32], %37 {strides = array<i32>} : memref<256x1xf32, #tpu.memory_space<vmem>>, vector<256x1xf32>,
      %cst_33 = arith.constant 0.000000e+00 : f32
      %39 = vector.broadcast %cst_33 : f32 to vector<256x1xf32>
      %c0_34 = arith.constant 0 : index
      %c0_35 = arith.constant 0 : index
      %40 = vector.load %arg9[%c0_34, %c0_35] : memref<256x1xf32, #tpu.memory_space<vmem>>, vector<256x1xf32>
      tpu.vector_store %arg9[%c0_34, %c0_35], %39 {strides = array<i32>} : memref<256x1xf32, #tpu.memory_space<vmem>>, vector<256x1xf32>,
      %cst_36 = arith.constant 0.000000e+00 : f32
      %41 = vector.broadcast %cst_36 : f32 to vector<256x128xf32>
      %c0_37 = arith.constant 0 : index
      %c0_38 = arith.constant 0 : index
      %42 = vector.load %arg10[%c0_37, %c0_38] : memref<256x128xf32, #tpu.memory_space<vmem>>, vector<256x128xf32>
      tpu.vector_store %arg10[%c0_37, %c0_38], %41 {strides = array<i32>} : memref<256x128xf32, #tpu.memory_space<vmem>>, vector<256x128xf32>,
    } else {
    }
    %c0 = arith.constant 0 : index
    %c0_1 = arith.constant 0 : index
    %c0_2 = arith.constant 0 : index
    %c0_3 = arith.constant 0 : index
    %3 = vector.load %arg4[%c0, %c0_1, %c0_2, %c0_3] : memref<1x1x256x128xf32, #tpu.memory_space<vmem>>, vector<1x1x256x128xf32>
    %4 = vector.shape_cast %3 : vector<1x1x256x128xf32> to vector<256x128xf32>
    %cst = arith.constant 0.0883883461 : f32
    %5 = vector.broadcast %cst : f32 to vector<256x128xf32>
    %6 = arith.mulf %4, %5 : vector<256x128xf32>
    %c0_4 = arith.constant 0 : index
    %c0_5 = arith.constant 0 : index
    %c0_6 = arith.constant 0 : index
    %c0_7 = arith.constant 0 : index
    %7 = vector.load %arg5[%c0_4, %c0_5, %c0_6, %c0_7] : memref<1x1x256x128xf32, #tpu.memory_space<vmem>>, vector<1x1x256x128xf32>
    %8 = vector.shape_cast %7 : vector<1x1x256x128xf32> to vector<256x128xf32>
    %c0_8 = arith.constant 0 : index
    %c0_9 = arith.constant 0 : index
    %c0_10 = arith.constant 0 : index
    %c0_11 = arith.constant 0 : index
    %9 = vector.load %arg6[%c0_8, %c0_9, %c0_10, %c0_11] : memref<1x1x256x128xf32, #tpu.memory_space<vmem>>, vector<1x1x256x128xf32>
    %10 = vector.shape_cast %9 : vector<1x1x256x128xf32> to vector<256x128xf32>
    %cst_12 = arith.constant dense<0.000000e+00> : vector<256x256xf32>
    %11 = tpu.matmul %6, %8, %cst_12 {dimension_numbers = #tpu.dot_dimension_numbers<[1], [1], [0], [0], [0, 0, 1, 0], [], []>} : vector<256x128xf32>, vector<256x128xf32>, vector<256x256xf32> -> vector<256x256xf32>
    %c0_13 = arith.constant 0 : index
    %c0_14 = arith.constant 0 : index
    %12 = vector.load %arg8[%c0_13, %c0_14] : memref<256x1xf32, #tpu.memory_space<vmem>>, vector<256x1xf32>
    %cst_15 = arith.constant dense<0xFF800000> : vector<256xf32>
    %13 = vector.multi_reduction <maximumf>, %11, %cst_15 [1] : vector<256x256xf32> to vector<256xf32>
    %14 = vector.shape_cast %13 : vector<256xf32> to vector<256x1xf32>
    %15 = arith.maximumf %12, %14 : vector<256x1xf32>
    %16 = arith.subf %12, %15 : vector<256x1xf32>
    %17 = math.exp %16 : vector<256x1xf32>
    %18 = vector.broadcast %15 : vector<256x1xf32> to vector<256x256xf32>
    %19 = arith.subf %11, %18 : vector<256x256xf32>
    %20 = math.exp %19 : vector<256x256xf32>
    %c0_16 = arith.constant 0 : index
    %c0_17 = arith.constant 0 : index
    %21 = vector.load %arg9[%c0_16, %c0_17] : memref<256x1xf32, #tpu.memory_space<vmem>>, vector<256x1xf32>
    %22 = arith.mulf %17, %21 : vector<256x1xf32>
    %cst_18 = arith.constant dense<0.000000e+00> : vector<256xf32>
    %23 = vector.multi_reduction <add>, %20, %cst_18 [1] : vector<256x256xf32> to vector<256xf32>
    %24 = vector.shape_cast %23 : vector<256xf32> to vector<256x1xf32>
    %25 = arith.addf %22, %24 : vector<256x1xf32>
    %c0_19 = arith.constant 0 : index
    %c0_20 = arith.constant 0 : index
    %26 = vector.load %arg9[%c0_19, %c0_20] : memref<256x1xf32, #tpu.memory_space<vmem>>, vector<256x1xf32>
    tpu.vector_store %arg9[%c0_19, %c0_20], %25 {strides = array<i32>} : memref<256x1xf32, #tpu.memory_space<vmem>>, vector<256x1xf32>,
    %c0_21 = arith.constant 0 : index
    %c0_22 = arith.constant 0 : index
    %27 = vector.load %arg10[%c0_21, %c0_22] : memref<256x128xf32, #tpu.memory_space<vmem>>, vector<256x128xf32>
    %28 = vector.broadcast %17 : vector<256x1xf32> to vector<256x128xf32>
    %29 = arith.mulf %28, %27 : vector<256x128xf32>
    %cst_23 = arith.constant dense<0.000000e+00> : vector<256x128xf32>
    %30 = tpu.matmul %20, %10, %cst_23 {dimension_numbers = #tpu.dot_dimension_numbers<[1], [0], [0], [1], [0, 0, 1, 1], [], []>} : vector<256x256xf32>, vector<256x128xf32>, vector<256x128xf32> -> vector<256x128xf32>
    %31 = arith.addf %29, %30 : vector<256x128xf32>
    %c0_24 = arith.constant 0 : index
    %c0_25 = arith.constant 0 : index
    %32 = vector.load %arg10[%c0_24, %c0_25] : memref<256x128xf32, #tpu.memory_space<vmem>>, vector<256x128xf32>
    tpu.vector_store %arg10[%c0_24, %c0_25], %31 {strides = array<i32>} : memref<256x128xf32, #tpu.memory_space<vmem>>, vector<256x128xf32>,
    %c0_26 = arith.constant 0 : index
    %c0_27 = arith.constant 0 : index
    %33 = vector.load %arg8[%c0_26, %c0_27] : memref<256x1xf32, #tpu.memory_space<vmem>>, vector<256x1xf32>
    tpu.vector_store %arg8[%c0_26, %c0_27], %15 {strides = array<i32>} : memref<256x1xf32, #tpu.memory_space<vmem>>, vector<256x1xf32>,
    %c0_i32_28 = arith.constant 0 : i32
    %34 = arith.cmpi eq, %arg3, %c0_i32_28 : i32
    %35 = arith.extui %34 : i1 to i32
    %c0_i32_29 = arith.constant 0 : i32
    %36 = arith.cmpi ne, %35, %c0_i32_29 : i32
    scf.if %36 {
      %c0_30 = arith.constant 0 : index
      %c0_31 = arith.constant 0 : index
      %37 = vector.load %arg10[%c0_30, %c0_31] : memref<256x128xf32, #tpu.memory_space<vmem>>, vector<256x128xf32>
      %c0_32 = arith.constant 0 : index
      %c0_33 = arith.constant 0 : index
      %38 = vector.load %arg9[%c0_32, %c0_33] : memref<256x1xf32, #tpu.memory_space<vmem>>, vector<256x1xf32>
      %39 = vector.broadcast %38 : vector<256x1xf32> to vector<256x128xf32>
      %40 = arith.divf %37, %39 : vector<256x128xf32>
      %c0_34 = arith.constant 0 : index
      %c0_35 = arith.constant 0 : index
      %c0_36 = arith.constant 0 : index
      %c0_37 = arith.constant 0 : index
      %41 = vector.load %arg7[%c0_34, %c0_35, %c0_36, %c0_37] : memref<1x1x256x128xf32, #tpu.memory_space<vmem>>, vector<1x1x256x128xf32>
      %42 = vector.shape_cast %41 : vector<1x1x256x128xf32> to vector<256x128xf32>
      %43 = vector.shape_cast %40 : vector<256x128xf32> to vector<1x1x256x128xf32>
      tpu.vector_store %arg7[%c0_34, %c0_35, %c0_36, %c0_37], %43 {strides = array<i32>} : memref<1x1x256x128xf32, #tpu.memory_space<vmem>>, vector<1x1x256x128xf32>,
    } else {
    }
    return
  }
  func.func @transform_0(%arg0: i32, %arg1: i32, %arg2: i32, %arg3: i32) -> (i32, i32, i32, i32) {
    %c0_i32 = arith.constant 0 : i32
    %c0_i32_0 = arith.constant 0 : i32
    return %arg0, %arg1, %arg2, %c0_i32 : i32, i32, i32, i32
  }
  func.func @transform_1(%arg0: i32, %arg1: i32, %arg2: i32, %arg3: i32) -> (i32, i32, i32, i32) {
    %c0_i32 = arith.constant 0 : i32
    %c0_i32_0 = arith.constant 0 : i32
    return %arg0, %arg1, %arg3, %c0_i32 : i32, i32, i32, i32
  }
  func.func @transform_2(%arg0: i32, %arg1: i32, %arg2: i32, %arg3: i32) -> (i32, i32, i32, i32) {
    %c0_i32 = arith.constant 0 : i32
    %c0_i32_0 = arith.constant 0 : i32
    return %arg0, %arg1, %arg3, %c0_i32 : i32, i32, i32, i32
  }
  func.func @transform_3(%arg0: i32, %arg1: i32, %arg2: i32, %arg3: i32) -> (i32, i32, i32, i32) {
    %c0_i32 = arith.constant 0 : i32
    %c0_i32_0 = arith.constant 0 : i32
    return %arg0, %arg1, %arg2, %c0_i32 : i32, i32, i32, i32
  }
}

module attributes {stable_mosaic.version = 11 : i64} {
  func.func @_merge_proj_kernel(%arg0: i32, %arg1: i32, %arg2: i32, %arg3: i32, %arg4: memref<1x1x256x128xf32, #tpu.memory_space<vmem>>, %arg5: memref<1x128x256xf32, #tpu.memory_space<vmem>>, %arg6: memref<1x256xf32, #tpu.memory_space<vmem>>, %arg7: memref<1x256x256xf32, #tpu.memory_space<vmem>>, %arg8: memref<256x256xf32, #tpu.memory_space<vmem>>) attributes {dimension_semantics = [#tpu.dimension_semantics<parallel>, #tpu.dimension_semantics<parallel>, #tpu.dimension_semantics<parallel>, #tpu.dimension_semantics<arbitrary>], iteration_bounds = array<i64: 2, 1, 1, 2>, scalar_prefetch = 0 : i64, scratch_operands = 1 : i64, tpu.core_type = #tpu.core_type<tc>, window_params = [{transform_indices = @transform_0, window_bounds = array<i64: 1, 1, 256, 128>}, {transform_indices = @transform_1, window_bounds = array<i64: 1, 128, 256>}, {transform_indices = @transform_2, window_bounds = array<i64: 1, 256>}, {transform_indices = @transform_3, window_bounds = array<i64: 1, 256, 256>}]} {
    %c0_i32 = arith.constant 0 : i32
    %0 = arith.cmpi eq, %arg3, %c0_i32 : i32
    %1 = arith.extui %0 : i1 to i32
    %c0_i32_0 = arith.constant 0 : i32
    %2 = arith.cmpi ne, %1, %c0_i32_0 : i32
    scf.if %2 {
      %cst_12 = arith.constant 0.000000e+00 : f32
      %14 = vector.broadcast %cst_12 : f32 to vector<256x256xf32>
      %c0_13 = arith.constant 0 : index
      %c0_14 = arith.constant 0 : index
      %15 = vector.load %arg8[%c0_13, %c0_14] : memref<256x256xf32, #tpu.memory_space<vmem>>, vector<256x256xf32>
      tpu.vector_store %arg8[%c0_13, %c0_14], %14 {strides = array<i32>} : memref<256x256xf32, #tpu.memory_space<vmem>>, vector<256x256xf32>,
    } else {
    }
    %c0 = arith.constant 0 : index
    %c0_1 = arith.constant 0 : index
    %3 = vector.load %arg8[%c0, %c0_1] : memref<256x256xf32, #tpu.memory_space<vmem>>, vector<256x256xf32>
    %c0_2 = arith.constant 0 : index
    %c0_3 = arith.constant 0 : index
    %c0_4 = arith.constant 0 : index
    %c0_5 = arith.constant 0 : index
    %4 = vector.load %arg4[%c0_2, %c0_3, %c0_4, %c0_5] : memref<1x1x256x128xf32, #tpu.memory_space<vmem>>, vector<1x1x256x128xf32>
    %5 = vector.shape_cast %4 : vector<1x1x256x128xf32> to vector<256x128xf32>
    %c0_6 = arith.constant 0 : index
    %c0_7 = arith.constant 0 : index
    %c0_8 = arith.constant 0 : index
    %6 = vector.load %arg5[%c0_6, %c0_7, %c0_8] : memref<1x128x256xf32, #tpu.memory_space<vmem>>, vector<1x128x256xf32>
    %7 = vector.shape_cast %6 : vector<1x128x256xf32> to vector<128x256xf32>
    %cst = arith.constant dense<0.000000e+00> : vector<256x256xf32>
    %8 = tpu.matmul %5, %7, %cst {dimension_numbers = #tpu.dot_dimension_numbers<[1], [0], [0], [1], [0, 0, 1, 1], [], []>} : vector<256x128xf32>, vector<128x256xf32>, vector<256x256xf32> -> vector<256x256xf32>
    %9 = arith.addf %3, %8 : vector<256x256xf32>
    %c0_9 = arith.constant 0 : index
    %c0_10 = arith.constant 0 : index
    %10 = vector.load %arg8[%c0_9, %c0_10] : memref<256x256xf32, #tpu.memory_space<vmem>>, vector<256x256xf32>
    tpu.vector_store %arg8[%c0_9, %c0_10], %9 {strides = array<i32>} : memref<256x256xf32, #tpu.memory_space<vmem>>, vector<256x256xf32>,
    %c1_i32 = arith.constant 1 : i32
    %11 = arith.cmpi eq, %arg3, %c1_i32 : i32
    %12 = arith.extui %11 : i1 to i32
    %c0_i32_11 = arith.constant 0 : i32
    %13 = arith.cmpi ne, %12, %c0_i32_11 : i32
    scf.if %13 {
      %c0_12 = arith.constant 0 : index
      %c0_13 = arith.constant 0 : index
      %14 = vector.load %arg8[%c0_12, %c0_13] : memref<256x256xf32, #tpu.memory_space<vmem>>, vector<256x256xf32>
      %c0_14 = arith.constant 0 : index
      %c0_15 = arith.constant 0 : index
      %15 = vector.load %arg6[%c0_14, %c0_15] : memref<1x256xf32, #tpu.memory_space<vmem>>, vector<1x256xf32>
      %16 = vector.broadcast %15 : vector<1x256xf32> to vector<256x256xf32>
      %17 = arith.addf %14, %16 : vector<256x256xf32>
      %c0_16 = arith.constant 0 : index
      %c0_17 = arith.constant 0 : index
      %c0_18 = arith.constant 0 : index
      %18 = vector.load %arg7[%c0_16, %c0_17, %c0_18] : memref<1x256x256xf32, #tpu.memory_space<vmem>>, vector<1x256x256xf32>
      %19 = vector.shape_cast %18 : vector<1x256x256xf32> to vector<256x256xf32>
      %20 = vector.shape_cast %17 : vector<256x256xf32> to vector<1x256x256xf32>
      tpu.vector_store %arg7[%c0_16, %c0_17, %c0_18], %20 {strides = array<i32>} : memref<1x256x256xf32, #tpu.memory_space<vmem>>, vector<1x256x256xf32>,
    } else {
    }
    return
  }
  func.func @transform_0(%arg0: i32, %arg1: i32, %arg2: i32, %arg3: i32) -> (i32, i32, i32, i32) {
    %c0_i32 = arith.constant 0 : i32
    %c0_i32_0 = arith.constant 0 : i32
    return %arg0, %arg3, %arg1, %c0_i32 : i32, i32, i32, i32
  }
  func.func @transform_1(%arg0: i32, %arg1: i32, %arg2: i32, %arg3: i32) -> (i32, i32, i32) {
    %c0_i32 = arith.constant 0 : i32
    %c0_i32_0 = arith.constant 0 : i32
    return %arg3, %c0_i32, %arg2 : i32, i32, i32
  }
  func.func @transform_2(%arg0: i32, %arg1: i32, %arg2: i32, %arg3: i32) -> (i32, i32) {
    %c0_i32 = arith.constant 0 : i32
    %c0_i32_0 = arith.constant 0 : i32
    return %c0_i32, %arg2 : i32, i32
  }
  func.func @transform_3(%arg0: i32, %arg1: i32, %arg2: i32, %arg3: i32) -> (i32, i32, i32) {
    %c0_i32 = arith.constant 0 : i32
    return %arg0, %arg1, %arg2 : i32, i32, i32
  }
}

</mosaic_0001>

<llo_original>
// kernel: multi_headed_attention.6
$region0: #{multi_headed_attention.6}
  #allocation0 [shape = 'u32[]', space=smem, size = 0x4, offset = 0x4, fixed_abs, tag = 'smem constant byte address 0x4 - core index']
  #allocation1 [shape = 'u32[144,128]{1,0:T(1,128)}', space=vmem, size = 0x12000, scoped, tag = 'internal scratch']
  #allocation2 [shape = 'f32[256,128]{1,0:T(8,128)}', space=vmem, size = 0x20000, scoped, tag = 'scratch operand']
  %s0 = inlined_call_operand.vmem [shape: f32[2,256,256], index: 0, kind: input, shape index: {}]
  %s1 = inlined_call_operand.vmem [shape: f32[2,256,128], index: 1, kind: input, shape index: {}]
  %s2 = inlined_call_operand.vmem [shape: f32[2,1,128], index: 2, kind: input, shape index: {}]
  %s3 = inlined_call_operand.vmem [shape: f32[2,2,256,128], index: 3, kind: output, shape index: {}]
  %s4 = sld [smem:[#allocation0]]
  $region53: #{multi_headed_attention.6} parent=0
    _
  %s6 = ssub.s32 1, %s4
  %s7 = scalar_select 0, %s6, %s4
  loop: start=0, step=1, limit=6
  $region2: #{multi_headed_attention.6} parent=0 // loop_pre_header
    _
  $region3: #{multi_headed_attention.6} parent=0 // loop_header
    %s9 = sphi 0, %s13
    %p10 = scmp.ge.s32.totalorder %s9, 6
    %s16 = sphi 0, %s42
    %s17 = sphi 0, %s38
    %s18 = sphi 0, %s34
    %s19 = sphi 0, %s30
    %s20 = sphi 0, %s16
    %s21 = sphi 0, %s17
    %s22 = sphi 0, %s18
    %s23 = sphi 0, %s19
    %s24 = sphi 0, %s20
    %s25 = sphi 0, %s21
    %s26 = sphi 0, %s22
    %s27 = sphi 0, %s23
    %s49 = sphi 0, %s51
    %s52 = sphi 0, %s49
    %s53 = sphi 0, %s52
    %s69 = sphi 0, %s53
    %s77 = sphi 0, %s79
    %s80 = sphi 0, %s77
    %s81 = sphi 0, %s80
    %s97 = sphi 0, %s81
    %s103 = sphi 0, %s105
    %s106 = sphi 0, %s103
    %s107 = sphi 0, %s106
    %s123 = sphi 0, %s107
    %s133 = sphi 0, %s135
    %s136 = sphi 0, %s133
    %s137 = sphi 0, %s136
    %s153 = sphi 0, %s137
  $region4: #{multi_headed_attention.6} parent=0 // loop_header_branch
    %12 = sbr.rel (%p10) target = $region8
  $region5: #{multi_headed_attention.6} parent=0 // loop_body
    %s14 = ssub.s32 %s9, 1
    %s15 = ssub.s32 %s9, 2
    %s28 = sadd.s32 1, %s19
    %p29 = scmp.ge.s32.totalorder %s28, 1
    %s30 = scalar_select %p29, 0, %s28
    %s31 = sadd.s32 1, %s18
    %s32 = scalar_select %p29, %s31, %s18
    %p33 = scmp.ge.s32.totalorder %s32, 1
    %s34 = scalar_select %p33, 0, %s32
    %s35 = sadd.s32 1, %s17
    %s36 = scalar_select %p33, %s35, %s17
    %p37 = scmp.ge.s32.totalorder %s36, 2
    %s38 = scalar_select %p37, 0, %s36
    %s39 = sadd.s32 1, %s16
    %s40 = scalar_select %p37, %s39, %s16
    %p41 = scmp.ge.s32.totalorder %s40, 2
    %s42 = scalar_select %p41, 0, %s40
    %s43 = ssub.s32 %s16, %s42
    %s44 = ssub.s32 %s18, %s34
    %s45 = sor.u32 %s43, %s44
    %s46 = ssub.s32 %s19, %s30
    %s47 = sor.u32 %s45, %s46
    %p48 = scmp.eq.s32.totalorder %s47, 0
    %s50 = sadd.s32 %s49, 1
    %s51 = scalar_select %p48, %s49, %s50
    %p54 = pneg %p48
    %p55 = scmp.eq.s32.totalorder %s9, 3
    %p56 = por %p54, %p55
    %p57 = scmp.ne.s32.totalorder %s49, %s52
    %p58 = scmp.eq.s32.totalorder %s9, 0
    %p59 = por %p57, %p58
    %p60 = scmp.ne.s32.totalorder %s49, %s52
    %p61 = scmp.eq.s32.totalorder %s14, 3
    %p62 = por %p60, %p61
    %p63 = scmp.ne.s32.totalorder %s52, %s53
    %p64 = scmp.eq.s32.totalorder %s14, 0
    %p65 = por %p63, %p64
    %p66 = scmp.ne.s32.totalorder %s52, %s53
    %p67 = scmp.eq.s32.totalorder %s15, 3
    %p68 = por %p66, %p67
    %p70 = scmp.ne.s32.totalorder %s53, %s69
    %p71 = scmp.eq.s32.totalorder %s15, 0
    %p72 = por %p70, %p71
    %s73 = ssub.s32 %s17, %s38
    %s74 = ssub.s32 %s19, %s30
    %s75 = sor.u32 %s73, %s74
    %p76 = scmp.eq.s32.totalorder %s75, 0
    %s78 = sadd.s32 %s77, 1
    %s79 = scalar_select %p76, %s77, %s78
    %p82 = pneg %p76
    %p83 = scmp.eq.s32.totalorder %s9, 3
    %p84 = por %p82, %p83
    %p85 = scmp.ne.s32.totalorder %s77, %s80
    %p86 = scmp.eq.s32.totalorder %s9, 0
    %p87 = por %p85, %p86
    %p88 = scmp.ne.s32.totalorder %s77, %s80
    %p89 = scmp.eq.s32.totalorder %s14, 3
    %p90 = por %p88, %p89
    %p91 = scmp.ne.s32.totalorder %s80, %s81
    %p92 = scmp.eq.s32.totalorder %s14, 0
    %p93 = por %p91, %p92
    %p94 = scmp.ne.s32.totalorder %s80, %s81
    %p95 = scmp.eq.s32.totalorder %s15, 3
    %p96 = por %p94, %p95
    %p98 = scmp.ne.s32.totalorder %s81, %s97
    %p99 = scmp.eq.s32.totalorder %s15, 0
    %p100 = por %p98, %p99
    %s101 = ssub.s32 %s17, %s38
    %p102 = scmp.eq.s32.totalorder %s101, 0
    %s104 = sadd.s32 %s103, 1
    %s105 = scalar_select %p102, %s103, %s104
    %p108 = pneg %p102
    %p109 = scmp.eq.s32.totalorder %s9, 3
    %p110 = por %p108, %p109
    %p111 = scmp.ne.s32.totalorder %s103, %s106
    %p112 = scmp.eq.s32.totalorder %s9, 0
    %p113 = por %p111, %p112
    %p114 = scmp.ne.s32.totalorder %s103, %s106
    %p115 = scmp.eq.s32.totalorder %s14, 3
    %p116 = por %p114, %p115
    %p117 = scmp.ne.s32.totalorder %s106, %s107
    %p118 = scmp.eq.s32.totalorder %s14, 0
    %p119 = por %p117, %p118
    %p120 = scmp.ne.s32.totalorder %s106, %s107
    %p121 = scmp.eq.s32.totalorder %s15, 3
    %p122 = por %p120, %p121
    %p124 = scmp.ne.s32.totalorder %s107, %s123
    %p125 = scmp.eq.s32.totalorder %s15, 0
    %p126 = por %p124, %p125
    %s127 = ssub.s32 %s16, %s42
    %s128 = ssub.s32 %s17, %s38
    %s129 = sor.u32 %s127, %s128
    %s130 = ssub.s32 %s18, %s34
    %s131 = sor.u32 %s129, %s130
    %p132 = scmp.eq.s32.totalorder %s131, 0
    %s134 = sadd.s32 %s133, 1
    %s135 = scalar_select %p132, %s133, %s134
    %p138 = pneg %p132
    %p139 = scmp.eq.s32.totalorder %s9, 3
    %p140 = por %p138, %p139
    %p141 = scmp.ne.s32.totalorder %s133, %s136
    %p142 = scmp.eq.s32.totalorder %s9, 0
    %p143 = por %p141, %p142
    %p144 = scmp.ne.s32.totalorder %s133, %s136
    %p145 = scmp.eq.s32.totalorder %s14, 3
    %p146 = por %p144, %p145
    %p147 = scmp.ne.s32.totalorder %s136, %s137
    %p148 = scmp.eq.s32.totalorder %s14, 0
    %p149 = por %p147, %p148
    %p150 = scmp.ne.s32.totalorder %s136, %s137
    %p151 = scmp.eq.s32.totalorder %s15, 3
    %p152 = por %p150, %p151
    %p154 = scmp.ne.s32.totalorder %s137, %s153
    %p155 = scmp.eq.s32.totalorder %s15, 0
    %p156 = por %p154, %p155
    %p157 = scmp.le.s32.totalorder 1, %s9
    %p158 = scmp.lt.s32.totalorder %s9, 5
    %p159 = pnand %p157, %p158
    %p160 = pneg %p159
    // Predicated region
    $region9: #{multi_headed_attention.6} parent=5 // pred_check
      _
    $region10: #{multi_headed_attention.6} parent=5 // pred_check_branch
      %162 = sbr.rel (%p159) target = $region12
    $region11: #{multi_headed_attention.6} parent=5 // pred_region
      %s163 = ssub.s32 %s9, 1
    $region12: #{multi_headed_attention.6} parent=5 // pred_fallthru
      _
    %p164 = scmp.lt.s32.totalorder %s9, 4
    // Predicated region
    $region13: #{multi_headed_attention.6} parent=5 // pred_check
      %p165 = pneg %p164
    $region14: #{multi_headed_attention.6} parent=5 // pred_check_branch
      %167 = sbr.rel (%p165) target = $region16
    $region15: #{multi_headed_attention.6} parent=5 // pred_region
      // Predicated region
      $region17: #{multi_headed_attention.6} parent=15 // pred_check
        %p168 = pneg %p59
      $region18: #{multi_headed_attention.6} parent=15 // pred_check_branch
        %170 = sbr.rel (%p168) target = $region20
      $region19: #{multi_headed_attention.6} parent=15 // pred_region
        %s171 = smul.u32 32, %s18
        %s172 = smul.u32 2, %s19
        %p173 = scmp.lt.s32.totalorder %s16, 1
        %s174 = scalar_select %p173, %s16, 1
        %p175 = scmp.lt.s32.totalorder %s171, 31
        %s176 = scalar_select %p175, %s171, 31
        %p177 = scmp.lt.s32.totalorder %s172, 1
        %s178 = scalar_select %p177, %s172, 1
        %s179 = smul.addr %s176, 2
        %s180 = sadd.s32 %s178, %s179
        %s181 = smul.addr %s174, 64
        %s182 = sadd.s32 %s180, %s181
        %s183 = smul.addr %s182, 8
        %s184 = scalar_lea.vmem %s0, %s183
        %s185 = smul.u32 32, %s18
        %s186 = smul.u32 2, %s19
      $region20: #{multi_headed_attention.6} parent=15 // pred_fallthru
        _
      // Predicated region
      $region21: #{multi_headed_attention.6} parent=15 // pred_check
        %p187 = pneg %p87
      $region22: #{multi_headed_attention.6} parent=15 // pred_check_branch
        %189 = sbr.rel (%p187) target = $region24
      $region23: #{multi_headed_attention.6} parent=15 // pred_region
        %s190 = smul.u32 32, %s19
        %p191 = scmp.lt.s32.totalorder %s17, 1
        %s192 = scalar_select %p191, %s17, 1
        %p193 = scmp.lt.s32.totalorder %s190, 31
        %s194 = scalar_select %p193, %s190, 31
        %s195 = smul.addr %s192, 32
        %s196 = sadd.s32 %s194, %s195
        %s197 = smul.addr %s196, 8
        %s198 = scalar_lea.vmem %s1, %s197
        %s199 = smul.u32 32, %s19
      $region24: #{multi_headed_attention.6} parent=15 // pred_fallthru
        _
      // Predicated region
      $region25: #{multi_headed_attention.6} parent=15 // pred_check
        %p200 = pneg %p113
      $region26: #{multi_headed_attention.6} parent=15 // pred_check_branch
        %202 = sbr.rel (%p200) target = $region28
      $region27: #{multi_headed_attention.6} parent=15 // pred_region
        %p203 = scmp.lt.s32.totalorder %s17, 1
        %s204 = scalar_select %p203, %s17, 1
        %s205 = scalar_lea.vmem %s2, %s204
      $region28: #{multi_headed_attention.6} parent=15 // pred_fallthru
        _
    $region16: #{multi_headed_attention.6} parent=5 // pred_fallthru
      _
    %p206 = scmp.le.s32.totalorder 1, %s9
    %p207 = scmp.lt.s32.totalorder %s9, 5
    %p208 = pnand %p206, %p207
    %p209 = pneg %p208
    // Predicated region
    $region29: #{multi_headed_attention.6} parent=5 // pred_check
      _
    $region30: #{multi_headed_attention.6} parent=5 // pred_check_branch
      %211 = sbr.rel (%p208) target = $region32
    $region31: #{multi_headed_attention.6} parent=5 // pred_region
      %s212 = ssub.s32 %s9, 1
      %s213 = smul.u32 32, %s22
      %s214 = smul.u32 2, %s23
      %p215 = scmp.lt.s32.totalorder %s20, 1
      %s216 = scalar_select %p215, %s20, 1
      %p217 = scmp.lt.s32.totalorder %s213, 31
      %s218 = scalar_select %p217, %s213, 31
      %p219 = scmp.lt.s32.totalorder %s214, 1
      %s220 = scalar_select %p219, %s214, 1
      %s221 = smul.addr %s218, 2
      %s222 = sadd.s32 %s220, %s221
      %s223 = smul.addr %s216, 64
      %s224 = sadd.s32 %s222, %s223
      %s225 = smul.addr %s224, 8
      %s226 = scalar_lea.vmem %s0, %s225
      %p227 = pneg %p65
      %p228 = pneg %p62
      %s229 = smul.u32 32, %s23
      %p230 = scmp.lt.s32.totalorder %s21, 1
      %s231 = scalar_select %p230, %s21, 1
      %p232 = scmp.lt.s32.totalorder %s229, 31
      %s233 = scalar_select %p232, %s229, 31
      %s234 = smul.addr %s231, 32
      %s235 = sadd.s32 %s233, %s234
      %s236 = smul.addr %s235, 8
      %s237 = scalar_lea.vmem %s1, %s236
      %p238 = pneg %p93
      %p239 = pneg %p90
      %p240 = scmp.lt.s32.totalorder %s21, 1
      %s241 = scalar_select %p240, %s21, 1
      %s242 = scalar_lea.vmem %s2, %s241
      %p243 = pneg %p119
      %p244 = pneg %p116
      %p245 = pneg %p149
      %p246 = pneg %p146
      %s247 = smul.u32 32, %s22
      %p248 = scmp.lt.s32.totalorder %s20, 1
      %s249 = scalar_select %p248, %s20, 1
      %p250 = scmp.lt.s32.totalorder %s21, 1
      %s251 = scalar_select %p250, %s21, 1
      %p252 = scmp.lt.s32.totalorder %s247, 31
      %s253 = scalar_select %p252, %s247, 31
      %s254 = smul.addr %s251, 32
      %s255 = sadd.s32 %s253, %s254
      %s256 = smul.addr %s249, 64
      %s257 = sadd.s32 %s255, %s256
      %s258 = smul.addr %s257, 8
      %s259 = scalar_lea.vmem %s3, %s258
      %s260 = smul.u32 32, %s22
      %s261 = smul.u32 2, %s23
      %p262 = scmp.lt.s32.totalorder %s20, 1
      %s263 = scalar_select %p262, %s20, 1
      %p264 = scmp.lt.s32.totalorder %s260, 31
      %s265 = scalar_select %p264, %s260, 31
      %p266 = scmp.lt.s32.totalorder %s261, 1
      %s267 = scalar_select %p266, %s261, 1
      %s268 = smul.addr %s265, 2
      %s269 = sadd.s32 %s267, %s268
      %s270 = smul.addr %s263, 64
      %s271 = sadd.s32 %s269, %s270
      %s272 = smul.addr %s271, 8
      %s273 = scalar_lea.vmem %s0, %s272
      %s274 = smul.u32 32, %s22
      %s275 = smul.u32 2, %s23
      %s276 = smul.u32 32, %s23
      %p277 = scmp.lt.s32.totalorder %s21, 1
      %s278 = scalar_select %p277, %s21, 1
      %p279 = scmp.lt.s32.totalorder %s276, 31
      %s280 = scalar_select %p279, %s276, 31
      %s281 = smul.addr %s278, 32
      %s282 = sadd.s32 %s280, %s281
      %s283 = smul.addr %s282, 8
      %s284 = scalar_lea.vmem %s1, %s283
      %s285 = smul.u32 32, %s23
      %p286 = scmp.lt.s32.totalorder %s21, 1
      %s287 = scalar_select %p286, %s21, 1
      %s288 = scalar_lea.vmem %s2, %s287
      %s289 = smul.u32 32, %s22
      %p290 = scmp.lt.s32.totalorder %s20, 1
      %s291 = scalar_select %p290, %s20, 1
      %p292 = scmp.lt.s32.totalorder %s21, 1
      %s293 = scalar_select %p292, %s21, 1
      %p294 = scmp.lt.s32.totalorder %s289, 31
      %s295 = scalar_select %p294, %s289, 31
      %s296 = smul.addr %s293, 32
      %s297 = sadd.s32 %s295, %s296
      %s298 = smul.addr %s291, 64
      %s299 = sadd.s32 %s297, %s298
      %s300 = smul.addr %s299, 8
      %s301 = scalar_lea.vmem %s3, %s300
      %s302 = smul.u32 32, %s22
      %p303 = scmp.eq.s32.totalorder %s23, 0
      // Predicated region
      $region33: #{multi_headed_attention.6} parent=31 // pred_check
        %p304 = pneg %p303
      $region34: #{multi_headed_attention.6} parent=31 // pred_check_branch
        %306 = sbr.rel (%p304) target = $region36
      $region35: #{multi_headed_attention.6} parent=31 // pred_region
        %307 = vst [vmem:[#allocation2] sm:$0xff] 0.0
        %308 = vst [vmem:[#allocation2 + $0x8] sm:$0xff] 0.0
        %309 = vst [vmem:[#allocation2 + $0x10] sm:$0xff] 0.0
        %310 = vst [vmem:[#allocation2 + $0x18] sm:$0xff] 0.0
        %311 = vst [vmem:[#allocation2 + $0x20] sm:$0xff] 0.0
        %312 = vst [vmem:[#allocation2 + $0x28] sm:$0xff] 0.0
        %313 = vst [vmem:[#allocation2 + $0x30] sm:$0xff] 0.0
        %314 = vst [vmem:[#allocation2 + $0x38] sm:$0xff] 0.0
        %315 = vst [vmem:[#allocation2 + $0x40] sm:$0xff] 0.0
        %316 = vst [vmem:[#allocation2 + $0x48] sm:$0xff] 0.0
        %317 = vst [vmem:[#allocation2 + $0x50] sm:$0xff] 0.0
        %318 = vst [vmem:[#allocation2 + $0x58] sm:$0xff] 0.0
        %319 = vst [vmem:[#allocation2 + $0x60] sm:$0xff] 0.0
        %320 = vst [vmem:[#allocation2 + $0x68] sm:$0xff] 0.0
        %321 = vst [vmem:[#allocation2 + $0x70] sm:$0xff] 0.0
        %322 = vst [vmem:[#allocation2 + $0x78] sm:$0xff] 0.0
        %323 = vst [vmem:[#allocation2 + $0x80] sm:$0xff] 0.0
        %324 = vst [vmem:[#allocation2 + $0x88] sm:$0xff] 0.0
        %325 = vst [vmem:[#allocation2 + $0x90] sm:$0xff] 0.0
        %326 = vst [vmem:[#allocation2 + $0x98] sm:$0xff] 0.0
        %327 = vst [vmem:[#allocation2 + $0xa0] sm:$0xff] 0.0
        %328 = vst [vmem:[#allocation2 + $0xa8] sm:$0xff] 0.0
        %329 = vst [vmem:[#allocation2 + $0xb0] sm:$0xff] 0.0
        %330 = vst [vmem:[#allocation2 + $0xb8] sm:$0xff] 0.0
        %331 = vst [vmem:[#allocation2 + $0xc0] sm:$0xff] 0.0
        %332 = vst [vmem:[#allocation2 + $0xc8] sm:$0xff] 0.0
        %333 = vst [vmem:[#allocation2 + $0xd0] sm:$0xff] 0.0
        %334 = vst [vmem:[#allocation2 + $0xd8] sm:$0xff] 0.0
        %335 = vst [vmem:[#allocation2 + $0xe0] sm:$0xff] 0.0
        %336 = vst [vmem:[#allocation2 + $0xe8] sm:$0xff] 0.0
        %337 = vst [vmem:[#allocation2 + $0xf0] sm:$0xff] 0.0
        %338 = vst [vmem:[#allocation2 + $0xf8] sm:$0xff] 0.0
      $region36: #{multi_headed_attention.6} parent=31 // pred_fallthru
        _
      %v339 = vld [vmem:[#allocation2] sm:$0xff]
      %v340 = vld [vmem:[#allocation2 + $0x8] sm:$0xff]
      %v341 = vld [vmem:[#allocation2 + $0x10] sm:$0xff]
      %v342 = vld [vmem:[#allocation2 + $0x18] sm:$0xff]
      %v343 = vld [vmem:[#allocation2 + $0x20] sm:$0xff]
      %v344 = vld [vmem:[#allocation2 + $0x28] sm:$0xff]
      %v345 = vld [vmem:[#allocation2 + $0x30] sm:$0xff]
      %v346 = vld [vmem:[#allocation2 + $0x38] sm:$0xff]
      %v347 = vld [vmem:[#allocation2 + $0x40] sm:$0xff]
      %v348 = vld [vmem:[#allocation2 + $0x48] sm:$0xff]
      %v349 = vld [vmem:[#allocation2 + $0x50] sm:$0xff]
      %v350 = vld [vmem:[#allocation2 + $0x58] sm:$0xff]
      %v351 = vld [vmem:[#allocation2 + $0x60] sm:$0xff]
      %v352 = vld [vmem:[#allocation2 + $0x68] sm:$0xff]
      %v353 = vld [vmem:[#allocation2 + $0x70] sm:$0xff]
      %v354 = vld [vmem:[#allocation2 + $0x78] sm:$0xff]
      %v355 = vld [vmem:[#allocation2 + $0x80] sm:$0xff]
      %v356 = vld [vmem:[#allocation2 + $0x88] sm:$0xff]
      %v357 = vld [vmem:[#allocation2 + $0x90] sm:$0xff]
      %v358 = vld [vmem:[#allocation2 + $0x98] sm:$0xff]
      %v359 = vld [vmem:[#allocation2 + $0xa0] sm:$0xff]
      %v360 = vld [vmem:[#allocation2 + $0xa8] sm:$0xff]
      %v361 = vld [vmem:[#allocation2 + $0xb0] sm:$0xff]
      %v362 = vld [vmem:[#allocation2 + $0xb8] sm:$0xff]
      %v363 = vld [vmem:[#allocation2 + $0xc0] sm:$0xff]
      %v364 = vld [vmem:[#allocation2 + $0xc8] sm:$0xff]
      %v365 = vld [vmem:[#allocation2 + $0xd0] sm:$0xff]
      %v366 = vld [vmem:[#allocation2 + $0xd8] sm:$0xff]
      %v367 = vld [vmem:[#allocation2 + $0xe0] sm:$0xff]
      %v368 = vld [vmem:[#allocation2 + $0xe8] sm:$0xff]
      %v369 = vld [vmem:[#allocation2 + $0xf0] sm:$0xff]
      %v370 = vld [vmem:[#allocation2 + $0xf8] sm:$0xff]
      %v371 = vld [vmem:[%s273] sm:$0xff]
      %v372 = vld [vmem:[%s273 + $0x8] sm:$0xff]
      %v373 = vld [vmem:[%s273 + $0x10] sm:$0xff]
      %v374 = vld [vmem:[%s273 + $0x18] sm:$0xff]
      %v375 = vld [vmem:[%s273 + $0x20] sm:$0xff]
      %v376 = vld [vmem:[%s273 + $0x28] sm:$0xff]
      %v377 = vld [vmem:[%s273 + $0x30] sm:$0xff]
      %v378 = vld [vmem:[%s273 + $0x38] sm:$0xff]
      %v379 = vld [vmem:[%s273 + $0x40] sm:$0xff]
      %v380 = vld [vmem:[%s273 + $0x48] sm:$0xff]
      %v381 = vld [vmem:[%s273 + $0x50] sm:$0xff]
      %v382 = vld [vmem:[%s273 + $0x58] sm:$0xff]
      %v383 = vld [vmem:[%s273 + $0x60] sm:$0xff]
      %v384 = vld [vmem:[%s273 + $0x68] sm:$0xff]
      %v385 = vld [vmem:[%s273 + $0x70] sm:$0xff]
      %v386 = vld [vmem:[%s273 + $0x78] sm:$0xff]
      %v387 = vld [vmem:[%s273 + $0x80] sm:$0xff]
      %v388 = vld [vmem:[%s273 + $0x88] sm:$0xff]
      %v389 = vld [vmem:[%s273 + $0x90] sm:$0xff]
      %v390 = vld [vmem:[%s273 + $0x98] sm:$0xff]
      %v391 = vld [vmem:[%s273 + $0xa0] sm:$0xff]
      %v392 = vld [vmem:[%s273 + $0xa8] sm:$0xff]
      %v393 = vld [vmem:[%s273 + $0xb0] sm:$0xff]
      %v394 = vld [vmem:[%s273 + $0xb8] sm:$0xff]
      %v395 = vld [vmem:[%s273 + $0xc0] sm:$0xff]
      %v396 = vld [vmem:[%s273 + $0xc8] sm:$0xff]
      %v397 = vld [vmem:[%s273 + $0xd0] sm:$0xff]
      %v398 = vld [vmem:[%s273 + $0xd8] sm:$0xff]
      %v399 = vld [vmem:[%s273 + $0xe0] sm:$0xff]
      %v400 = vld [vmem:[%s273 + $0xe8] sm:$0xff]
      %v401 = vld [vmem:[%s273 + $0xf0] sm:$0xff]
      %v402 = vld [vmem:[%s273 + $0xf8] sm:$0xff]
      %v403 = vld [vmem:[%s273 + $0x100] sm:$0xff]
      %v404 = vld [vmem:[%s273 + $0x108] sm:$0xff]
      %v405 = vld [vmem:[%s273 + $0x110] sm:$0xff]
      %v406 = vld [vmem:[%s273 + $0x118] sm:$0xff]
      %v407 = vld [vmem:[%s273 + $0x120] sm:$0xff]
      %v408 = vld [vmem:[%s273 + $0x128] sm:$0xff]
      %v409 = vld [vmem:[%s273 + $0x130] sm:$0xff]
      %v410 = vld [vmem:[%s273 + $0x138] sm:$0xff]
      %v411 = vld [vmem:[%s273 + $0x140] sm:$0xff]
      %v412 = vld [vmem:[%s273 + $0x148] sm:$0xff]
      %v413 = vld [vmem:[%s273 + $0x150] sm:$0xff]
      %v414 = vld [vmem:[%s273 + $0x158] sm:$0xff]
      %v415 = vld [vmem:[%s273 + $0x160] sm:$0xff]
      %v416 = vld [vmem:[%s273 + $0x168] sm:$0xff]
      %v417 = vld [vmem:[%s273 + $0x170] sm:$0xff]
      %v418 = vld [vmem:[%s273 + $0x178] sm:$0xff]
      %v419 = vld [vmem:[%s273 + $0x180] sm:$0xff]
      %v420 = vld [vmem:[%s273 + $0x188] sm:$0xff]
      %v421 = vld [vmem:[%s273 + $0x190] sm:$0xff]
      %v422 = vld [vmem:[%s273 + $0x198] sm:$0xff]
      %v423 = vld [vmem:[%s273 + $0x1a0] sm:$0xff]
      %v424 = vld [vmem:[%s273 + $0x1a8] sm:$0xff]
      %v425 = vld [vmem:[%s273 + $0x1b0] sm:$0xff]
      %v426 = vld [vmem:[%s273 + $0x1b8] sm:$0xff]
      %v427 = vld [vmem:[%s273 + $0x1c0] sm:$0xff]
      %v428 = vld [vmem:[%s273 + $0x1c8] sm:$0xff]
      %v429 = vld [vmem:[%s273 + $0x1d0] sm:$0xff]
      %v430 = vld [vmem:[%s273 + $0x1d8] sm:$0xff]
      %v431 = vld [vmem:[%s273 + $0x1e0] sm:$0xff]
      %v432 = vld [vmem:[%s273 + $0x1e8] sm:$0xff]
      %v433 = vld [vmem:[%s273 + $0x1f0] sm:$0xff]
      %v434 = vld [vmem:[%s273 + $0x1f8] sm:$0xff]
      %v435 = vld [vmem:[%s284] sm:$0xff]
      %v436 = vld [vmem:[%s284 + $0x8] sm:$0xff]
      %v437 = vld [vmem:[%s284 + $0x10] sm:$0xff]
      %v438 = vld [vmem:[%s284 + $0x18] sm:$0xff]
      %v439 = vld [vmem:[%s284 + $0x20] sm:$0xff]
      %v440 = vld [vmem:[%s284 + $0x28] sm:$0xff]
      %v441 = vld [vmem:[%s284 + $0x30] sm:$0xff]
      %v442 = vld [vmem:[%s284 + $0x38] sm:$0xff]
      %v443 = vld [vmem:[%s284 + $0x40] sm:$0xff]
      %v444 = vld [vmem:[%s284 + $0x48] sm:$0xff]
      %v445 = vld [vmem:[%s284 + $0x50] sm:$0xff]
      %v446 = vld [vmem:[%s284 + $0x58] sm:$0xff]
      %v447 = vld [vmem:[%s284 + $0x60] sm:$0xff]
      %v448 = vld [vmem:[%s284 + $0x68] sm:$0xff]
      %v449 = vld [vmem:[%s284 + $0x70] sm:$0xff]
      %v450 = vld [vmem:[%s284 + $0x78] sm:$0xff]
      %v451 = vld [vmem:[%s284 + $0x80] sm:$0xff]
      %v452 = vld [vmem:[%s284 + $0x88] sm:$0xff]
      %v453 = vld [vmem:[%s284 + $0x90] sm:$0xff]
      %v454 = vld [vmem:[%s284 + $0x98] sm:$0xff]
      %v455 = vld [vmem:[%s284 + $0xa0] sm:$0xff]
      %v456 = vld [vmem:[%s284 + $0xa8] sm:$0xff]
      %v457 = vld [vmem:[%s284 + $0xb0] sm:$0xff]
      %v458 = vld [vmem:[%s284 + $0xb8] sm:$0xff]
      %v459 = vld [vmem:[%s284 + $0xc0] sm:$0xff]
      %v460 = vld [vmem:[%s284 + $0xc8] sm:$0xff]
      %v461 = vld [vmem:[%s284 + $0xd0] sm:$0xff]
      %v462 = vld [vmem:[%s284 + $0xd8] sm:$0xff]
      %v463 = vld [vmem:[%s284 + $0xe0] sm:$0xff]
      %v464 = vld [vmem:[%s284 + $0xe8] sm:$0xff]
      %v465 = vld [vmem:[%s284 + $0xf0] sm:$0xff]
      %v466 = vld [vmem:[%s284 + $0xf8] sm:$0xff]
      %467 = vmatprep.subr.mxu0 0.0
      %468 = vmatpush1.msra.mxu0 %v450
      %469 = vmatprep.subr.mxu0 0.0
      %470 = vmatpush1.msra.mxu0 %v449
      %471 = vmatprep.subr.mxu0 0.0
      %472 = vmatpush1.msra.mxu0 %v448
      %473 = vmatprep.subr.mxu0 0.0
      %474 = vmatpush1.msra.mxu0 %v447
      %475 = vmatprep.subr.mxu0 0.0
      %476 = vmatpush1.msra.mxu0 %v446
      %477 = vmatprep.subr.mxu0 0.0
      %478 = vmatpush1.msra.mxu0 %v445
      %479 = vmatprep.subr.mxu0 0.0
      %480 = vmatpush1.msra.mxu0 %v444
      %481 = vmatprep.subr.mxu0 0.0
      %482 = vmatpush1.msra.mxu0 %v443
      %483 = vmatprep.subr.mxu0 0.0
      %484 = vmatpush1.msra.mxu0 %v442
      %485 = vmatprep.subr.mxu0 0.0
      %486 = vmatpush1.msra.mxu0 %v441
      %487 = vmatprep.subr.mxu0 0.0
      %488 = vmatpush1.msra.mxu0 %v440
      %489 = vmatprep.subr.mxu0 0.0
      %490 = vmatpush1.msra.mxu0 %v439
      %491 = vmatprep.subr.mxu0 0.0
      %492 = vmatpush1.msra.mxu0 %v438
      %493 = vmatprep.subr.mxu0 0.0
      %494 = vmatpush1.msra.mxu0 %v437
      %495 = vmatprep.subr.mxu0 0.0
      %496 = vmatpush1.msra.mxu0 %v436
      %497 = vmatprep.subr.mxu0 0.0
      %498 = vmatpush1.msra.mxu0 %v435
      %499 = vmatprep.subr.mxu0 0.0
      %500 = vmatpush2.msra.mxu0 %v466
      %501 = vmatprep.subr.mxu0 0.0
      %502 = vmatpush2.msra.mxu0 %v465
      %503 = vmatprep.subr.mxu0 0.0
      %504 = vmatpush2.msra.mxu0 %v464
      %505 = vmatprep.subr.mxu0 0.0
      %506 = vmatpush2.msra.mxu0 %v463
      %507 = vmatprep.subr.mxu0 0.0
      %508 = vmatpush2.msra.mxu0 %v462
      %509 = vmatprep.subr.mxu0 0.0
      %510 = vmatpush2.msra.mxu0 %v461
      %511 = vmatprep.subr.mxu0 0.0
      %512 = vmatpush2.msra.mxu0 %v460
      %513 = vmatprep.subr.mxu0 0.0
      %514 = vmatpush2.msra.mxu0 %v459
      %515 = vmatprep.subr.mxu0 0.0
      %516 = vmatpush2.msra.mxu0 %v458
      %517 = vmatprep.subr.mxu0 0.0
      %518 = vmatpush2.msra.mxu0 %v457
      %519 = vmatprep.subr.mxu0 0.0
      %520 = vmatpush2.msra.mxu0 %v456
      %521 = vmatprep.subr.mxu0 0.0
      %522 = vmatpush2.msra.mxu0 %v455
      %523 = vmatprep.subr.mxu0 0.0
      %524 = vmatpush2.msra.mxu0 %v454
      %525 = vmatprep.subr.mxu0 0.0
      %526 = vmatpush2.msra.mxu0 %v453
      %527 = vmatprep.subr.mxu0 0.0
      %528 = vmatpush2.msra.mxu0 %v452
      %529 = vmatprep.subr.mxu0 0.0
      %530 = vmatpush2.msra.mxu0 %v451
      %531 = vmatprep.mubr.f32.mxu0 %v372
      %532 = vmatmul.mubr.f32.gmra.mxu0 %v371
      %v533 = vpop.f32.mrf.mxu0
      %v534 = vadd.f32 0.0, %v533
      %v535 = vpop.f32.mrf.mxu0
      %536 = vmatprep.mubr.f32.mxu0 %v374
      %537 = vmatmul.mubr.f32.gmra.mxu0 %v373
      %v538 = vpop.f32.mrf.mxu0
      %v539 = vadd.f32 0.0, %v538
      %v540 = vpop.f32.mrf.mxu0
      %541 = vmatprep.mubr.f32.mxu0 %v376
      %542 = vmatmul.mubr.f32.gmra.mxu0 %v375
      %v543 = vpop.f32.mrf.mxu0
      %v544 = vadd.f32 0.0, %v543
      %v545 = vpop.f32.mrf.mxu0
      %546 = vmatprep.mubr.f32.mxu0 %v378
      %547 = vmatmul.mubr.f32.gmra.mxu0 %v377
      %v548 = vpop.f32.mrf.mxu0
      %v549 = vadd.f32 0.0, %v548
      %v550 = vpop.f32.mrf.mxu0
      %551 = vmatprep.mubr.f32.mxu0 %v380
      %552 = vmatmul.mubr.f32.gmra.mxu0 %v379
      %v553 = vpop.f32.mrf.mxu0
      %v554 = vadd.f32 0.0, %v553
      %v555 = vpop.f32.mrf.mxu0
      %556 = vmatprep.mubr.f32.mxu0 %v382
      %557 = vmatmul.mubr.f32.gmra.mxu0 %v381
      %v558 = vpop.f32.mrf.mxu0
      %v559 = vadd.f32 0.0, %v558
      %v560 = vpop.f32.mrf.mxu0
      %561 = vmatprep.mubr.f32.mxu0 %v384
      %562 = vmatmul.mubr.f32.gmra.mxu0 %v383
      %v563 = vpop.f32.mrf.mxu0
      %v564 = vadd.f32 0.0, %v563
      %v565 = vpop.f32.mrf.mxu0
      %566 = vmatprep.mubr.f32.mxu0 %v386
      %567 = vmatmul.mubr.f32.gmra.mxu0 %v385
      %v568 = vpop.f32.mrf.mxu0
      %v569 = vadd.f32 0.0, %v568
      %v570 = vpop.f32.mrf.mxu0
      %571 = vmatprep.mubr.f32.mxu0 %v388
      %572 = vmatmul.mubr.f32.gmra.mxu0 %v387
      %v573 = vpop.f32.mrf.mxu0
      %v574 = vadd.f32 0.0, %v573
      %v575 = vpop.f32.mrf.mxu0
      %576 = vmatprep.mubr.f32.mxu0 %v390
      %577 = vmatmul.mubr.f32.gmra.mxu0 %v389
      %v578 = vpop.f32.mrf.mxu0
      %v579 = vadd.f32 0.0, %v578
      %v580 = vpop.f32.mrf.mxu0
      %581 = vmatprep.mubr.f32.mxu0 %v392
      %582 = vmatmul.mubr.f32.gmra.mxu0 %v391
      %v583 = vpop.f32.mrf.mxu0
      %v584 = vadd.f32 0.0, %v583
      %v585 = vpop.f32.mrf.mxu0
      %586 = vmatprep.mubr.f32.mxu0 %v394
      %587 = vmatmul.mubr.f32.gmra.mxu0 %v393
      %v588 = vpop.f32.mrf.mxu0
      %v589 = vadd.f32 0.0, %v588
      %v590 = vpop.f32.mrf.mxu0
      %591 = vmatprep.mubr.f32.mxu0 %v396
      %592 = vmatmul.mubr.f32.gmra.mxu0 %v395
      %v593 = vpop.f32.mrf.mxu0
      %v594 = vadd.f32 0.0, %v593
      %v595 = vpop.f32.mrf.mxu0
      %596 = vmatprep.mubr.f32.mxu0 %v398
      %597 = vmatmul.mubr.f32.gmra.mxu0 %v397
      %v598 = vpop.f32.mrf.mxu0
      %v599 = vadd.f32 0.0, %v598
      %v600 = vpop.f32.mrf.mxu0
      %601 = vmatprep.mubr.f32.mxu0 %v400
      %602 = vmatmul.mubr.f32.gmra.mxu0 %v399
      %v603 = vpop.f32.mrf.mxu0
      %v604 = vadd.f32 0.0, %v603
      %v605 = vpop.f32.mrf.mxu0
      %606 = vmatprep.mubr.f32.mxu0 %v402
      %607 = vmatmul.mubr.f32.gmra.mxu0 %v401
      %v608 = vpop.f32.mrf.mxu0
      %v609 = vadd.f32 0.0, %v608
      %v610 = vpop.f32.mrf.mxu0
      %611 = vmatprep.mubr.f32.mxu0 %v404
      %612 = vmatmul.mubr.f32.gmra.mxu0 %v403
      %v613 = vpop.f32.mrf.mxu0
      %v614 = vadd.f32 0.0, %v613
      %v615 = vpop.f32.mrf.mxu0
      %616 = vmatprep.mubr.f32.mxu0 %v406
      %617 = vmatmul.mubr.f32.gmra.mxu0 %v405
      %v618 = vpop.f32.mrf.mxu0
      %v619 = vadd.f32 0.0, %v618
      %v620 = vpop.f32.mrf.mxu0
      %621 = vmatprep.mubr.f32.mxu0 %v408
      %622 = vmatmul.mubr.f32.gmra.mxu0 %v407
      %v623 = vpop.f32.mrf.mxu0
      %v624 = vadd.f32 0.0, %v623
      %v625 = vpop.f32.mrf.mxu0
      %626 = vmatprep.mubr.f32.mxu0 %v410
      %627 = vmatmul.mubr.f32.gmra.mxu0 %v409
      %v628 = vpop.f32.mrf.mxu0
      %v629 = vadd.f32 0.0, %v628
      %v630 = vpop.f32.mrf.mxu0
      %631 = vmatprep.mubr.f32.mxu0 %v412
      %632 = vmatmul.mubr.f32.gmra.mxu0 %v411
      %v633 = vpop.f32.mrf.mxu0
      %v634 = vadd.f32 0.0, %v633
      %v635 = vpop.f32.mrf.mxu0
      %636 = vmatprep.mubr.f32.mxu0 %v414
      %637 = vmatmul.mubr.f32.gmra.mxu0 %v413
      %v638 = vpop.f32.mrf.mxu0
      %v639 = vadd.f32 0.0, %v638
      %v640 = vpop.f32.mrf.mxu0
      %641 = vmatprep.mubr.f32.mxu0 %v416
      %642 = vmatmul.mubr.f32.gmra.mxu0 %v415
      %v643 = vpop.f32.mrf.mxu0
      %v644 = vadd.f32 0.0, %v643
      %v645 = vpop.f32.mrf.mxu0
      %646 = vmatprep.mubr.f32.mxu0 %v418
      %647 = vmatmul.mubr.f32.gmra.mxu0 %v417
      %v648 = vpop.f32.mrf.mxu0
      %v649 = vadd.f32 0.0, %v648
      %v650 = vpop.f32.mrf.mxu0
      %651 = vmatprep.mubr.f32.mxu0 %v420
      %652 = vmatmul.mubr.f32.gmra.mxu0 %v419
      %v653 = vpop.f32.mrf.mxu0
      %v654 = vadd.f32 0.0, %v653
      %v655 = vpop.f32.mrf.mxu0
      %656 = vmatprep.mubr.f32.mxu0 %v422
      %657 = vmatmul.mubr.f32.gmra.mxu0 %v421
      %v658 = vpop.f32.mrf.mxu0
      %v659 = vadd.f32 0.0, %v658
      %v660 = vpop.f32.mrf.mxu0
      %661 = vmatprep.mubr.f32.mxu0 %v424
      %662 = vmatmul.mubr.f32.gmra.mxu0 %v423
      %v663 = vpop.f32.mrf.mxu0
      %v664 = vadd.f32 0.0, %v663
      %v665 = vpop.f32.mrf.mxu0
      %666 = vmatprep.mubr.f32.mxu0 %v426
      %667 = vmatmul.mubr.f32.gmra.mxu0 %v425
      %v668 = vpop.f32.mrf.mxu0
      %v669 = vadd.f32 0.0, %v668
      %v670 = vpop.f32.mrf.mxu0
      %671 = vmatprep.mubr.f32.mxu0 %v428
      %672 = vmatmul.mubr.f32.gmra.mxu0 %v427
      %v673 = vpop.f32.mrf.mxu0
      %v674 = vadd.f32 0.0, %v673
      %v675 = vpop.f32.mrf.mxu0
      %676 = vmatprep.mubr.f32.mxu0 %v430
      %677 = vmatmul.mubr.f32.gmra.mxu0 %v429
      %v678 = vpop.f32.mrf.mxu0
      %v679 = vadd.f32 0.0, %v678
      %v680 = vpop.f32.mrf.mxu0
      %681 = vmatprep.mubr.f32.mxu0 %v432
      %682 = vmatmul.mubr.f32.gmra.mxu0 %v431
      %v683 = vpop.f32.mrf.mxu0
      %v684 = vadd.f32 0.0, %v683
      %v685 = vpop.f32.mrf.mxu0
      %686 = vmatprep.mubr.f32.mxu0 %v434
      %687 = vmatmul.mubr.f32.gmra.mxu0 %v433
      %v688 = vpop.f32.mrf.mxu0
      %v689 = vadd.f32 0.0, %v688
      %v690 = vpop.f32.mrf.mxu0
      %691 = vdwg.mxu0
      %v692 = vadd.f32 %v339, %v534
      %v693 = vadd.f32 %v340, %v539
      %v694 = vadd.f32 %v341, %v544
      %v695 = vadd.f32 %v342, %v549
      %v696 = vadd.f32 %v343, %v554
      %v697 = vadd.f32 %v344, %v559
      %v698 = vadd.f32 %v345, %v564
      %v699 = vadd.f32 %v346, %v569
      %v700 = vadd.f32 %v347, %v574
      %v701 = vadd.f32 %v348, %v579
      %v702 = vadd.f32 %v349, %v584
      %v703 = vadd.f32 %v350, %v589
      %v704 = vadd.f32 %v351, %v594
      %v705 = vadd.f32 %v352, %v599
      %v706 = vadd.f32 %v353, %v604
      %v707 = vadd.f32 %v354, %v609
      %v708 = vadd.f32 %v355, %v614
      %v709 = vadd.f32 %v356, %v619
      %v710 = vadd.f32 %v357, %v624
      %v711 = vadd.f32 %v358, %v629
      %v712 = vadd.f32 %v359, %v634
      %v713 = vadd.f32 %v360, %v639
      %v714 = vadd.f32 %v361, %v644
      %v715 = vadd.f32 %v362, %v649
      %v716 = vadd.f32 %v363, %v654
      %v717 = vadd.f32 %v364, %v659
      %v718 = vadd.f32 %v365, %v664
      %v719 = vadd.f32 %v366, %v669
      %v720 = vadd.f32 %v367, %v674
      %v721 = vadd.f32 %v368, %v679
      %v722 = vadd.f32 %v369, %v684
      %v723 = vadd.f32 %v370, %v689
      %724 = vst [vmem:[#allocation2] sm:$0xff] %v692
      %725 = vst [vmem:[#allocation2 + $0x8] sm:$0xff] %v693
      %726 = vst [vmem:[#allocation2 + $0x10] sm:$0xff] %v694
      %727 = vst [vmem:[#allocation2 + $0x18] sm:$0xff] %v695
      %728 = vst [vmem:[#allocation2 + $0x20] sm:$0xff] %v696
      %729 = vst [vmem:[#allocation2 + $0x28] sm:$0xff] %v697
      %730 = vst [vmem:[#allocation2 + $0x30] sm:$0xff] %v698
      %731 = vst [vmem:[#allocation2 + $0x38] sm:$0xff] %v699
      %732 = vst [vmem:[#allocation2 + $0x40] sm:$0xff] %v700
      %733 = vst [vmem:[#allocation2 + $0x48] sm:$0xff] %v701
      %734 = vst [vmem:[#allocation2 + $0x50] sm:$0xff] %v702
      %735 = vst [vmem:[#allocation2 + $0x58] sm:$0xff] %v703
      %736 = vst [vmem:[#allocation2 + $0x60] sm:$0xff] %v704
      %737 = vst [vmem:[#allocation2 + $0x68] sm:$0xff] %v705
      %738 = vst [vmem:[#allocation2 + $0x70] sm:$0xff] %v706
      %739 = vst [vmem:[#allocation2 + $0x78] sm:$0xff] %v707
      %740 = vst [vmem:[#allocation2 + $0x80] sm:$0xff] %v708
      %741 = vst [vmem:[#allocation2 + $0x88] sm:$0xff] %v709
      %742 = vst [vmem:[#allocation2 + $0x90] sm:$0xff] %v710
      %743 = vst [vmem:[#allocation2 + $0x98] sm:$0xff] %v711
      %744 = vst [vmem:[#allocation2 + $0xa0] sm:$0xff] %v712
      %745 = vst [vmem:[#allocation2 + $0xa8] sm:$0xff] %v713
      %746 = vst [vmem:[#allocation2 + $0xb0] sm:$0xff] %v714
      %747 = vst [vmem:[#allocation2 + $0xb8] sm:$0xff] %v715
      %748 = vst [vmem:[#allocation2 + $0xc0] sm:$0xff] %v716
      %749 = vst [vmem:[#allocation2 + $0xc8] sm:$0xff] %v717
      %750 = vst [vmem:[#allocation2 + $0xd0] sm:$0xff] %v718
      %751 = vst [vmem:[#allocation2 + $0xd8] sm:$0xff] %v719
      %752 = vst [vmem:[#allocation2 + $0xe0] sm:$0xff] %v720
      %753 = vst [vmem:[#allocation2 + $0xe8] sm:$0xff] %v721
      %754 = vst [vmem:[#allocation2 + $0xf0] sm:$0xff] %v722
      %755 = vst [vmem:[#allocation2 + $0xf8] sm:$0xff] %v723
      // Predicated region
      $region37: #{multi_headed_attention.6} parent=31 // pred_check
        %p756 = pneg %p303
      $region38: #{multi_headed_attention.6} parent=31 // pred_check_branch
        %758 = sbr.rel (%p756) target = $region40
      $region39: #{multi_headed_attention.6} parent=31 // pred_region
        %v759 = vld [vmem:[#allocation2] sm:$0xff]
        %v760 = vld [vmem:[#allocation2 + $0x8] sm:$0xff]
        %v761 = vld [vmem:[#allocation2 + $0x10] sm:$0xff]
        %v762 = vld [vmem:[#allocation2 + $0x18] sm:$0xff]
        %v763 = vld [vmem:[#allocation2 + $0x20] sm:$0xff]
        %v764 = vld [vmem:[#allocation2 + $0x28] sm:$0xff]
        %v765 = vld [vmem:[#allocation2 + $0x30] sm:$0xff]
        %v766 = vld [vmem:[#allocation2 + $0x38] sm:$0xff]
        %v767 = vld [vmem:[#allocation2 + $0x40] sm:$0xff]
        %v768 = vld [vmem:[#allocation2 + $0x48] sm:$0xff]
        %v769 = vld [vmem:[#allocation2 + $0x50] sm:$0xff]
        %v770 = vld [vmem:[#allocation2 + $0x58] sm:$0xff]
        %v771 = vld [vmem:[#allocation2 + $0x60] sm:$0xff]
        %v772 = vld [vmem:[#allocation2 + $0x68] sm:$0xff]
        %v773 = vld [vmem:[#allocation2 + $0x70] sm:$0xff]
        %v774 = vld [vmem:[#allocation2 + $0x78] sm:$0xff]
        %v775 = vld [vmem:[#allocation2 + $0x80] sm:$0xff]
        %v776 = vld [vmem:[#allocation2 + $0x88] sm:$0xff]
        %v777 = vld [vmem:[#allocation2 + $0x90] sm:$0xff]
        %v778 = vld [vmem:[#allocation2 + $0x98] sm:$0xff]
        %v779 = vld [vmem:[#allocation2 + $0xa0] sm:$0xff]
        %v780 = vld [vmem:[#allocation2 + $0xa8] sm:$0xff]
        %v781 = vld [vmem:[#allocation2 + $0xb0] sm:$0xff]
        %v782 = vld [vmem:[#allocation2 + $0xb8] sm:$0xff]
        %v783 = vld [vmem:[#allocation2 + $0xc0] sm:$0xff]
        %v784 = vld [vmem:[#allocation2 + $0xc8] sm:$0xff]
        %v785 = vld [vmem:[#allocation2 + $0xd0] sm:$0xff]
        %v786 = vld [vmem:[#allocation2 + $0xd8] sm:$0xff]
        %v787 = vld [vmem:[#allocation2 + $0xe0] sm:$0xff]
        %v788 = vld [vmem:[#allocation2 + $0xe8] sm:$0xff]
        %v789 = vld [vmem:[#allocation2 + $0xf0] sm:$0xff]
        %v790 = vld [vmem:[#allocation2 + $0xf8] sm:$0xff]
        %v791 = vld [vmem:[%s288] sm:$0x1]
        %v793 = vlaneseq
        %v794 = vshrl.u32 %v793, 7
        %v795 = vsub.s32 0, %v794
        %v796 = vrot.slane %v791, %v795
        %v798 = vadd.f32 %v759, %v796
        %v799 = vadd.f32 %v760, %v796
        %v800 = vadd.f32 %v761, %v796
        %v801 = vadd.f32 %v762, %v796
        %v802 = vadd.f32 %v763, %v796
        %v803 = vadd.f32 %v764, %v796
        %v804 = vadd.f32 %v765, %v796
        %v805 = vadd.f32 %v766, %v796
        %v806 = vadd.f32 %v767, %v796
        %v807 = vadd.f32 %v768, %v796
        %v808 = vadd.f32 %v769, %v796
        %v809 = vadd.f32 %v770, %v796
        %v810 = vadd.f32 %v771, %v796
        %v811 = vadd.f32 %v772, %v796
        %v812 = vadd.f32 %v773, %v796
        %v813 = vadd.f32 %v774, %v796
        %v814 = vadd.f32 %v775, %v796
        %v815 = vadd.f32 %v776, %v796
        %v816 = vadd.f32 %v777, %v796
        %v817 = vadd.f32 %v778, %v796
        %v818 = vadd.f32 %v779, %v796
        %v819 = vadd.f32 %v780, %v796
        %v820 = vadd.f32 %v781, %v796
        %v821 = vadd.f32 %v782, %v796
        %v822 = vadd.f32 %v783, %v796
        %v823 = vadd.f32 %v784, %v796
        %v824 = vadd.f32 %v785, %v796
        %v825 = vadd.f32 %v786, %v796
        %v826 = vadd.f32 %v787, %v796
        %v827 = vadd.f32 %v788, %v796
        %v828 = vadd.f32 %v789, %v796
        %v829 = vadd.f32 %v790, %v796
        %830 = vst [vmem:[%s301] sm:$0xff] %v798
        %831 = vst [vmem:[%s301 + $0x8] sm:$0xff] %v799
        %832 = vst [vmem:[%s301 + $0x10] sm:$0xff] %v800
        %833 = vst [vmem:[%s301 + $0x18] sm:$0xff] %v801
        %834 = vst [vmem:[%s301 + $0x20] sm:$0xff] %v802
        %835 = vst [vmem:[%s301 + $0x28] sm:$0xff] %v803
        %836 = vst [vmem:[%s301 + $0x30] sm:$0xff] %v804
        %837 = vst [vmem:[%s301 + $0x38] sm:$0xff] %v805
        %838 = vst [vmem:[%s301 + $0x40] sm:$0xff] %v806
        %839 = vst [vmem:[%s301 + $0x48] sm:$0xff] %v807
        %840 = vst [vmem:[%s301 + $0x50] sm:$0xff] %v808
        %841 = vst [vmem:[%s301 + $0x58] sm:$0xff] %v809
        %842 = vst [vmem:[%s301 + $0x60] sm:$0xff] %v810
        %843 = vst [vmem:[%s301 + $0x68] sm:$0xff] %v811
        %844 = vst [vmem:[%s301 + $0x70] sm:$0xff] %v812
        %845 = vst [vmem:[%s301 + $0x78] sm:$0xff] %v813
        %846 = vst [vmem:[%s301 + $0x80] sm:$0xff] %v814
        %847 = vst [vmem:[%s301 + $0x88] sm:$0xff] %v815
        %848 = vst [vmem:[%s301 + $0x90] sm:$0xff] %v816
        %849 = vst [vmem:[%s301 + $0x98] sm:$0xff] %v817
        %850 = vst [vmem:[%s301 + $0xa0] sm:$0xff] %v818
        %851 = vst [vmem:[%s301 + $0xa8] sm:$0xff] %v819
        %852 = vst [vmem:[%s301 + $0xb0] sm:$0xff] %v820
        %853 = vst [vmem:[%s301 + $0xb8] sm:$0xff] %v821
        %854 = vst [vmem:[%s301 + $0xc0] sm:$0xff] %v822
        %855 = vst [vmem:[%s301 + $0xc8] sm:$0xff] %v823
        %856 = vst [vmem:[%s301 + $0xd0] sm:$0xff] %v824
        %857 = vst [vmem:[%s301 + $0xd8] sm:$0xff] %v825
        %858 = vst [vmem:[%s301 + $0xe0] sm:$0xff] %v826
        %859 = vst [vmem:[%s301 + $0xe8] sm:$0xff] %v827
        %860 = vst [vmem:[%s301 + $0xf0] sm:$0xff] %v828
        %861 = vst [vmem:[%s301 + $0xf8] sm:$0xff] %v829
      $region40: #{multi_headed_attention.6} parent=31 // pred_fallthru
        _
      %s862 = smul.u32 32, %s22
      %p863 = scmp.lt.s32.totalorder %s20, 1
      %s864 = scalar_select %p863, %s20, 1
      %p865 = scmp.lt.s32.totalorder %s21, 1
      %s866 = scalar_select %p865, %s21, 1
      %p867 = scmp.lt.s32.totalorder %s862, 31
      %s868 = scalar_select %p867, %s862, 31
      %s869 = smul.addr %s866, 32
      %s870 = sadd.s32 %s868, %s869
      %s871 = smul.addr %s864, 64
      %s872 = sadd.s32 %s870, %s871
      %s873 = smul.addr %s872, 8
      %s874 = scalar_lea.vmem %s3, %s873
      // Predicated region
      $region41: #{multi_headed_attention.6} parent=31 // pred_check
        %p875 = pneg %p146
      $region42: #{multi_headed_attention.6} parent=31 // pred_check_branch
        %877 = sbr.rel (%p875) target = $region44
      $region43: #{multi_headed_attention.6} parent=31 // pred_region
        %s878 = smul.u32 32, %s22
      $region44: #{multi_headed_attention.6} parent=31 // pred_fallthru
        _
    $region32: #{multi_headed_attention.6} parent=5 // pred_fallthru
      _
    %p879 = scmp.le.s32.totalorder 2, %s9
    // Predicated region
    $region45: #{multi_headed_attention.6} parent=5 // pred_check
      %p880 = pneg %p879
    $region46: #{multi_headed_attention.6} parent=5 // pred_check_branch
      %882 = sbr.rel (%p880) target = $region48
    $region47: #{multi_headed_attention.6} parent=5 // pred_region
      %s883 = ssub.s32 %s9, 2
      // Predicated region
      $region49: #{multi_headed_attention.6} parent=47 // pred_check
        %p884 = pneg %p152
      $region50: #{multi_headed_attention.6} parent=47 // pred_check_branch
        %886 = sbr.rel (%p884) target = $region52
      $region51: #{multi_headed_attention.6} parent=47 // pred_region
        %s887 = smul.u32 32, %s26
        %p888 = scmp.lt.s32.totalorder %s24, 1
        %s889 = scalar_select %p888, %s24, 1
        %p890 = scmp.lt.s32.totalorder %s25, 1
        %s891 = scalar_select %p890, %s25, 1
        %p892 = scmp.lt.s32.totalorder %s887, 31
        %s893 = scalar_select %p892, %s887, 31
        %s894 = smul.addr %s891, 32
        %s895 = sadd.s32 %s893, %s894
        %s896 = smul.addr %s889, 64
        %s897 = sadd.s32 %s895, %s896
        %s898 = smul.addr %s897, 8
        %s899 = scalar_lea.vmem %s3, %s898
      $region52: #{multi_headed_attention.6} parent=47 // pred_fallthru
        _
    $region48: #{multi_headed_attention.6} parent=5 // pred_fallthru
      _
  $region6: #{multi_headed_attention.6} parent=0 // loop_footer
    %s13 = sadd.s32 1, %s9
  $region7: #{multi_headed_attention.6} parent=0 // loop_footer_branch
    %8 = sbr.rel target = $region3
  $region8: #{multi_headed_attention.6} parent=0 // loop_exit
    _

// kernel: multi_headed_attention.9
$region0: #{multi_headed_attention.9}
  #allocation0 [shape = 'u32[]', space=smem, size = 0x4, offset = 0x4, fixed_abs, tag = 'smem constant byte address 0x4 - core index']
  #allocation1 [shape = 'u32[144,128]{1,0:T(1,128)}', space=vmem, size = 0x12000, scoped, tag = 'internal scratch']
  #allocation2 [shape = 'f32[256,256]{1,0:T(8,128)}', space=vmem, size = 0x40000, scoped, tag = 'scratch operand']
  %s0 = inlined_call_operand.vmem [shape: f32[2,2,256,128], index: 0, kind: input, shape index: {}]
  %s1 = inlined_call_operand.vmem [shape: f32[2,128,256], index: 1, kind: input, shape index: {}]
  %s2 = inlined_call_operand.vmem [shape: f32[1,256], index: 2, kind: input, shape index: {}]
  %s3 = inlined_call_operand.hbm [shape: f32[2,256,256], index: 3, kind: output, shape index: {}]
  %s4 = sld [smem:[#allocation0]]
  $region53: #{multi_headed_attention.9} parent=0
    _
  %s6 = ssub.s32 1, %s4
  %s7 = scalar_select 0, %s6, %s4
  $region1: #{multi_headed_attention.9} parent=0
    #allocation3 [shape = 'u8[524288]{0}', space=vmem, size = 0x80000, scoped, tag = 'output window, operand 0']
    #allocation4 [shape = 's32[2]{0}', space=sflag, size = 0x8, scoped, tag = 'scoped memory for multi_headed_attention.9']
    %8 = vsyncpa [#allocation4], 0
    %s9 = scalar_lea.sflag [#allocation4], 1
    %10 = vsyncpa %s9, 0
    loop: start=0, step=1, limit=6
    $region2: #{multi_headed_attention.9} parent=1 // loop_pre_header
      _
    $region3: #{multi_headed_attention.9} parent=1 // loop_header
      %s12 = sphi 0, %s16
      %p13 = scmp.ge.s32.totalorder %s12, 6
      %s19 = sphi 0, %s45
      %s20 = sphi 0, %s41
      %s21 = sphi 0, %s37
      %s22 = sphi 0, %s33
      %s23 = sphi 0, %s19
      %s24 = sphi 0, %s20
      %s25 = sphi 0, %s21
      %s26 = sphi 0, %s22
      %s27 = sphi 0, %s23
      %s28 = sphi 0, %s24
      %s29 = sphi 0, %s25
      %s30 = sphi 0, %s26
      %s52 = sphi 0, %s54
      %s55 = sphi 0, %s52
      %s56 = sphi 0, %s55
      %s72 = sphi 0, %s56
      %s80 = sphi 0, %s82
      %s83 = sphi 0, %s80
      %s84 = sphi 0, %s83
      %s100 = sphi 0, %s84
      %s106 = sphi 0, %s108
      %s109 = sphi 0, %s106
      %s110 = sphi 0, %s109
      %s126 = sphi 0, %s110
      %s136 = sphi 0, %s138
      %s139 = sphi 0, %s136
      %s140 = sphi 0, %s139
      %s156 = sphi 0, %s140
    $region4: #{multi_headed_attention.9} parent=1 // loop_header_branch
      %15 = sbr.rel (%p13) target = $region8
    $region5: #{multi_headed_attention.9} parent=1 // loop_body
      %s17 = ssub.s32 %s12, 1
      %s18 = ssub.s32 %s12, 2
      %s31 = sadd.s32 1, %s22
      %p32 = scmp.ge.s32.totalorder %s31, 2
      %s33 = scalar_select %p32, 0, %s31
      %s34 = sadd.s32 1, %s21
      %s35 = scalar_select %p32, %s34, %s21
      %p36 = scmp.ge.s32.totalorder %s35, 1
      %s37 = scalar_select %p36, 0, %s35
      %s38 = sadd.s32 1, %s20
      %s39 = scalar_select %p36, %s38, %s20
      %p40 = scmp.ge.s32.totalorder %s39, 1
      %s41 = scalar_select %p40, 0, %s39
      %s42 = sadd.s32 1, %s19
      %s43 = scalar_select %p40, %s42, %s19
      %p44 = scmp.ge.s32.totalorder %s43, 2
      %s45 = scalar_select %p44, 0, %s43
      %s46 = ssub.s32 %s19, %s45
      %s47 = ssub.s32 %s22, %s33
      %s48 = sor.u32 %s46, %s47
      %s49 = ssub.s32 %s20, %s41
      %s50 = sor.u32 %s48, %s49
      %p51 = scmp.eq.s32.totalorder %s50, 0
      %s53 = sadd.s32 %s52, 1
      %s54 = scalar_select %p51, %s52, %s53
      %p57 = pneg %p51
      %p58 = scmp.eq.s32.totalorder %s12, 3
      %p59 = por %p57, %p58
      %p60 = scmp.ne.s32.totalorder %s52, %s55
      %p61 = scmp.eq.s32.totalorder %s12, 0
      %p62 = por %p60, %p61
      %p63 = scmp.ne.s32.totalorder %s52, %s55
      %p64 = scmp.eq.s32.totalorder %s17, 3
      %p65 = por %p63, %p64
      %p66 = scmp.ne.s32.totalorder %s55, %s56
      %p67 = scmp.eq.s32.totalorder %s17, 0
      %p68 = por %p66, %p67
      %p69 = scmp.ne.s32.totalorder %s55, %s56
      %p70 = scmp.eq.s32.totalorder %s18, 3
      %p71 = por %p69, %p70
      %p73 = scmp.ne.s32.totalorder %s56, %s72
      %p74 = scmp.eq.s32.totalorder %s18, 0
      %p75 = por %p73, %p74
      %s76 = ssub.s32 %s22, %s33
      %s77 = ssub.s32 %s21, %s37
      %s78 = sor.u32 %s76, %s77
      %p79 = scmp.eq.s32.totalorder %s78, 0
      %s81 = sadd.s32 %s80, 1
      %s82 = scalar_select %p79, %s80, %s81
      %p85 = pneg %p79
      %p86 = scmp.eq.s32.totalorder %s12, 3
      %p87 = por %p85, %p86
      %p88 = scmp.ne.s32.totalorder %s80, %s83
      %p89 = scmp.eq.s32.totalorder %s12, 0
      %p90 = por %p88, %p89
      %p91 = scmp.ne.s32.totalorder %s80, %s83
      %p92 = scmp.eq.s32.totalorder %s17, 3
      %p93 = por %p91, %p92
      %p94 = scmp.ne.s32.totalorder %s83, %s84
      %p95 = scmp.eq.s32.totalorder %s17, 0
      %p96 = por %p94, %p95
      %p97 = scmp.ne.s32.totalorder %s83, %s84
      %p98 = scmp.eq.s32.totalorder %s18, 3
      %p99 = por %p97, %p98
      %p101 = scmp.ne.s32.totalorder %s84, %s100
      %p102 = scmp.eq.s32.totalorder %s18, 0
      %p103 = por %p101, %p102
      %s104 = ssub.s32 %s21, %s37
      %p105 = scmp.eq.s32.totalorder %s104, 0
      %s107 = sadd.s32 %s106, 1
      %s108 = scalar_select %p105, %s106, %s107
      %p111 = pneg %p105
      %p112 = scmp.eq.s32.totalorder %s12, 3
      %p113 = por %p111, %p112
      %p114 = scmp.ne.s32.totalorder %s106, %s109
      %p115 = scmp.eq.s32.totalorder %s12, 0
      %p116 = por %p114, %p115
      %p117 = scmp.ne.s32.totalorder %s106, %s109
      %p118 = scmp.eq.s32.totalorder %s17, 3
      %p119 = por %p117, %p118
      %p120 = scmp.ne.s32.totalorder %s109, %s110
      %p121 = scmp.eq.s32.totalorder %s17, 0
      %p122 = por %p120, %p121
      %p123 = scmp.ne.s32.totalorder %s109, %s110
      %p124 = scmp.eq.s32.totalorder %s18, 3
      %p125 = por %p123, %p124
      %p127 = scmp.ne.s32.totalorder %s110, %s126
      %p128 = scmp.eq.s32.totalorder %s18, 0
      %p129 = por %p127, %p128
      %s130 = ssub.s32 %s19, %s45
      %s131 = ssub.s32 %s20, %s41
      %s132 = sor.u32 %s130, %s131
      %s133 = ssub.s32 %s21, %s37
      %s134 = sor.u32 %s132, %s133
      %p135 = scmp.eq.s32.totalorder %s134, 0
      %s137 = sadd.s32 %s136, 1
      %s138 = scalar_select %p135, %s136, %s137
      %p141 = pneg %p135
      %p142 = scmp.eq.s32.totalorder %s12, 3
      %p143 = por %p141, %p142
      %p144 = scmp.ne.s32.totalorder %s136, %s139
      %p145 = scmp.eq.s32.totalorder %s12, 0
      %p146 = por %p144, %p145
      %p147 = scmp.ne.s32.totalorder %s136, %s139
      %p148 = scmp.eq.s32.totalorder %s17, 3
      %p149 = por %p147, %p148
      %p150 = scmp.ne.s32.totalorder %s139, %s140
      %p151 = scmp.eq.s32.totalorder %s17, 0
      %p152 = por %p150, %p151
      %p153 = scmp.ne.s32.totalorder %s139, %s140
      %p154 = scmp.eq.s32.totalorder %s18, 3
      %p155 = por %p153, %p154
      %p157 = scmp.ne.s32.totalorder %s140, %s156
      %p158 = scmp.eq.s32.totalorder %s18, 0
      %p159 = por %p157, %p158
      %p160 = scmp.le.s32.totalorder 1, %s12
      %p161 = scmp.lt.s32.totalorder %s12, 5
      %p162 = pnand %p160, %p161
      %p163 = pneg %p162
      // Predicated region
      $region9: #{multi_headed_attention.9} parent=5 // pred_check
        _
      $region10: #{multi_headed_attention.9} parent=5 // pred_check_branch
        %165 = sbr.rel (%p162) target = $region12
      $region11: #{multi_headed_attention.9} parent=5 // pred_region
        %s166 = ssub.s32 %s12, 1
        // Predicated region
        $region13: #{multi_headed_attention.9} parent=11 // pred_check
          %p167 = pneg %p122
        $region14: #{multi_headed_attention.9} parent=11 // pred_check_branch
          %169 = sbr.rel (%p167) target = $region16
        $region15: #{multi_headed_attention.9} parent=11 // pred_region
          %s170 = smul.u32 2, %s25
          %p171 = scmp.lt.s32.totalorder %s170, 1
          %s172 = scalar_select %p171, %s170, 1
          %s173 = scalar_lea.vmem %s2, %s172
          %s174 = smul.u32 2, %s25
        $region16: #{multi_headed_attention.9} parent=11 // pred_fallthru
          _
      $region12: #{multi_headed_attention.9} parent=5 // pred_fallthru
        _
      %p175 = scmp.lt.s32.totalorder %s12, 4
      // Predicated region
      $region17: #{multi_headed_attention.9} parent=5 // pred_check
        %p176 = pneg %p175
      $region18: #{multi_headed_attention.9} parent=5 // pred_check_branch
        %178 = sbr.rel (%p176) target = $region20
      $region19: #{multi_headed_attention.9} parent=5 // pred_region
        // Predicated region
        $region21: #{multi_headed_attention.9} parent=19 // pred_check
          %p179 = pneg %p62
        $region22: #{multi_headed_attention.9} parent=19 // pred_check_branch
          %181 = sbr.rel (%p179) target = $region24
        $region23: #{multi_headed_attention.9} parent=19 // pred_region
          %s182 = smul.u32 32, %s20
          %p183 = scmp.lt.s32.totalorder %s19, 1
          %s184 = scalar_select %p183, %s19, 1
          %p185 = scmp.lt.s32.totalorder %s22, 1
          %s186 = scalar_select %p185, %s22, 1
          %p187 = scmp.lt.s32.totalorder %s182, 31
          %s188 = scalar_select %p187, %s182, 31
          %s189 = smul.addr %s186, 32
          %s190 = sadd.s32 %s188, %s189
          %s191 = smul.addr %s184, 64
          %s192 = sadd.s32 %s190, %s191
          %s193 = smul.addr %s192, 8
          %s194 = scalar_lea.vmem %s0, %s193
          %s195 = smul.u32 32, %s20
        $region24: #{multi_headed_attention.9} parent=19 // pred_fallthru
          _
        // Predicated region
        $region25: #{multi_headed_attention.9} parent=19 // pred_check
          %p196 = pneg %p90
        $region26: #{multi_headed_attention.9} parent=19 // pred_check_branch
          %198 = sbr.rel (%p196) target = $region28
        $region27: #{multi_headed_attention.9} parent=19 // pred_region
          %s199 = smul.u32 2, %s21
          %p200 = scmp.lt.s32.totalorder %s22, 1
          %s201 = scalar_select %p200, %s22, 1
          %p202 = scmp.lt.s32.totalorder %s199, 1
          %s203 = scalar_select %p202, %s199, 1
          %s204 = smul.addr %s201, 32
          %s205 = sadd.s32 %s203, %s204
          %s206 = smul.addr %s205, 8
          %s207 = scalar_lea.vmem %s1, %s206
          %s208 = smul.u32 2, %s21
        $region28: #{multi_headed_attention.9} parent=19 // pred_fallthru
          _
      $region20: #{multi_headed_attention.9} parent=5 // pred_fallthru
        _
      %p209 = scmp.le.s32.totalorder 1, %s12
      %p210 = scmp.lt.s32.totalorder %s12, 5
      %p211 = pnand %p209, %p210
      %p212 = pneg %p211
      // Predicated region
      $region29: #{multi_headed_attention.9} parent=5 // pred_check
        _
      $region30: #{multi_headed_attention.9} parent=5 // pred_check_branch
        %214 = sbr.rel (%p211) target = $region32
      $region31: #{multi_headed_attention.9} parent=5 // pred_region
        %s215 = ssub.s32 %s12, 1
        %s216 = smul.u32 32, %s24
        %p217 = scmp.lt.s32.totalorder %s23, 1
        %s218 = scalar_select %p217, %s23, 1
        %p219 = scmp.lt.s32.totalorder %s26, 1
        %s220 = scalar_select %p219, %s26, 1
        %p221 = scmp.lt.s32.totalorder %s216, 31
        %s222 = scalar_select %p221, %s216, 31
        %s223 = smul.addr %s220, 32
        %s224 = sadd.s32 %s222, %s223
        %s225 = smul.addr %s218, 64
        %s226 = sadd.s32 %s224, %s225
        %s227 = smul.addr %s226, 8
        %s228 = scalar_lea.vmem %s0, %s227
        %p229 = pneg %p68
        %p230 = pneg %p65
        %s231 = smul.u32 2, %s25
        %p232 = scmp.lt.s32.totalorder %s26, 1
        %s233 = scalar_select %p232, %s26, 1
        %p234 = scmp.lt.s32.totalorder %s231, 1
        %s235 = scalar_select %p234, %s231, 1
        %s236 = smul.addr %s233, 32
        %s237 = sadd.s32 %s235, %s236
        %s238 = smul.addr %s237, 8
        %s239 = scalar_lea.vmem %s1, %s238
        %p240 = pneg %p96
        %p241 = pneg %p93
        %s242 = smul.u32 2, %s25
        %p243 = scmp.lt.s32.totalorder %s242, 1
        %s244 = scalar_select %p243, %s242, 1
        %s245 = scalar_lea.vmem %s2, %s244
        %p246 = pneg %p122
        %p247 = pneg %p119
        %p248 = pneg %p152
        %p249 = pneg %p149
        %s250 = sand.u32 %s139, 1
        %s251 = scalar_lea.sflag [#allocation4], %s250
        %s252 = sand.u32 %s139, 1
        %s253 = smul.addr %s252, 512
        %s254 = scalar_lea.vmem [#allocation3], %s253
        %s255 = smul.u32 32, %s24
        %p256 = scmp.lt.s32.totalorder %s23, 1
        %s257 = scalar_select %p256, %s23, 1
        %p258 = scmp.lt.s32.totalorder %s26, 1
        %s259 = scalar_select %p258, %s26, 1
        %p260 = scmp.lt.s32.totalorder %s255, 31
        %s261 = scalar_select %p260, %s255, 31
        %s262 = smul.addr %s259, 32
        %s263 = sadd.s32 %s261, %s262
        %s264 = smul.addr %s257, 64
        %s265 = sadd.s32 %s263, %s264
        %s266 = smul.addr %s265, 8
        %s267 = scalar_lea.vmem %s0, %s266
        %s268 = smul.u32 32, %s24
        %s269 = smul.u32 2, %s25
        %p270 = scmp.lt.s32.totalorder %s26, 1
        %s271 = scalar_select %p270, %s26, 1
        %p272 = scmp.lt.s32.totalorder %s269, 1
        %s273 = scalar_select %p272, %s269, 1
        %s274 = smul.addr %s271, 32
        %s275 = sadd.s32 %s273, %s274
        %s276 = smul.addr %s275, 8
        %s277 = scalar_lea.vmem %s1, %s276
        %s278 = smul.u32 2, %s25
        %s279 = smul.u32 2, %s25
        %p280 = scmp.lt.s32.totalorder %s279, 1
        %s281 = scalar_select %p280, %s279, 1
        %s282 = scalar_lea.vmem %s2, %s281
        %s283 = smul.u32 2, %s25
        %s284 = smul.u32 32, %s24
        %s285 = smul.u32 2, %s25
        %p286 = scmp.eq.s32.totalorder %s26, 0
        // Predicated region
        $region33: #{multi_headed_attention.9} parent=31 // pred_check
          %p287 = pneg %p286
        $region34: #{multi_headed_attention.9} parent=31 // pred_check_branch
          %289 = sbr.rel (%p287) target = $region36
        $region35: #{multi_headed_attention.9} parent=31 // pred_region
          %290 = vst [vmem:[#allocation2] sm:$0xff] 0.0
          %291 = vst [vmem:[#allocation2 + $0x8] sm:$0xff] 0.0
          %292 = vst [vmem:[#allocation2 + $0x10] sm:$0xff] 0.0
          %293 = vst [vmem:[#allocation2 + $0x18] sm:$0xff] 0.0
          %294 = vst [vmem:[#allocation2 + $0x20] sm:$0xff] 0.0
          %295 = vst [vmem:[#allocation2 + $0x28] sm:$0xff] 0.0
          %296 = vst [vmem:[#allocation2 + $0x30] sm:$0xff] 0.0
          %297 = vst [vmem:[#allocation2 + $0x38] sm:$0xff] 0.0
          %298 = vst [vmem:[#allocation2 + $0x40] sm:$0xff] 0.0
          %299 = vst [vmem:[#allocation2 + $0x48] sm:$0xff] 0.0
          %300 = vst [vmem:[#allocation2 + $0x50] sm:$0xff] 0.0
          %301 = vst [vmem:[#allocation2 + $0x58] sm:$0xff] 0.0
          %302 = vst [vmem:[#allocation2 + $0x60] sm:$0xff] 0.0
          %303 = vst [vmem:[#allocation2 + $0x68] sm:$0xff] 0.0
          %304 = vst [vmem:[#allocation2 + $0x70] sm:$0xff] 0.0
          %305 = vst [vmem:[#allocation2 + $0x78] sm:$0xff] 0.0
          %306 = vst [vmem:[#allocation2 + $0x80] sm:$0xff] 0.0
          %307 = vst [vmem:[#allocation2 + $0x88] sm:$0xff] 0.0
          %308 = vst [vmem:[#allocation2 + $0x90] sm:$0xff] 0.0
          %309 = vst [vmem:[#allocation2 + $0x98] sm:$0xff] 0.0
          %310 = vst [vmem:[#allocation2 + $0xa0] sm:$0xff] 0.0
          %311 = vst [vmem:[#allocation2 + $0xa8] sm:$0xff] 0.0
          %312 = vst [vmem:[#allocation2 + $0xb0] sm:$0xff] 0.0
          %313 = vst [vmem:[#allocation2 + $0xb8] sm:$0xff] 0.0
          %314 = vst [vmem:[#allocation2 + $0xc0] sm:$0xff] 0.0
          %315 = vst [vmem:[#allocation2 + $0xc8] sm:$0xff] 0.0
          %316 = vst [vmem:[#allocation2 + $0xd0] sm:$0xff] 0.0
          %317 = vst [vmem:[#allocation2 + $0xd8] sm:$0xff] 0.0
          %318 = vst [vmem:[#allocation2 + $0xe0] sm:$0xff] 0.0
          %319 = vst [vmem:[#allocation2 + $0xe8] sm:$0xff] 0.0
          %320 = vst [vmem:[#allocation2 + $0xf0] sm:$0xff] 0.0
          %321 = vst [vmem:[#allocation2 + $0xf8] sm:$0xff] 0.0
          %322 = vst [vmem:[#allocation2 + $0x100] sm:$0xff] 0.0
          %323 = vst [vmem:[#allocation2 + $0x108] sm:$0xff] 0.0
          %324 = vst [vmem:[#allocation2 + $0x110] sm:$0xff] 0.0
          %325 = vst [vmem:[#allocation2 + $0x118] sm:$0xff] 0.0
          %326 = vst [vmem:[#allocation2 + $0x120] sm:$0xff] 0.0
          %327 = vst [vmem:[#allocation2 + $0x128] sm:$0xff] 0.0
          %328 = vst [vmem:[#allocation2 + $0x130] sm:$0xff] 0.0
          %329 = vst [vmem:[#allocation2 + $0x138] sm:$0xff] 0.0
          %330 = vst [vmem:[#allocation2 + $0x140] sm:$0xff] 0.0
          %331 = vst [vmem:[#allocation2 + $0x148] sm:$0xff] 0.0
          %332 = vst [vmem:[#allocation2 + $0x150] sm:$0xff] 0.0
          %333 = vst [vmem:[#allocation2 + $0x158] sm:$0xff] 0.0
          %334 = vst [vmem:[#allocation2 + $0x160] sm:$0xff] 0.0
          %335 = vst [vmem:[#allocation2 + $0x168] sm:$0xff] 0.0
          %336 = vst [vmem:[#allocation2 + $0x170] sm:$0xff] 0.0
          %337 = vst [vmem:[#allocation2 + $0x178] sm:$0xff] 0.0
          %338 = vst [vmem:[#allocation2 + $0x180] sm:$0xff] 0.0
          %339 = vst [vmem:[#allocation2 + $0x188] sm:$0xff] 0.0
          %340 = vst [vmem:[#allocation2 + $0x190] sm:$0xff] 0.0
          %341 = vst [vmem:[#allocation2 + $0x198] sm:$0xff] 0.0
          %342 = vst [vmem:[#allocation2 + $0x1a0] sm:$0xff] 0.0
          %343 = vst [vmem:[#allocation2 + $0x1a8] sm:$0xff] 0.0
          %344 = vst [vmem:[#allocation2 + $0x1b0] sm:$0xff] 0.0
          %345 = vst [vmem:[#allocation2 + $0x1b8] sm:$0xff] 0.0
          %346 = vst [vmem:[#allocation2 + $0x1c0] sm:$0xff] 0.0
          %347 = vst [vmem:[#allocation2 + $0x1c8] sm:$0xff] 0.0
          %348 = vst [vmem:[#allocation2 + $0x1d0] sm:$0xff] 0.0
          %349 = vst [vmem:[#allocation2 + $0x1d8] sm:$0xff] 0.0
          %350 = vst [vmem:[#allocation2 + $0x1e0] sm:$0xff] 0.0
          %351 = vst [vmem:[#allocation2 + $0x1e8] sm:$0xff] 0.0
          %352 = vst [vmem:[#allocation2 + $0x1f0] sm:$0xff] 0.0
          %353 = vst [vmem:[#allocation2 + $0x1f8] sm:$0xff] 0.0
        $region36: #{multi_headed_attention.9} parent=31 // pred_fallthru
          _
        %v354 = vld [vmem:[#allocation2] sm:$0xff]
        %v355 = vld [vmem:[#allocation2 + $0x8] sm:$0xff]
        %v356 = vld [vmem:[#allocation2 + $0x10] sm:$0xff]
        %v357 = vld [vmem:[#allocation2 + $0x18] sm:$0xff]
        %v358 = vld [vmem:[#allocation2 + $0x20] sm:$0xff]
        %v359 = vld [vmem:[#allocation2 + $0x28] sm:$0xff]
        %v360 = vld [vmem:[#allocation2 + $0x30] sm:$0xff]
        %v361 = vld [vmem:[#allocation2 + $0x38] sm:$0xff]
        %v362 = vld [vmem:[#allocation2 + $0x40] sm:$0xff]
        %v363 = vld [vmem:[#allocation2 + $0x48] sm:$0xff]
        %v364 = vld [vmem:[#allocation2 + $0x50] sm:$0xff]
        %v365 = vld [vmem:[#allocation2 + $0x58] sm:$0xff]
        %v366 = vld [vmem:[#allocation2 + $0x60] sm:$0xff]
        %v367 = vld [vmem:[#allocation2 + $0x68] sm:$0xff]
        %v368 = vld [vmem:[#allocation2 + $0x70] sm:$0xff]
        %v369 = vld [vmem:[#allocation2 + $0x78] sm:$0xff]
        %v370 = vld [vmem:[#allocation2 + $0x80] sm:$0xff]
        %v371 = vld [vmem:[#allocation2 + $0x88] sm:$0xff]
        %v372 = vld [vmem:[#allocation2 + $0x90] sm:$0xff]
        %v373 = vld [vmem:[#allocation2 + $0x98] sm:$0xff]
        %v374 = vld [vmem:[#allocation2 + $0xa0] sm:$0xff]
        %v375 = vld [vmem:[#allocation2 + $0xa8] sm:$0xff]
        %v376 = vld [vmem:[#allocation2 + $0xb0] sm:$0xff]
        %v377 = vld [vmem:[#allocation2 + $0xb8] sm:$0xff]
        %v378 = vld [vmem:[#allocation2 + $0xc0] sm:$0xff]
        %v379 = vld [vmem:[#allocation2 + $0xc8] sm:$0xff]
        %v380 = vld [vmem:[#allocation2 + $0xd0] sm:$0xff]
        %v381 = vld [vmem:[#allocation2 + $0xd8] sm:$0xff]
        %v382 = vld [vmem:[#allocation2 + $0xe0] sm:$0xff]
        %v383 = vld [vmem:[#allocation2 + $0xe8] sm:$0xff]
        %v384 = vld [vmem:[#allocation2 + $0xf0] sm:$0xff]
        %v385 = vld [vmem:[#allocation2 + $0xf8] sm:$0xff]
        %v386 = vld [vmem:[#allocation2 + $0x100] sm:$0xff]
        %v387 = vld [vmem:[#allocation2 + $0x108] sm:$0xff]
        %v388 = vld [vmem:[#allocation2 + $0x110] sm:$0xff]
        %v389 = vld [vmem:[#allocation2 + $0x118] sm:$0xff]
        %v390 = vld [vmem:[#allocation2 + $0x120] sm:$0xff]
        %v391 = vld [vmem:[#allocation2 + $0x128] sm:$0xff]
        %v392 = vld [vmem:[#allocation2 + $0x130] sm:$0xff]
        %v393 = vld [vmem:[#allocation2 + $0x138] sm:$0xff]
        %v394 = vld [vmem:[#allocation2 + $0x140] sm:$0xff]
        %v395 = vld [vmem:[#allocation2 + $0x148] sm:$0xff]
        %v396 = vld [vmem:[#allocation2 + $0x150] sm:$0xff]
        %v397 = vld [vmem:[#allocation2 + $0x158] sm:$0xff]
        %v398 = vld [vmem:[#allocation2 + $0x160] sm:$0xff]
        %v399 = vld [vmem:[#allocation2 + $0x168] sm:$0xff]
        %v400 = vld [vmem:[#allocation2 + $0x170] sm:$0xff]
        %v401 = vld [vmem:[#allocation2 + $0x178] sm:$0xff]
        %v402 = vld [vmem:[#allocation2 + $0x180] sm:$0xff]
        %v403 = vld [vmem:[#allocation2 + $0x188] sm:$0xff]
        %v404 = vld [vmem:[#allocation2 + $0x190] sm:$0xff]
        %v405 = vld [vmem:[#allocation2 + $0x198] sm:$0xff]
        %v406 = vld [vmem:[#allocation2 + $0x1a0] sm:$0xff]
        %v407 = vld [vmem:[#allocation2 + $0x1a8] sm:$0xff]
        %v408 = vld [vmem:[#allocation2 + $0x1b0] sm:$0xff]
        %v409 = vld [vmem:[#allocation2 + $0x1b8] sm:$0xff]
        %v410 = vld [vmem:[#allocation2 + $0x1c0] sm:$0xff]
        %v411 = vld [vmem:[#allocation2 + $0x1c8] sm:$0xff]
        %v412 = vld [vmem:[#allocation2 + $0x1d0] sm:$0xff]
        %v413 = vld [vmem:[#allocation2 + $0x1d8] sm:$0xff]
        %v414 = vld [vmem:[#allocation2 + $0x1e0] sm:$0xff]
        %v415 = vld [vmem:[#allocation2 + $0x1e8] sm:$0xff]
        %v416 = vld [vmem:[#allocation2 + $0x1f0] sm:$0xff]
        %v417 = vld [vmem:[#allocation2 + $0x1f8] sm:$0xff]
        %v418 = vld [vmem:[%s267] sm:$0xff]
        %v419 = vld [vmem:[%s267 + $0x8] sm:$0xff]
        %v420 = vld [vmem:[%s267 + $0x10] sm:$0xff]
        %v421 = vld [vmem:[%s267 + $0x18] sm:$0xff]
        %v422 = vld [vmem:[%s267 + $0x20] sm:$0xff]
        %v423 = vld [vmem:[%s267 + $0x28] sm:$0xff]
        %v424 = vld [vmem:[%s267 + $0x30] sm:$0xff]
        %v425 = vld [vmem:[%s267 + $0x38] sm:$0xff]
        %v426 = vld [vmem:[%s267 + $0x40] sm:$0xff]
        %v427 = vld [vmem:[%s267 + $0x48] sm:$0xff]
        %v428 = vld [vmem:[%s267 + $0x50] sm:$0xff]
        %v429 = vld [vmem:[%s267 + $0x58] sm:$0xff]
        %v430 = vld [vmem:[%s267 + $0x60] sm:$0xff]
        %v431 = vld [vmem:[%s267 + $0x68] sm:$0xff]
        %v432 = vld [vmem:[%s267 + $0x70] sm:$0xff]
        %v433 = vld [vmem:[%s267 + $0x78] sm:$0xff]
        %v434 = vld [vmem:[%s267 + $0x80] sm:$0xff]
        %v435 = vld [vmem:[%s267 + $0x88] sm:$0xff]
        %v436 = vld [vmem:[%s267 + $0x90] sm:$0xff]
        %v437 = vld [vmem:[%s267 + $0x98] sm:$0xff]
        %v438 = vld [vmem:[%s267 + $0xa0] sm:$0xff]
        %v439 = vld [vmem:[%s267 + $0xa8] sm:$0xff]
        %v440 = vld [vmem:[%s267 + $0xb0] sm:$0xff]
        %v441 = vld [vmem:[%s267 + $0xb8] sm:$0xff]
        %v442 = vld [vmem:[%s267 + $0xc0] sm:$0xff]
        %v443 = vld [vmem:[%s267 + $0xc8] sm:$0xff]
        %v444 = vld [vmem:[%s267 + $0xd0] sm:$0xff]
        %v445 = vld [vmem:[%s267 + $0xd8] sm:$0xff]
        %v446 = vld [vmem:[%s267 + $0xe0] sm:$0xff]
        %v447 = vld [vmem:[%s267 + $0xe8] sm:$0xff]
        %v448 = vld [vmem:[%s267 + $0xf0] sm:$0xff]
        %v449 = vld [vmem:[%s267 + $0xf8] sm:$0xff]
        %v450 = vld [vmem:[%s277] sm:$0xff]
        %v451 = vld [vmem:[%s277 + $0x8] sm:$0xff]
        %v452 = vld [vmem:[%s277 + $0x10] sm:$0xff]
        %v453 = vld [vmem:[%s277 + $0x18] sm:$0xff]
        %v454 = vld [vmem:[%s277 + $0x20] sm:$0xff]
        %v455 = vld [vmem:[%s277 + $0x28] sm:$0xff]
        %v456 = vld [vmem:[%s277 + $0x30] sm:$0xff]
        %v457 = vld [vmem:[%s277 + $0x38] sm:$0xff]
        %v458 = vld [vmem:[%s277 + $0x40] sm:$0xff]
        %v459 = vld [vmem:[%s277 + $0x48] sm:$0xff]
        %v460 = vld [vmem:[%s277 + $0x50] sm:$0xff]
        %v461 = vld [vmem:[%s277 + $0x58] sm:$0xff]
        %v462 = vld [vmem:[%s277 + $0x60] sm:$0xff]
        %v463 = vld [vmem:[%s277 + $0x68] sm:$0xff]
        %v464 = vld [vmem:[%s277 + $0x70] sm:$0xff]
        %v465 = vld [vmem:[%s277 + $0x78] sm:$0xff]
        %v466 = vld [vmem:[%s277 + $0x80] sm:$0xff]
        %v467 = vld [vmem:[%s277 + $0x88] sm:$0xff]
        %v468 = vld [vmem:[%s277 + $0x90] sm:$0xff]
        %v469 = vld [vmem:[%s277 + $0x98] sm:$0xff]
        %v470 = vld [vmem:[%s277 + $0xa0] sm:$0xff]
        %v471 = vld [vmem:[%s277 + $0xa8] sm:$0xff]
        %v472 = vld [vmem:[%s277 + $0xb0] sm:$0xff]
        %v473 = vld [vmem:[%s277 + $0xb8] sm:$0xff]
        %v474 = vld [vmem:[%s277 + $0xc0] sm:$0xff]
        %v475 = vld [vmem:[%s277 + $0xc8] sm:$0xff]
        %v476 = vld [vmem:[%s277 + $0xd0] sm:$0xff]
        %v477 = vld [vmem:[%s277 + $0xd8] sm:$0xff]
        %v478 = vld [vmem:[%s277 + $0xe0] sm:$0xff]
        %v479 = vld [vmem:[%s277 + $0xe8] sm:$0xff]
        %v480 = vld [vmem:[%s277 + $0xf0] sm:$0xff]
        %v481 = vld [vmem:[%s277 + $0xf8] sm:$0xff]
        %482 = vmatprep.subr.mxu0 %v481
        %483 = vmatpush1.msra.mxu0 %v480
        %484 = vmatprep.subr.mxu0 %v479
        %485 = vmatpush1.msra.mxu0 %v478
        %486 = vmatprep.subr.mxu0 %v477
        %487 = vmatpush1.msra.mxu0 %v476
        %488 = vmatprep.subr.mxu0 %v475
        %489 = vmatpush1.msra.mxu0 %v474
        %490 = vmatprep.subr.mxu0 %v473
        %491 = vmatpush1.msra.mxu0 %v472
        %492 = vmatprep.subr.mxu0 %v471
        %493 = vmatpush1.msra.mxu0 %v470
        %494 = vmatprep.subr.mxu0 %v469
        %495 = vmatpush1.msra.mxu0 %v468
        %496 = vmatprep.subr.mxu0 %v467
        %497 = vmatpush1.msra.mxu0 %v466
        %498 = vmatprep.subr.mxu0 %v465
        %499 = vmatpush1.msra.mxu0 %v464
        %500 = vmatprep.subr.mxu0 %v463
        %501 = vmatpush1.msra.mxu0 %v462
        %502 = vmatprep.subr.mxu0 %v461
        %503 = vmatpush1.msra.mxu0 %v460
        %504 = vmatprep.subr.mxu0 %v459
        %505 = vmatpush1.msra.mxu0 %v458
        %506 = vmatprep.subr.mxu0 %v457
        %507 = vmatpush1.msra.mxu0 %v456
        %508 = vmatprep.subr.mxu0 %v455
        %509 = vmatpush1.msra.mxu0 %v454
        %510 = vmatprep.subr.mxu0 %v453
        %511 = vmatpush1.msra.mxu0 %v452
        %512 = vmatprep.subr.mxu0 %v451
        %513 = vmatpush1.msra.mxu0 %v450
        %514 = vmatprep.subr.mxu0 0.0
        %515 = vmatpush2.msra.mxu0 0.0
        %516 = vmatprep.subr.mxu0 0.0
        %517 = vmatpush2.msra.mxu0 0.0
        %518 = vmatprep.subr.mxu0 0.0
        %519 = vmatpush2.msra.mxu0 0.0
        %520 = vmatprep.subr.mxu0 0.0
        %521 = vmatpush2.msra.mxu0 0.0
        %522 = vmatprep.subr.mxu0 0.0
        %523 = vmatpush2.msra.mxu0 0.0
        %524 = vmatprep.subr.mxu0 0.0
        %525 = vmatpush2.msra.mxu0 0.0
        %526 = vmatprep.subr.mxu0 0.0
        %527 = vmatpush2.msra.mxu0 0.0
        %528 = vmatprep.subr.mxu0 0.0
        %529 = vmatpush2.msra.mxu0 0.0
        %530 = vmatprep.subr.mxu0 0.0
        %531 = vmatpush2.msra.mxu0 0.0
        %532 = vmatprep.subr.mxu0 0.0
        %533 = vmatpush2.msra.mxu0 0.0
        %534 = vmatprep.subr.mxu0 0.0
        %535 = vmatpush2.msra.mxu0 0.0
        %536 = vmatprep.subr.mxu0 0.0
        %537 = vmatpush2.msra.mxu0 0.0
        %538 = vmatprep.subr.mxu0 0.0
        %539 = vmatpush2.msra.mxu0 0.0
        %540 = vmatprep.subr.mxu0 0.0
        %541 = vmatpush2.msra.mxu0 0.0
        %542 = vmatprep.subr.mxu0 0.0
        %543 = vmatpush2.msra.mxu0 0.0
        %544 = vmatprep.subr.mxu0 0.0
        %545 = vmatpush2.msra.mxu0 0.0
        %546 = vmatprep.mubr.f32.mxu0 0.0
        %547 = vmatmul.mubr.f32.gmra.mxu0 %v418
        %v548 = vpop.f32.mrf.mxu0
        %v549 = vadd.f32 0.0, %v548
        %v550 = vpop.f32.mrf.mxu0
        %v551 = vadd.f32 0.0, %v550
        %552 = vmatprep.mubr.f32.mxu0 0.0
        %553 = vmatmul.mubr.f32.gmra.mxu0 %v419
        %v554 = vpop.f32.mrf.mxu0
        %v555 = vadd.f32 0.0, %v554
        %v556 = vpop.f32.mrf.mxu0
        %v557 = vadd.f32 0.0, %v556
        %558 = vmatprep.mubr.f32.mxu0 0.0
        %559 = vmatmul.mubr.f32.gmra.mxu0 %v420
        %v560 = vpop.f32.mrf.mxu0
        %v561 = vadd.f32 0.0, %v560
        %v562 = vpop.f32.mrf.mxu0
        %v563 = vadd.f32 0.0, %v562
        %564 = vmatprep.mubr.f32.mxu0 0.0
        %565 = vmatmul.mubr.f32.gmra.mxu0 %v421
        %v566 = vpop.f32.mrf.mxu0
        %v567 = vadd.f32 0.0, %v566
        %v568 = vpop.f32.mrf.mxu0
        %v569 = vadd.f32 0.0, %v568
        %570 = vmatprep.mubr.f32.mxu0 0.0
        %571 = vmatmul.mubr.f32.gmra.mxu0 %v422
        %v572 = vpop.f32.mrf.mxu0
        %v573 = vadd.f32 0.0, %v572
        %v574 = vpop.f32.mrf.mxu0
        %v575 = vadd.f32 0.0, %v574
        %576 = vmatprep.mubr.f32.mxu0 0.0
        %577 = vmatmul.mubr.f32.gmra.mxu0 %v423
        %v578 = vpop.f32.mrf.mxu0
        %v579 = vadd.f32 0.0, %v578
        %v580 = vpop.f32.mrf.mxu0
        %v581 = vadd.f32 0.0, %v580
        %582 = vmatprep.mubr.f32.mxu0 0.0
        %583 = vmatmul.mubr.f32.gmra.mxu0 %v424
        %v584 = vpop.f32.mrf.mxu0
        %v585 = vadd.f32 0.0, %v584
        %v586 = vpop.f32.mrf.mxu0
        %v587 = vadd.f32 0.0, %v586
        %588 = vmatprep.mubr.f32.mxu0 0.0
        %589 = vmatmul.mubr.f32.gmra.mxu0 %v425
        %v590 = vpop.f32.mrf.mxu0
        %v591 = vadd.f32 0.0, %v590
        %v592 = vpop.f32.mrf.mxu0
        %v593 = vadd.f32 0.0, %v592
        %594 = vmatprep.mubr.f32.mxu0 0.0
        %595 = vmatmul.mubr.f32.gmra.mxu0 %v426
        %v596 = vpop.f32.mrf.mxu0
        %v597 = vadd.f32 0.0, %v596
        %v598 = vpop.f32.mrf.mxu0
        %v599 = vadd.f32 0.0, %v598
        %600 = vmatprep.mubr.f32.mxu0 0.0
        %601 = vmatmul.mubr.f32.gmra.mxu0 %v427
        %v602 = vpop.f32.mrf.mxu0
        %v603 = vadd.f32 0.0, %v602
        %v604 = vpop.f32.mrf.mxu0
        %v605 = vadd.f32 0.0, %v604
        %606 = vmatprep.mubr.f32.mxu0 0.0
        %607 = vmatmul.mubr.f32.gmra.mxu0 %v428
        %v608 = vpop.f32.mrf.mxu0
        %v609 = vadd.f32 0.0, %v608
        %v610 = vpop.f32.mrf.mxu0
        %v611 = vadd.f32 0.0, %v610
        %612 = vmatprep.mubr.f32.mxu0 0.0
        %613 = vmatmul.mubr.f32.gmra.mxu0 %v429
        %v614 = vpop.f32.mrf.mxu0
        %v615 = vadd.f32 0.0, %v614
        %v616 = vpop.f32.mrf.mxu0
        %v617 = vadd.f32 0.0, %v616
        %618 = vmatprep.mubr.f32.mxu0 0.0
        %619 = vmatmul.mubr.f32.gmra.mxu0 %v430
        %v620 = vpop.f32.mrf.mxu0
        %v621 = vadd.f32 0.0, %v620
        %v622 = vpop.f32.mrf.mxu0
        %v623 = vadd.f32 0.0, %v622
        %624 = vmatprep.mubr.f32.mxu0 0.0
        %625 = vmatmul.mubr.f32.gmra.mxu0 %v431
        %v626 = vpop.f32.mrf.mxu0
        %v627 = vadd.f32 0.0, %v626
        %v628 = vpop.f32.mrf.mxu0
        %v629 = vadd.f32 0.0, %v628
        %630 = vmatprep.mubr.f32.mxu0 0.0
        %631 = vmatmul.mubr.f32.gmra.mxu0 %v432
        %v632 = vpop.f32.mrf.mxu0
        %v633 = vadd.f32 0.0, %v632
        %v634 = vpop.f32.mrf.mxu0
        %v635 = vadd.f32 0.0, %v634
        %636 = vmatprep.mubr.f32.mxu0 0.0
        %637 = vmatmul.mubr.f32.gmra.mxu0 %v433
        %v638 = vpop.f32.mrf.mxu0
        %v639 = vadd.f32 0.0, %v638
        %v640 = vpop.f32.mrf.mxu0
        %v641 = vadd.f32 0.0, %v640
        %642 = vmatprep.mubr.f32.mxu0 0.0
        %643 = vmatmul.mubr.f32.gmra.mxu0 %v434
        %v644 = vpop.f32.mrf.mxu0
        %v645 = vadd.f32 0.0, %v644
        %v646 = vpop.f32.mrf.mxu0
        %v647 = vadd.f32 0.0, %v646
        %648 = vmatprep.mubr.f32.mxu0 0.0
        %649 = vmatmul.mubr.f32.gmra.mxu0 %v435
        %v650 = vpop.f32.mrf.mxu0
        %v651 = vadd.f32 0.0, %v650
        %v652 = vpop.f32.mrf.mxu0
        %v653 = vadd.f32 0.0, %v652
        %654 = vmatprep.mubr.f32.mxu0 0.0
        %655 = vmatmul.mubr.f32.gmra.mxu0 %v436
        %v656 = vpop.f32.mrf.mxu0
        %v657 = vadd.f32 0.0, %v656
        %v658 = vpop.f32.mrf.mxu0
        %v659 = vadd.f32 0.0, %v658
        %660 = vmatprep.mubr.f32.mxu0 0.0
        %661 = vmatmul.mubr.f32.gmra.mxu0 %v437
        %v662 = vpop.f32.mrf.mxu0
        %v663 = vadd.f32 0.0, %v662
        %v664 = vpop.f32.mrf.mxu0
        %v665 = vadd.f32 0.0, %v664
        %666 = vmatprep.mubr.f32.mxu0 0.0
        %667 = vmatmul.mubr.f32.gmra.mxu0 %v438
        %v668 = vpop.f32.mrf.mxu0
        %v669 = vadd.f32 0.0, %v668
        %v670 = vpop.f32.mrf.mxu0
        %v671 = vadd.f32 0.0, %v670
        %672 = vmatprep.mubr.f32.mxu0 0.0
        %673 = vmatmul.mubr.f32.gmra.mxu0 %v439
        %v674 = vpop.f32.mrf.mxu0
        %v675 = vadd.f32 0.0, %v674
        %v676 = vpop.f32.mrf.mxu0
        %v677 = vadd.f32 0.0, %v676
        %678 = vmatprep.mubr.f32.mxu0 0.0
        %679 = vmatmul.mubr.f32.gmra.mxu0 %v440
        %v680 = vpop.f32.mrf.mxu0
        %v681 = vadd.f32 0.0, %v680
        %v682 = vpop.f32.mrf.mxu0
        %v683 = vadd.f32 0.0, %v682
        %684 = vmatprep.mubr.f32.mxu0 0.0
        %685 = vmatmul.mubr.f32.gmra.mxu0 %v441
        %v686 = vpop.f32.mrf.mxu0
        %v687 = vadd.f32 0.0, %v686
        %v688 = vpop.f32.mrf.mxu0
        %v689 = vadd.f32 0.0, %v688
        %690 = vmatprep.mubr.f32.mxu0 0.0
        %691 = vmatmul.mubr.f32.gmra.mxu0 %v442
        %v692 = vpop.f32.mrf.mxu0
        %v693 = vadd.f32 0.0, %v692
        %v694 = vpop.f32.mrf.mxu0
        %v695 = vadd.f32 0.0, %v694
        %696 = vmatprep.mubr.f32.mxu0 0.0
        %697 = vmatmul.mubr.f32.gmra.mxu0 %v443
        %v698 = vpop.f32.mrf.mxu0
        %v699 = vadd.f32 0.0, %v698
        %v700 = vpop.f32.mrf.mxu0
        %v701 = vadd.f32 0.0, %v700
        %702 = vmatprep.mubr.f32.mxu0 0.0
        %703 = vmatmul.mubr.f32.gmra.mxu0 %v444
        %v704 = vpop.f32.mrf.mxu0
        %v705 = vadd.f32 0.0, %v704
        %v706 = vpop.f32.mrf.mxu0
        %v707 = vadd.f32 0.0, %v706
        %708 = vmatprep.mubr.f32.mxu0 0.0
        %709 = vmatmul.mubr.f32.gmra.mxu0 %v445
        %v710 = vpop.f32.mrf.mxu0
        %v711 = vadd.f32 0.0, %v710
        %v712 = vpop.f32.mrf.mxu0
        %v713 = vadd.f32 0.0, %v712
        %714 = vmatprep.mubr.f32.mxu0 0.0
        %715 = vmatmul.mubr.f32.gmra.mxu0 %v446
        %v716 = vpop.f32.mrf.mxu0
        %v717 = vadd.f32 0.0, %v716
        %v718 = vpop.f32.mrf.mxu0
        %v719 = vadd.f32 0.0, %v718
        %720 = vmatprep.mubr.f32.mxu0 0.0
        %721 = vmatmul.mubr.f32.gmra.mxu0 %v447
        %v722 = vpop.f32.mrf.mxu0
        %v723 = vadd.f32 0.0, %v722
        %v724 = vpop.f32.mrf.mxu0
        %v725 = vadd.f32 0.0, %v724
        %726 = vmatprep.mubr.f32.mxu0 0.0
        %727 = vmatmul.mubr.f32.gmra.mxu0 %v448
        %v728 = vpop.f32.mrf.mxu0
        %v729 = vadd.f32 0.0, %v728
        %v730 = vpop.f32.mrf.mxu0
        %v731 = vadd.f32 0.0, %v730
        %732 = vmatprep.mubr.f32.mxu0 0.0
        %733 = vmatmul.mubr.f32.gmra.mxu0 %v449
        %v734 = vpop.f32.mrf.mxu0
        %v735 = vadd.f32 0.0, %v734
        %v736 = vpop.f32.mrf.mxu0
        %v737 = vadd.f32 0.0, %v736
        %738 = vdwg.mxu0
        %v739 = vadd.f32 %v354, %v549
        %v740 = vadd.f32 %v355, %v551
        %v741 = vadd.f32 %v356, %v555
        %v742 = vadd.f32 %v357, %v557
        %v743 = vadd.f32 %v358, %v561
        %v744 = vadd.f32 %v359, %v563
        %v745 = vadd.f32 %v360, %v567
        %v746 = vadd.f32 %v361, %v569
        %v747 = vadd.f32 %v362, %v573
        %v748 = vadd.f32 %v363, %v575
        %v749 = vadd.f32 %v364, %v579
        %v750 = vadd.f32 %v365, %v581
        %v751 = vadd.f32 %v366, %v585
        %v752 = vadd.f32 %v367, %v587
        %v753 = vadd.f32 %v368, %v591
        %v754 = vadd.f32 %v369, %v593
        %v755 = vadd.f32 %v370, %v597
        %v756 = vadd.f32 %v371, %v599
        %v757 = vadd.f32 %v372, %v603
        %v758 = vadd.f32 %v373, %v605
        %v759 = vadd.f32 %v374, %v609
        %v760 = vadd.f32 %v375, %v611
        %v761 = vadd.f32 %v376, %v615
        %v762 = vadd.f32 %v377, %v617
        %v763 = vadd.f32 %v378, %v621
        %v764 = vadd.f32 %v379, %v623
        %v765 = vadd.f32 %v380, %v627
        %v766 = vadd.f32 %v381, %v629
        %v767 = vadd.f32 %v382, %v633
        %v768 = vadd.f32 %v383, %v635
        %v769 = vadd.f32 %v384, %v639
        %v770 = vadd.f32 %v385, %v641
        %v771 = vadd.f32 %v386, %v645
        %v772 = vadd.f32 %v387, %v647
        %v773 = vadd.f32 %v388, %v651
        %v774 = vadd.f32 %v389, %v653
        %v775 = vadd.f32 %v390, %v657
        %v776 = vadd.f32 %v391, %v659
        %v777 = vadd.f32 %v392, %v663
        %v778 = vadd.f32 %v393, %v665
        %v779 = vadd.f32 %v394, %v669
        %v780 = vadd.f32 %v395, %v671
        %v781 = vadd.f32 %v396, %v675
        %v782 = vadd.f32 %v397, %v677
        %v783 = vadd.f32 %v398, %v681
        %v784 = vadd.f32 %v399, %v683
        %v785 = vadd.f32 %v400, %v687
        %v786 = vadd.f32 %v401, %v689
        %v787 = vadd.f32 %v402, %v693
        %v788 = vadd.f32 %v403, %v695
        %v789 = vadd.f32 %v404, %v699
        %v790 = vadd.f32 %v405, %v701
        %v791 = vadd.f32 %v406, %v705
        %v792 = vadd.f32 %v407, %v707
        %v793 = vadd.f32 %v408, %v711
        %v794 = vadd.f32 %v409, %v713
        %v795 = vadd.f32 %v410, %v717
        %v796 = vadd.f32 %v411, %v719
        %v797 = vadd.f32 %v412, %v723
        %v798 = vadd.f32 %v413, %v725
        %v799 = vadd.f32 %v414, %v729
        %v800 = vadd.f32 %v415, %v731
        %v801 = vadd.f32 %v416, %v735
        %v802 = vadd.f32 %v417, %v737
        %803 = vst [vmem:[#allocation2] sm:$0xff] %v739
        %804 = vst [vmem:[#allocation2 + $0x8] sm:$0xff] %v740
        %805 = vst [vmem:[#allocation2 + $0x10] sm:$0xff] %v741
        %806 = vst [vmem:[#allocation2 + $0x18] sm:$0xff] %v742
        %807 = vst [vmem:[#allocation2 + $0x20] sm:$0xff] %v743
        %808 = vst [vmem:[#allocation2 + $0x28] sm:$0xff] %v744
        %809 = vst [vmem:[#allocation2 + $0x30] sm:$0xff] %v745
        %810 = vst [vmem:[#allocation2 + $0x38] sm:$0xff] %v746
        %811 = vst [vmem:[#allocation2 + $0x40] sm:$0xff] %v747
        %812 = vst [vmem:[#allocation2 + $0x48] sm:$0xff] %v748
        %813 = vst [vmem:[#allocation2 + $0x50] sm:$0xff] %v749
        %814 = vst [vmem:[#allocation2 + $0x58] sm:$0xff] %v750
        %815 = vst [vmem:[#allocation2 + $0x60] sm:$0xff] %v751
        %816 = vst [vmem:[#allocation2 + $0x68] sm:$0xff] %v752
        %817 = vst [vmem:[#allocation2 + $0x70] sm:$0xff] %v753
        %818 = vst [vmem:[#allocation2 + $0x78] sm:$0xff] %v754
        %819 = vst [vmem:[#allocation2 + $0x80] sm:$0xff] %v755
        %820 = vst [vmem:[#allocation2 + $0x88] sm:$0xff] %v756
        %821 = vst [vmem:[#allocation2 + $0x90] sm:$0xff] %v757
        %822 = vst [vmem:[#allocation2 + $0x98] sm:$0xff] %v758
        %823 = vst [vmem:[#allocation2 + $0xa0] sm:$0xff] %v759
        %824 = vst [vmem:[#allocation2 + $0xa8] sm:$0xff] %v760
        %825 = vst [vmem:[#allocation2 + $0xb0] sm:$0xff] %v761
        %826 = vst [vmem:[#allocation2 + $0xb8] sm:$0xff] %v762
        %827 = vst [vmem:[#allocation2 + $0xc0] sm:$0xff] %v763
        %828 = vst [vmem:[#allocation2 + $0xc8] sm:$0xff] %v764
        %829 = vst [vmem:[#allocation2 + $0xd0] sm:$0xff] %v765
        %830 = vst [vmem:[#allocation2 + $0xd8] sm:$0xff] %v766
        %831 = vst [vmem:[#allocation2 + $0xe0] sm:$0xff] %v767
        %832 = vst [vmem:[#allocation2 + $0xe8] sm:$0xff] %v768
        %833 = vst [vmem:[#allocation2 + $0xf0] sm:$0xff] %v769
        %834 = vst [vmem:[#allocation2 + $0xf8] sm:$0xff] %v770
        %835 = vst [vmem:[#allocation2 + $0x100] sm:$0xff] %v771
        %836 = vst [vmem:[#allocation2 + $0x108] sm:$0xff] %v772
        %837 = vst [vmem:[#allocation2 + $0x110] sm:$0xff] %v773
        %838 = vst [vmem:[#allocation2 + $0x118] sm:$0xff] %v774
        %839 = vst [vmem:[#allocation2 + $0x120] sm:$0xff] %v775
        %840 = vst [vmem:[#allocation2 + $0x128] sm:$0xff] %v776
        %841 = vst [vmem:[#allocation2 + $0x130] sm:$0xff] %v777
        %842 = vst [vmem:[#allocation2 + $0x138] sm:$0xff] %v778
        %843 = vst [vmem:[#allocation2 + $0x140] sm:$0xff] %v779
        %844 = vst [vmem:[#allocation2 + $0x148] sm:$0xff] %v780
        %845 = vst [vmem:[#allocation2 + $0x150] sm:$0xff] %v781
        %846 = vst [vmem:[#allocation2 + $0x158] sm:$0xff] %v782
        %847 = vst [vmem:[#allocation2 + $0x160] sm:$0xff] %v783
        %848 = vst [vmem:[#allocation2 + $0x168] sm:$0xff] %v784
        %849 = vst [vmem:[#allocation2 + $0x170] sm:$0xff] %v785
        %850 = vst [vmem:[#allocation2 + $0x178] sm:$0xff] %v786
        %851 = vst [vmem:[#allocation2 + $0x180] sm:$0xff] %v787
        %852 = vst [vmem:[#allocation2 + $0x188] sm:$0xff] %v788
        %853 = vst [vmem:[#allocation2 + $0x190] sm:$0xff] %v789
        %854 = vst [vmem:[#allocation2 + $0x198] sm:$0xff] %v790
        %855 = vst [vmem:[#allocation2 + $0x1a0] sm:$0xff] %v791
        %856 = vst [vmem:[#allocation2 + $0x1a8] sm:$0xff] %v792
        %857 = vst [vmem:[#allocation2 + $0x1b0] sm:$0xff] %v793
        %858 = vst [vmem:[#allocation2 + $0x1b8] sm:$0xff] %v794
        %859 = vst [vmem:[#allocation2 + $0x1c0] sm:$0xff] %v795
        %860 = vst [vmem:[#allocation2 + $0x1c8] sm:$0xff] %v796
        %861 = vst [vmem:[#allocation2 + $0x1d0] sm:$0xff] %v797
        %862 = vst [vmem:[#allocation2 + $0x1d8] sm:$0xff] %v798
        %863 = vst [vmem:[#allocation2 + $0x1e0] sm:$0xff] %v799
        %864 = vst [vmem:[#allocation2 + $0x1e8] sm:$0xff] %v800
        %865 = vst [vmem:[#allocation2 + $0x1f0] sm:$0xff] %v801
        %866 = vst [vmem:[#allocation2 + $0x1f8] sm:$0xff] %v802
        %p867 = scmp.eq.s32.totalorder %s26, 1
        // Predicated region
        $region37: #{multi_headed_attention.9} parent=31 // pred_check
          %p868 = pneg %p867
        $region38: #{multi_headed_attention.9} parent=31 // pred_check_branch
          %870 = sbr.rel (%p868) target = $region40
        $region39: #{multi_headed_attention.9} parent=31 // pred_region
          %v871 = vld [vmem:[#allocation2] sm:$0xff]
          %v872 = vld [vmem:[#allocation2 + $0x8] sm:$0xff]
          %v873 = vld [vmem:[#allocation2 + $0x10] sm:$0xff]
          %v874 = vld [vmem:[#allocation2 + $0x18] sm:$0xff]
          %v875 = vld [vmem:[#allocation2 + $0x20] sm:$0xff]
          %v876 = vld [vmem:[#allocation2 + $0x28] sm:$0xff]
          %v877 = vld [vmem:[#allocation2 + $0x30] sm:$0xff]
          %v878 = vld [vmem:[#allocation2 + $0x38] sm:$0xff]
          %v879 = vld [vmem:[#allocation2 + $0x40] sm:$0xff]
          %v880 = vld [vmem:[#allocation2 + $0x48] sm:$0xff]
          %v881 = vld [vmem:[#allocation2 + $0x50] sm:$0xff]
          %v882 = vld [vmem:[#allocation2 + $0x58] sm:$0xff]
          %v883 = vld [vmem:[#allocation2 + $0x60] sm:$0xff]
          %v884 = vld [vmem:[#allocation2 + $0x68] sm:$0xff]
          %v885 = vld [vmem:[#allocation2 + $0x70] sm:$0xff]
          %v886 = vld [vmem:[#allocation2 + $0x78] sm:$0xff]
          %v887 = vld [vmem:[#allocation2 + $0x80] sm:$0xff]
          %v888 = vld [vmem:[#allocation2 + $0x88] sm:$0xff]
          %v889 = vld [vmem:[#allocation2 + $0x90] sm:$0xff]
          %v890 = vld [vmem:[#allocation2 + $0x98] sm:$0xff]
          %v891 = vld [vmem:[#allocation2 + $0xa0] sm:$0xff]
          %v892 = vld [vmem:[#allocation2 + $0xa8] sm:$0xff]
          %v893 = vld [vmem:[#allocation2 + $0xb0] sm:$0xff]
          %v894 = vld [vmem:[#allocation2 + $0xb8] sm:$0xff]
          %v895 = vld [vmem:[#allocation2 + $0xc0] sm:$0xff]
          %v896 = vld [vmem:[#allocation2 + $0xc8] sm:$0xff]
          %v897 = vld [vmem:[#allocation2 + $0xd0] sm:$0xff]
          %v898 = vld [vmem:[#allocation2 + $0xd8] sm:$0xff]
          %v899 = vld [vmem:[#allocation2 + $0xe0] sm:$0xff]
          %v900 = vld [vmem:[#allocation2 + $0xe8] sm:$0xff]
          %v901 = vld [vmem:[#allocation2 + $0xf0] sm:$0xff]
          %v902 = vld [vmem:[#allocation2 + $0xf8] sm:$0xff]
          %v903 = vld [vmem:[#allocation2 + $0x100] sm:$0xff]
          %v904 = vld [vmem:[#allocation2 + $0x108] sm:$0xff]
          %v905 = vld [vmem:[#allocation2 + $0x110] sm:$0xff]
          %v906 = vld [vmem:[#allocation2 + $0x118] sm:$0xff]
          %v907 = vld [vmem:[#allocation2 + $0x120] sm:$0xff]
          %v908 = vld [vmem:[#allocation2 + $0x128] sm:$0xff]
          %v909 = vld [vmem:[#allocation2 + $0x130] sm:$0xff]
          %v910 = vld [vmem:[#allocation2 + $0x138] sm:$0xff]
          %v911 = vld [vmem:[#allocation2 + $0x140] sm:$0xff]
          %v912 = vld [vmem:[#allocation2 + $0x148] sm:$0xff]
          %v913 = vld [vmem:[#allocation2 + $0x150] sm:$0xff]
          %v914 = vld [vmem:[#allocation2 + $0x158] sm:$0xff]
          %v915 = vld [vmem:[#allocation2 + $0x160] sm:$0xff]
          %v916 = vld [vmem:[#allocation2 + $0x168] sm:$0xff]
          %v917 = vld [vmem:[#allocation2 + $0x170] sm:$0xff]
          %v918 = vld [vmem:[#allocation2 + $0x178] sm:$0xff]
          %v919 = vld [vmem:[#allocation2 + $0x180] sm:$0xff]
          %v920 = vld [vmem:[#allocation2 + $0x188] sm:$0xff]
          %v921 = vld [vmem:[#allocation2 + $0x190] sm:$0xff]
          %v922 = vld [vmem:[#allocation2 + $0x198] sm:$0xff]
          %v923 = vld [vmem:[#allocation2 + $0x1a0] sm:$0xff]
          %v924 = vld [vmem:[#allocation2 + $0x1a8] sm:$0xff]
          %v925 = vld [vmem:[#allocation2 + $0x1b0] sm:$0xff]
          %v926 = vld [vmem:[#allocation2 + $0x1b8] sm:$0xff]
          %v927 = vld [vmem:[#allocation2 + $0x1c0] sm:$0xff]
          %v928 = vld [vmem:[#allocation2 + $0x1c8] sm:$0xff]
          %v929 = vld [vmem:[#allocation2 + $0x1d0] sm:$0xff]
          %v930 = vld [vmem:[#allocation2 + $0x1d8] sm:$0xff]
          %v931 = vld [vmem:[#allocation2 + $0x1e0] sm:$0xff]
          %v932 = vld [vmem:[#allocation2 + $0x1e8] sm:$0xff]
          %v933 = vld [vmem:[#allocation2 + $0x1f0] sm:$0xff]
          %v934 = vld [vmem:[#allocation2 + $0x1f8] sm:$0xff]
          %v935 = vld [vmem:[%s282] sm:$0x3]
          %v937 = vlaneseq
          %v938 = vshrl.u32 %v937, 7
          %v939 = vsub.s32 0, %v938
          %v940 = vrot.slane %v935, %v939
          %v941 = vlaneseq
          %v942 = vshrl.u32 %v941, 7
          %v943 = vsub.s32 1, %v942
          %v944 = vrot.slane %v935, %v943
          %v947 = vadd.f32 %v871, %v940
          %v948 = vadd.f32 %v872, %v944
          %v949 = vadd.f32 %v873, %v940
          %v950 = vadd.f32 %v874, %v944
          %v951 = vadd.f32 %v875, %v940
          %v952 = vadd.f32 %v876, %v944
          %v953 = vadd.f32 %v877, %v940
          %v954 = vadd.f32 %v878, %v944
          %v955 = vadd.f32 %v879, %v940
          %v956 = vadd.f32 %v880, %v944
          %v957 = vadd.f32 %v881, %v940
          %v958 = vadd.f32 %v882, %v944
          %v959 = vadd.f32 %v883, %v940
          %v960 = vadd.f32 %v884, %v944
          %v961 = vadd.f32 %v885, %v940
          %v962 = vadd.f32 %v886, %v944
          %v963 = vadd.f32 %v887, %v940
          %v964 = vadd.f32 %v888, %v944
          %v965 = vadd.f32 %v889, %v940
          %v966 = vadd.f32 %v890, %v944
          %v967 = vadd.f32 %v891, %v940
          %v968 = vadd.f32 %v892, %v944
          %v969 = vadd.f32 %v893, %v940
          %v970 = vadd.f32 %v894, %v944
          %v971 = vadd.f32 %v895, %v940
          %v972 = vadd.f32 %v896, %v944
          %v973 = vadd.f32 %v897, %v940
          %v974 = vadd.f32 %v898, %v944
          %v975 = vadd.f32 %v899, %v940
          %v976 = vadd.f32 %v900, %v944
          %v977 = vadd.f32 %v901, %v940
          %v978 = vadd.f32 %v902, %v944
          %v979 = vadd.f32 %v903, %v940
          %v980 = vadd.f32 %v904, %v944
          %v981 = vadd.f32 %v905, %v940
          %v982 = vadd.f32 %v906, %v944
          %v983 = vadd.f32 %v907, %v940
          %v984 = vadd.f32 %v908, %v944
          %v985 = vadd.f32 %v909, %v940
          %v986 = vadd.f32 %v910, %v944
          %v987 = vadd.f32 %v911, %v940
          %v988 = vadd.f32 %v912, %v944
          %v989 = vadd.f32 %v913, %v940
          %v990 = vadd.f32 %v914, %v944
          %v991 = vadd.f32 %v915, %v940
          %v992 = vadd.f32 %v916, %v944
          %v993 = vadd.f32 %v917, %v940
          %v994 = vadd.f32 %v918, %v944
          %v995 = vadd.f32 %v919, %v940
          %v996 = vadd.f32 %v920, %v944
          %v997 = vadd.f32 %v921, %v940
          %v998 = vadd.f32 %v922, %v944
          %v999 = vadd.f32 %v923, %v940
          %v1000 = vadd.f32 %v924, %v944
          %v1001 = vadd.f32 %v925, %v940
          %v1002 = vadd.f32 %v926, %v944
          %v1003 = vadd.f32 %v927, %v940
          %v1004 = vadd.f32 %v928, %v944
          %v1005 = vadd.f32 %v929, %v940
          %v1006 = vadd.f32 %v930, %v944
          %v1007 = vadd.f32 %v931, %v940
          %v1008 = vadd.f32 %v932, %v944
          %v1009 = vadd.f32 %v933, %v940
          %v1010 = vadd.f32 %v934, %v944
          %1011 = vst [vmem:[%s254] sm:$0xff] %v947
          %1012 = vst [vmem:[%s254 + $0x8] sm:$0xff] %v948
          %1013 = vst [vmem:[%s254 + $0x10] sm:$0xff] %v949
          %1014 = vst [vmem:[%s254 + $0x18] sm:$0xff] %v950
          %1015 = vst [vmem:[%s254 + $0x20] sm:$0xff] %v951
          %1016 = vst [vmem:[%s254 + $0x28] sm:$0xff] %v952
          %1017 = vst [vmem:[%s254 + $0x30] sm:$0xff] %v953
          %1018 = vst [vmem:[%s254 + $0x38] sm:$0xff] %v954
          %1019 = vst [vmem:[%s254 + $0x40] sm:$0xff] %v955
          %1020 = vst [vmem:[%s254 + $0x48] sm:$0xff] %v956
          %1021 = vst [vmem:[%s254 + $0x50] sm:$0xff] %v957
          %1022 = vst [vmem:[%s254 + $0x58] sm:$0xff] %v958
          %1023 = vst [vmem:[%s254 + $0x60] sm:$0xff] %v959
          %1024 = vst [vmem:[%s254 + $0x68] sm:$0xff] %v960
          %1025 = vst [vmem:[%s254 + $0x70] sm:$0xff] %v961
          %1026 = vst [vmem:[%s254 + $0x78] sm:$0xff] %v962
          %1027 = vst [vmem:[%s254 + $0x80] sm:$0xff] %v963
          %1028 = vst [vmem:[%s254 + $0x88] sm:$0xff] %v964
          %1029 = vst [vmem:[%s254 + $0x90] sm:$0xff] %v965
          %1030 = vst [vmem:[%s254 + $0x98] sm:$0xff] %v966
          %1031 = vst [vmem:[%s254 + $0xa0] sm:$0xff] %v967
          %1032 = vst [vmem:[%s254 + $0xa8] sm:$0xff] %v968
          %1033 = vst [vmem:[%s254 + $0xb0] sm:$0xff] %v969
          %1034 = vst [vmem:[%s254 + $0xb8] sm:$0xff] %v970
          %1035 = vst [vmem:[%s254 + $0xc0] sm:$0xff] %v971
          %1036 = vst [vmem:[%s254 + $0xc8] sm:$0xff] %v972
          %1037 = vst [vmem:[%s254 + $0xd0] sm:$0xff] %v973
          %1038 = vst [vmem:[%s254 + $0xd8] sm:$0xff] %v974
          %1039 = vst [vmem:[%s254 + $0xe0] sm:$0xff] %v975
          %1040 = vst [vmem:[%s254 + $0xe8] sm:$0xff] %v976
          %1041 = vst [vmem:[%s254 + $0xf0] sm:$0xff] %v977
          %1042 = vst [vmem:[%s254 + $0xf8] sm:$0xff] %v978
          %1043 = vst [vmem:[%s254 + $0x100] sm:$0xff] %v979
          %1044 = vst [vmem:[%s254 + $0x108] sm:$0xff] %v980
          %1045 = vst [vmem:[%s254 + $0x110] sm:$0xff] %v981
          %1046 = vst [vmem:[%s254 + $0x118] sm:$0xff] %v982
          %1047 = vst [vmem:[%s254 + $0x120] sm:$0xff] %v983
          %1048 = vst [vmem:[%s254 + $0x128] sm:$0xff] %v984
          %1049 = vst [vmem:[%s254 + $0x130] sm:$0xff] %v985
          %1050 = vst [vmem:[%s254 + $0x138] sm:$0xff] %v986
          %1051 = vst [vmem:[%s254 + $0x140] sm:$0xff] %v987
          %1052 = vst [vmem:[%s254 + $0x148] sm:$0xff] %v988
          %1053 = vst [vmem:[%s254 + $0x150] sm:$0xff] %v989
          %1054 = vst [vmem:[%s254 + $0x158] sm:$0xff] %v990
          %1055 = vst [vmem:[%s254 + $0x160] sm:$0xff] %v991
          %1056 = vst [vmem:[%s254 + $0x168] sm:$0xff] %v992
          %1057 = vst [vmem:[%s254 + $0x170] sm:$0xff] %v993
          %1058 = vst [vmem:[%s254 + $0x178] sm:$0xff] %v994
          %1059 = vst [vmem:[%s254 + $0x180] sm:$0xff] %v995
          %1060 = vst [vmem:[%s254 + $0x188] sm:$0xff] %v996
          %1061 = vst [vmem:[%s254 + $0x190] sm:$0xff] %v997
          %1062 = vst [vmem:[%s254 + $0x198] sm:$0xff] %v998
          %1063 = vst [vmem:[%s254 + $0x1a0] sm:$0xff] %v999
          %1064 = vst [vmem:[%s254 + $0x1a8] sm:$0xff] %v1000
          %1065 = vst [vmem:[%s254 + $0x1b0] sm:$0xff] %v1001
          %1066 = vst [vmem:[%s254 + $0x1b8] sm:$0xff] %v1002
          %1067 = vst [vmem:[%s254 + $0x1c0] sm:$0xff] %v1003
          %1068 = vst [vmem:[%s254 + $0x1c8] sm:$0xff] %v1004
          %1069 = vst [vmem:[%s254 + $0x1d0] sm:$0xff] %v1005
          %1070 = vst [vmem:[%s254 + $0x1d8] sm:$0xff] %v1006
          %1071 = vst [vmem:[%s254 + $0x1e0] sm:$0xff] %v1007
          %1072 = vst [vmem:[%s254 + $0x1e8] sm:$0xff] %v1008
          %1073 = vst [vmem:[%s254 + $0x1f0] sm:$0xff] %v1009
          %1074 = vst [vmem:[%s254 + $0x1f8] sm:$0xff] %v1010
        $region40: #{multi_headed_attention.9} parent=31 // pred_fallthru
          _
        %s1075 = sand.u32 %s139, 1
        %s1076 = scalar_lea.sflag [#allocation4], %s1075
        %s1077 = sand.u32 %s139, 1
        %s1078 = smul.addr %s1077, 512
        %s1079 = scalar_lea.vmem [#allocation3], %s1078
        // Predicated region
        $region41: #{multi_headed_attention.9} parent=31 // pred_check
          %p1080 = pneg %p149
        $region42: #{multi_headed_attention.9} parent=31 // pred_check_branch
          %1082 = sbr.rel (%p1080) target = $region44
        $region43: #{multi_headed_attention.9} parent=31 // pred_region
          %s1083 = smul.u32 32, %s24
          %s1084 = smul.u32 2, %s25
          %s1086 = ssub.s32 8192, 8192
          %1087 = vsyncadd %s1076, %s1086
          %s1088 = smul.addr %s1083, 2
          %s1089 = sadd.s32 %s1084, %s1088
          %s1090 = smul.addr %s23, 64
          %s1091 = sadd.s32 %s1089, %s1090
          %s1092 = smul.addr %s1091, 128
          %s1093 = scalar_lea.hbm %s3, %s1092
          %s1094 = sshll.u32 %s1079, 4
          %s1095 = int_to_ptr.vmem [resolvable:$true] %s1094
          %1100 = dma.vmem_to_hbm [thread:$0]  %s1095, 8192, %s1093, %s1076, 256, 256, 16
        $region44: #{multi_headed_attention.9} parent=31 // pred_fallthru
          _
      $region32: #{multi_headed_attention.9} parent=5 // pred_fallthru
        _
      %p1101 = scmp.le.s32.totalorder 2, %s12
      // Predicated region
      $region45: #{multi_headed_attention.9} parent=5 // pred_check
        %p1102 = pneg %p1101
      $region46: #{multi_headed_attention.9} parent=5 // pred_check_branch
        %1104 = sbr.rel (%p1102) target = $region48
      $region47: #{multi_headed_attention.9} parent=5 // pred_region
        %s1105 = ssub.s32 %s12, 2
        // Predicated region
        $region49: #{multi_headed_attention.9} parent=47 // pred_check
          %p1106 = pneg %p155
        $region50: #{multi_headed_attention.9} parent=47 // pred_check_branch
          %1108 = sbr.rel (%p1106) target = $region52
        $region51: #{multi_headed_attention.9} parent=47 // pred_region
          %s1109 = sand.u32 %s140, 1
          %s1110 = scalar_lea.sflag [#allocation4], %s1109
          %s1111 = sand.u32 %s140, 1
          %s1112 = smul.addr %s1111, 512
          %s1113 = scalar_lea.vmem [#allocation3], %s1112
          %1114 = dma.done %s1110, 8192
        $region52: #{multi_headed_attention.9} parent=47 // pred_fallthru
          _
      $region48: #{multi_headed_attention.9} parent=5 // pred_fallthru
        _
    $region6: #{multi_headed_attention.9} parent=1 // loop_footer
      %s16 = sadd.s32 1, %s12
    $region7: #{multi_headed_attention.9} parent=1 // loop_footer_branch
      %11 = sbr.rel target = $region3
    $region8: #{multi_headed_attention.9} parent=1 // loop_exit
      _
    %1115 = vsyncpa [#allocation4], 1
    %s1116 = scalar_lea.sflag [#allocation4], 1
    %1117 = vsyncpa %s1116, 1

// kernel: multi_headed_attention.8
$region0: #{multi_headed_attention.8}
  #allocation0 [shape = 'u32[]', space=smem, size = 0x4, offset = 0x4, fixed_abs, tag = 'smem constant byte address 0x4 - core index']
  #allocation1 [shape = 'u32[144,128]{1,0:T(1,128)}', space=vmem, size = 0x12000, scoped, tag = 'internal scratch']
  #allocation2 [shape = 'f32[256,1]{1,0:T(8,128)}', space=vmem, size = 0x20000, scoped, tag = 'scratch operand']
  #allocation3 [shape = 'f32[256,1]{1,0:T(8,128)}', space=vmem, size = 0x20000, scoped, tag = 'scratch operand']
  #allocation4 [shape = 'f32[256,128]{1,0:T(8,128)}', space=vmem, size = 0x20000, scoped, tag = 'scratch operand']
  %s0 = inlined_call_operand.vmem [shape: f32[2,2,256,128], index: 0, kind: input, shape index: {}]
  %s1 = inlined_call_operand.vmem [shape: f32[2,2,256,128], index: 1, kind: input, shape index: {}]
  %s2 = inlined_call_operand.vmem [shape: f32[2,2,256,128], index: 2, kind: input, shape index: {}]
  %s3 = inlined_call_operand.vmem [shape: f32[2,2,256,128], index: 3, kind: output, shape index: {}]
  %s4 = sld [smem:[#allocation0]]
  $region53: #{multi_headed_attention.8} parent=0
    _
  %s6 = ssub.s32 1, %s4
  %s7 = scalar_select 0, %s6, %s4
  loop: start=0, step=1, limit=6
  $region2: #{multi_headed_attention.8} parent=0 // loop_pre_header
    _
  $region3: #{multi_headed_attention.8} parent=0 // loop_header
    %s9 = sphi 0, %s13
    %p10 = scmp.ge.s32.totalorder %s9, 6
    %s16 = sphi 0, %s42
    %s17 = sphi 0, %s38
    %s18 = sphi 0, %s34
    %s19 = sphi 0, %s30
    %s20 = sphi 0, %s16
    %s21 = sphi 0, %s17
    %s22 = sphi 0, %s18
    %s23 = sphi 0, %s19
    %s24 = sphi 0, %s20
    %s25 = sphi 0, %s21
    %s26 = sphi 0, %s22
    %s27 = sphi 0, %s23
    %s49 = sphi 0, %s51
    %s52 = sphi 0, %s49
    %s53 = sphi 0, %s52
    %s69 = sphi 0, %s53
    %s79 = sphi 0, %s81
    %s82 = sphi 0, %s79
    %s83 = sphi 0, %s82
    %s99 = sphi 0, %s83
    %s109 = sphi 0, %s111
    %s112 = sphi 0, %s109
    %s113 = sphi 0, %s112
    %s129 = sphi 0, %s113
    %s139 = sphi 0, %s141
    %s142 = sphi 0, %s139
    %s143 = sphi 0, %s142
    %s159 = sphi 0, %s143
  $region4: #{multi_headed_attention.8} parent=0 // loop_header_branch
    %12 = sbr.rel (%p10) target = $region8
  $region5: #{multi_headed_attention.8} parent=0 // loop_body
    %s14 = ssub.s32 %s9, 1
    %s15 = ssub.s32 %s9, 2
    %s28 = sadd.s32 1, %s19
    %p29 = scmp.ge.s32.totalorder %s28, 1
    %s30 = scalar_select %p29, 0, %s28
    %s31 = sadd.s32 1, %s18
    %s32 = scalar_select %p29, %s31, %s18
    %p33 = scmp.ge.s32.totalorder %s32, 1
    %s34 = scalar_select %p33, 0, %s32
    %s35 = sadd.s32 1, %s17
    %s36 = scalar_select %p33, %s35, %s17
    %p37 = scmp.ge.s32.totalorder %s36, 2
    %s38 = scalar_select %p37, 0, %s36
    %s39 = sadd.s32 1, %s16
    %s40 = scalar_select %p37, %s39, %s16
    %p41 = scmp.ge.s32.totalorder %s40, 2
    %s42 = scalar_select %p41, 0, %s40
    %s43 = ssub.s32 %s16, %s42
    %s44 = ssub.s32 %s17, %s38
    %s45 = sor.u32 %s43, %s44
    %s46 = ssub.s32 %s18, %s34
    %s47 = sor.u32 %s45, %s46
    %p48 = scmp.eq.s32.totalorder %s47, 0
    %s50 = sadd.s32 %s49, 1
    %s51 = scalar_select %p48, %s49, %s50
    %p54 = pneg %p48
    %p55 = scmp.eq.s32.totalorder %s9, 3
    %p56 = por %p54, %p55
    %p57 = scmp.ne.s32.totalorder %s49, %s52
    %p58 = scmp.eq.s32.totalorder %s9, 0
    %p59 = por %p57, %p58
    %p60 = scmp.ne.s32.totalorder %s49, %s52
    %p61 = scmp.eq.s32.totalorder %s14, 3
    %p62 = por %p60, %p61
    %p63 = scmp.ne.s32.totalorder %s52, %s53
    %p64 = scmp.eq.s32.totalorder %s14, 0
    %p65 = por %p63, %p64
    %p66 = scmp.ne.s32.totalorder %s52, %s53
    %p67 = scmp.eq.s32.totalorder %s15, 3
    %p68 = por %p66, %p67
    %p70 = scmp.ne.s32.totalorder %s53, %s69
    %p71 = scmp.eq.s32.totalorder %s15, 0
    %p72 = por %p70, %p71
    %s73 = ssub.s32 %s16, %s42
    %s74 = ssub.s32 %s17, %s38
    %s75 = sor.u32 %s73, %s74
    %s76 = ssub.s32 %s19, %s30
    %s77 = sor.u32 %s75, %s76
    %p78 = scmp.eq.s32.totalorder %s77, 0
    %s80 = sadd.s32 %s79, 1
    %s81 = scalar_select %p78, %s79, %s80
    %p84 = pneg %p78
    %p85 = scmp.eq.s32.totalorder %s9, 3
    %p86 = por %p84, %p85
    %p87 = scmp.ne.s32.totalorder %s79, %s82
    %p88 = scmp.eq.s32.totalorder %s9, 0
    %p89 = por %p87, %p88
    %p90 = scmp.ne.s32.totalorder %s79, %s82
    %p91 = scmp.eq.s32.totalorder %s14, 3
    %p92 = por %p90, %p91
    %p93 = scmp.ne.s32.totalorder %s82, %s83
    %p94 = scmp.eq.s32.totalorder %s14, 0
    %p95 = por %p93, %p94
    %p96 = scmp.ne.s32.totalorder %s82, %s83
    %p97 = scmp.eq.s32.totalorder %s15, 3
    %p98 = por %p96, %p97
    %p100 = scmp.ne.s32.totalorder %s83, %s99
    %p101 = scmp.eq.s32.totalorder %s15, 0
    %p102 = por %p100, %p101
    %s103 = ssub.s32 %s16, %s42
    %s104 = ssub.s32 %s17, %s38
    %s105 = sor.u32 %s103, %s104
    %s106 = ssub.s32 %s19, %s30
    %s107 = sor.u32 %s105, %s106
    %p108 = scmp.eq.s32.totalorder %s107, 0
    %s110 = sadd.s32 %s109, 1
    %s111 = scalar_select %p108, %s109, %s110
    %p114 = pneg %p108
    %p115 = scmp.eq.s32.totalorder %s9, 3
    %p116 = por %p114, %p115
    %p117 = scmp.ne.s32.totalorder %s109, %s112
    %p118 = scmp.eq.s32.totalorder %s9, 0
    %p119 = por %p117, %p118
    %p120 = scmp.ne.s32.totalorder %s109, %s112
    %p121 = scmp.eq.s32.totalorder %s14, 3
    %p122 = por %p120, %p121
    %p123 = scmp.ne.s32.totalorder %s112, %s113
    %p124 = scmp.eq.s32.totalorder %s14, 0
    %p125 = por %p123, %p124
    %p126 = scmp.ne.s32.totalorder %s112, %s113
    %p127 = scmp.eq.s32.totalorder %s15, 3
    %p128 = por %p126, %p127
    %p130 = scmp.ne.s32.totalorder %s113, %s129
    %p131 = scmp.eq.s32.totalorder %s15, 0
    %p132 = por %p130, %p131
    %s133 = ssub.s32 %s16, %s42
    %s134 = ssub.s32 %s17, %s38
    %s135 = sor.u32 %s133, %s134
    %s136 = ssub.s32 %s18, %s34
    %s137 = sor.u32 %s135, %s136
    %p138 = scmp.eq.s32.totalorder %s137, 0
    %s140 = sadd.s32 %s139, 1
    %s141 = scalar_select %p138, %s139, %s140
    %p144 = pneg %p138
    %p145 = scmp.eq.s32.totalorder %s9, 3
    %p146 = por %p144, %p145
    %p147 = scmp.ne.s32.totalorder %s139, %s142
    %p148 = scmp.eq.s32.totalorder %s9, 0
    %p149 = por %p147, %p148
    %p150 = scmp.ne.s32.totalorder %s139, %s142
    %p151 = scmp.eq.s32.totalorder %s14, 3
    %p152 = por %p150, %p151
    %p153 = scmp.ne.s32.totalorder %s142, %s143
    %p154 = scmp.eq.s32.totalorder %s14, 0
    %p155 = por %p153, %p154
    %p156 = scmp.ne.s32.totalorder %s142, %s143
    %p157 = scmp.eq.s32.totalorder %s15, 3
    %p158 = por %p156, %p157
    %p160 = scmp.ne.s32.totalorder %s143, %s159
    %p161 = scmp.eq.s32.totalorder %s15, 0
    %p162 = por %p160, %p161
    %p163 = scmp.le.s32.totalorder 1, %s9
    %p164 = scmp.lt.s32.totalorder %s9, 5
    %p165 = pnand %p163, %p164
    %p166 = pneg %p165
    // Predicated region
    $region9: #{multi_headed_attention.8} parent=5 // pred_check
      _
    $region10: #{multi_headed_attention.8} parent=5 // pred_check_branch
      %168 = sbr.rel (%p165) target = $region12
    $region11: #{multi_headed_attention.8} parent=5 // pred_region
      %s169 = ssub.s32 %s9, 1
    $region12: #{multi_headed_attention.8} parent=5 // pred_fallthru
      _
    %p170 = scmp.lt.s32.totalorder %s9, 4
    // Predicated region
    $region13: #{multi_headed_attention.8} parent=5 // pred_check
      %p171 = pneg %p170
    $region14: #{multi_headed_attention.8} parent=5 // pred_check_branch
      %173 = sbr.rel (%p171) target = $region16
    $region15: #{multi_headed_attention.8} parent=5 // pred_region
      // Predicated region
      $region17: #{multi_headed_attention.8} parent=15 // pred_check
        %p174 = pneg %p59
      $region18: #{multi_headed_attention.8} parent=15 // pred_check_branch
        %176 = sbr.rel (%p174) target = $region20
      $region19: #{multi_headed_attention.8} parent=15 // pred_region
        %s177 = smul.u32 32, %s18
        %p178 = scmp.lt.s32.totalorder %s16, 1
        %s179 = scalar_select %p178, %s16, 1
        %p180 = scmp.lt.s32.totalorder %s17, 1
        %s181 = scalar_select %p180, %s17, 1
        %p182 = scmp.lt.s32.totalorder %s177, 31
        %s183 = scalar_select %p182, %s177, 31
        %s184 = smul.addr %s181, 32
        %s185 = sadd.s32 %s183, %s184
        %s186 = smul.addr %s179, 64
        %s187 = sadd.s32 %s185, %s186
        %s188 = smul.addr %s187, 8
        %s189 = scalar_lea.vmem %s0, %s188
        %s190 = smul.u32 32, %s18
      $region20: #{multi_headed_attention.8} parent=15 // pred_fallthru
        _
      // Predicated region
      $region21: #{multi_headed_attention.8} parent=15 // pred_check
        %p191 = pneg %p89
      $region22: #{multi_headed_attention.8} parent=15 // pred_check_branch
        %193 = sbr.rel (%p191) target = $region24
      $region23: #{multi_headed_attention.8} parent=15 // pred_region
        %s194 = smul.u32 32, %s19
        %p195 = scmp.lt.s32.totalorder %s16, 1
        %s196 = scalar_select %p195, %s16, 1
        %p197 = scmp.lt.s32.totalorder %s17, 1
        %s198 = scalar_select %p197, %s17, 1
        %p199 = scmp.lt.s32.totalorder %s194, 31
        %s200 = scalar_select %p199, %s194, 31
        %s201 = smul.addr %s198, 32
        %s202 = sadd.s32 %s200, %s201
        %s203 = smul.addr %s196, 64
        %s204 = sadd.s32 %s202, %s203
        %s205 = smul.addr %s204, 8
        %s206 = scalar_lea.vmem %s1, %s205
        %s207 = smul.u32 32, %s19
      $region24: #{multi_headed_attention.8} parent=15 // pred_fallthru
        _
      // Predicated region
      $region25: #{multi_headed_attention.8} parent=15 // pred_check
        %p208 = pneg %p119
      $region26: #{multi_headed_attention.8} parent=15 // pred_check_branch
        %210 = sbr.rel (%p208) target = $region28
      $region27: #{multi_headed_attention.8} parent=15 // pred_region
        %s211 = smul.u32 32, %s19
        %p212 = scmp.lt.s32.totalorder %s16, 1
        %s213 = scalar_select %p212, %s16, 1
        %p214 = scmp.lt.s32.totalorder %s17, 1
        %s215 = scalar_select %p214, %s17, 1
        %p216 = scmp.lt.s32.totalorder %s211, 31
        %s217 = scalar_select %p216, %s211, 31
        %s218 = smul.addr %s215, 32
        %s219 = sadd.s32 %s217, %s218
        %s220 = smul.addr %s213, 64
        %s221 = sadd.s32 %s219, %s220
        %s222 = smul.addr %s221, 8
        %s223 = scalar_lea.vmem %s2, %s222
        %s224 = smul.u32 32, %s19
      $region28: #{multi_headed_attention.8} parent=15 // pred_fallthru
        _
    $region16: #{multi_headed_attention.8} parent=5 // pred_fallthru
      _
    %p225 = scmp.le.s32.totalorder 1, %s9
    %p226 = scmp.lt.s32.totalorder %s9, 5
    %p227 = pnand %p225, %p226
    %p228 = pneg %p227
    // Predicated region
    $region29: #{multi_headed_attention.8} parent=5 // pred_check
      _
    $region30: #{multi_headed_attention.8} parent=5 // pred_check_branch
      %230 = sbr.rel (%p227) target = $region32
    $region31: #{multi_headed_attention.8} parent=5 // pred_region
      %s231 = ssub.s32 %s9, 1
      %s232 = smul.u32 32, %s22
      %p233 = scmp.lt.s32.totalorder %s20, 1
      %s234 = scalar_select %p233, %s20, 1
      %p235 = scmp.lt.s32.totalorder %s21, 1
      %s236 = scalar_select %p235, %s21, 1
      %p237 = scmp.lt.s32.totalorder %s232, 31
      %s238 = scalar_select %p237, %s232, 31
      %s239 = smul.addr %s236, 32
      %s240 = sadd.s32 %s238, %s239
      %s241 = smul.addr %s234, 64
      %s242 = sadd.s32 %s240, %s241
      %s243 = smul.addr %s242, 8
      %s244 = scalar_lea.vmem %s0, %s243
      %p245 = pneg %p65
      %p246 = pneg %p62
      %s247 = smul.u32 32, %s23
      %p248 = scmp.lt.s32.totalorder %s20, 1
      %s249 = scalar_select %p248, %s20, 1
      %p250 = scmp.lt.s32.totalorder %s21, 1
      %s251 = scalar_select %p250, %s21, 1
      %p252 = scmp.lt.s32.totalorder %s247, 31
      %s253 = scalar_select %p252, %s247, 31
      %s254 = smul.addr %s251, 32
      %s255 = sadd.s32 %s253, %s254
      %s256 = smul.addr %s249, 64
      %s257 = sadd.s32 %s255, %s256
      %s258 = smul.addr %s257, 8
      %s259 = scalar_lea.vmem %s1, %s258
      %p260 = pneg %p95
      %p261 = pneg %p92
      %s262 = smul.u32 32, %s23
      %p263 = scmp.lt.s32.totalorder %s20, 1
      %s264 = scalar_select %p263, %s20, 1
      %p265 = scmp.lt.s32.totalorder %s21, 1
      %s266 = scalar_select %p265, %s21, 1
      %p267 = scmp.lt.s32.totalorder %s262, 31
      %s268 = scalar_select %p267, %s262, 31
      %s269 = smul.addr %s266, 32
      %s270 = sadd.s32 %s268, %s269
      %s271 = smul.addr %s264, 64
      %s272 = sadd.s32 %s270, %s271
      %s273 = smul.addr %s272, 8
      %s274 = scalar_lea.vmem %s2, %s273
      %p275 = pneg %p125
      %p276 = pneg %p122
      %p277 = pneg %p155
      %p278 = pneg %p152
      %s279 = smul.u32 32, %s22
      %p280 = scmp.lt.s32.totalorder %s20, 1
      %s281 = scalar_select %p280, %s20, 1
      %p282 = scmp.lt.s32.totalorder %s21, 1
      %s283 = scalar_select %p282, %s21, 1
      %p284 = scmp.lt.s32.totalorder %s279, 31
      %s285 = scalar_select %p284, %s279, 31
      %s286 = smul.addr %s283, 32
      %s287 = sadd.s32 %s285, %s286
      %s288 = smul.addr %s281, 64
      %s289 = sadd.s32 %s287, %s288
      %s290 = smul.addr %s289, 8
      %s291 = scalar_lea.vmem %s3, %s290
      %s292 = smul.u32 32, %s22
      %p293 = scmp.lt.s32.totalorder %s20, 1
      %s294 = scalar_select %p293, %s20, 1
      %p295 = scmp.lt.s32.totalorder %s21, 1
      %s296 = scalar_select %p295, %s21, 1
      %p297 = scmp.lt.s32.totalorder %s292, 31
      %s298 = scalar_select %p297, %s292, 31
      %s299 = smul.addr %s296, 32
      %s300 = sadd.s32 %s298, %s299
      %s301 = smul.addr %s294, 64
      %s302 = sadd.s32 %s300, %s301
      %s303 = smul.addr %s302, 8
      %s304 = scalar_lea.vmem %s0, %s303
      %s305 = smul.u32 32, %s22
      %s306 = smul.u32 32, %s23
      %p307 = scmp.lt.s32.totalorder %s20, 1
      %s308 = scalar_select %p307, %s20, 1
      %p309 = scmp.lt.s32.totalorder %s21, 1
      %s310 = scalar_select %p309, %s21, 1
      %p311 = scmp.lt.s32.totalorder %s306, 31
      %s312 = scalar_select %p311, %s306, 31
      %s313 = smul.addr %s310, 32
      %s314 = sadd.s32 %s312, %s313
      %s315 = smul.addr %s308, 64
      %s316 = sadd.s32 %s314, %s315
      %s317 = smul.addr %s316, 8
      %s318 = scalar_lea.vmem %s1, %s317
      %s319 = smul.u32 32, %s23
      %s320 = smul.u32 32, %s23
      %p321 = scmp.lt.s32.totalorder %s20, 1
      %s322 = scalar_select %p321, %s20, 1
      %p323 = scmp.lt.s32.totalorder %s21, 1
      %s324 = scalar_select %p323, %s21, 1
      %p325 = scmp.lt.s32.totalorder %s320, 31
      %s326 = scalar_select %p325, %s320, 31
      %s327 = smul.addr %s324, 32
      %s328 = sadd.s32 %s326, %s327
      %s329 = smul.addr %s322, 64
      %s330 = sadd.s32 %s328, %s329
      %s331 = smul.addr %s330, 8
      %s332 = scalar_lea.vmem %s2, %s331
      %s333 = smul.u32 32, %s23
      %s334 = smul.u32 32, %s22
      %p335 = scmp.lt.s32.totalorder %s20, 1
      %s336 = scalar_select %p335, %s20, 1
      %p337 = scmp.lt.s32.totalorder %s21, 1
      %s338 = scalar_select %p337, %s21, 1
      %p339 = scmp.lt.s32.totalorder %s334, 31
      %s340 = scalar_select %p339, %s334, 31
      %s341 = smul.addr %s338, 32
      %s342 = sadd.s32 %s340, %s341
      %s343 = smul.addr %s336, 64
      %s344 = sadd.s32 %s342, %s343
      %s345 = smul.addr %s344, 8
      %s346 = scalar_lea.vmem %s3, %s345
      %s347 = smul.u32 32, %s22
      %p348 = scmp.eq.s32.totalorder %s23, 0
      // Predicated region
      $region33: #{multi_headed_attention.8} parent=31 // pred_check
        %p349 = pneg %p348
      $region34: #{multi_headed_attention.8} parent=31 // pred_check_branch
        %351 = sbr.rel (%p349) target = $region36
      $region35: #{multi_headed_attention.8} parent=31 // pred_region
        %vm352 = vcmask 7168
        %353 = vst.msk [vmem:[#allocation2] sm:$0xff] %vm352, -inf
        %354 = vst.msk [vmem:[#allocation2 + $0x8] sm:$0xff] %vm352, -inf
        %355 = vst.msk [vmem:[#allocation2 + $0x10] sm:$0xff] %vm352, -inf
        %356 = vst.msk [vmem:[#allocation2 + $0x18] sm:$0xff] %vm352, -inf
        %357 = vst.msk [vmem:[#allocation2 + $0x20] sm:$0xff] %vm352, -inf
        %358 = vst.msk [vmem:[#allocation2 + $0x28] sm:$0xff] %vm352, -inf
        %359 = vst.msk [vmem:[#allocation2 + $0x30] sm:$0xff] %vm352, -inf
        %360 = vst.msk [vmem:[#allocation2 + $0x38] sm:$0xff] %vm352, -inf
        %361 = vst.msk [vmem:[#allocation2 + $0x40] sm:$0xff] %vm352, -inf
        %362 = vst.msk [vmem:[#allocation2 + $0x48] sm:$0xff] %vm352, -inf
        %363 = vst.msk [vmem:[#allocation2 + $0x50] sm:$0xff] %vm352, -inf
        %364 = vst.msk [vmem:[#allocation2 + $0x58] sm:$0xff] %vm352, -inf
        %365 = vst.msk [vmem:[#allocation2 + $0x60] sm:$0xff] %vm352, -inf
        %366 = vst.msk [vmem:[#allocation2 + $0x68] sm:$0xff] %vm352, -inf
        %367 = vst.msk [vmem:[#allocation2 + $0x70] sm:$0xff] %vm352, -inf
        %368 = vst.msk [vmem:[#allocation2 + $0x78] sm:$0xff] %vm352, -inf
        %369 = vst.msk [vmem:[#allocation2 + $0x80] sm:$0xff] %vm352, -inf
        %370 = vst.msk [vmem:[#allocation2 + $0x88] sm:$0xff] %vm352, -inf
        %371 = vst.msk [vmem:[#allocation2 + $0x90] sm:$0xff] %vm352, -inf
        %372 = vst.msk [vmem:[#allocation2 + $0x98] sm:$0xff] %vm352, -inf
        %373 = vst.msk [vmem:[#allocation2 + $0xa0] sm:$0xff] %vm352, -inf
        %374 = vst.msk [vmem:[#allocation2 + $0xa8] sm:$0xff] %vm352, -inf
        %375 = vst.msk [vmem:[#allocation2 + $0xb0] sm:$0xff] %vm352, -inf
        %376 = vst.msk [vmem:[#allocation2 + $0xb8] sm:$0xff] %vm352, -inf
        %377 = vst.msk [vmem:[#allocation2 + $0xc0] sm:$0xff] %vm352, -inf
        %378 = vst.msk [vmem:[#allocation2 + $0xc8] sm:$0xff] %vm352, -inf
        %379 = vst.msk [vmem:[#allocation2 + $0xd0] sm:$0xff] %vm352, -inf
        %380 = vst.msk [vmem:[#allocation2 + $0xd8] sm:$0xff] %vm352, -inf
        %381 = vst.msk [vmem:[#allocation2 + $0xe0] sm:$0xff] %vm352, -inf
        %382 = vst.msk [vmem:[#allocation2 + $0xe8] sm:$0xff] %vm352, -inf
        %383 = vst.msk [vmem:[#allocation2 + $0xf0] sm:$0xff] %vm352, -inf
        %384 = vst.msk [vmem:[#allocation2 + $0xf8] sm:$0xff] %vm352, -inf
        %385 = vst.msk [vmem:[#allocation3] sm:$0xff] %vm352, 0.0
        %386 = vst.msk [vmem:[#allocation3 + $0x8] sm:$0xff] %vm352, 0.0
        %387 = vst.msk [vmem:[#allocation3 + $0x10] sm:$0xff] %vm352, 0.0
        %388 = vst.msk [vmem:[#allocation3 + $0x18] sm:$0xff] %vm352, 0.0
        %389 = vst.msk [vmem:[#allocation3 + $0x20] sm:$0xff] %vm352, 0.0
        %390 = vst.msk [vmem:[#allocation3 + $0x28] sm:$0xff] %vm352, 0.0
        %391 = vst.msk [vmem:[#allocation3 + $0x30] sm:$0xff] %vm352, 0.0
        %392 = vst.msk [vmem:[#allocation3 + $0x38] sm:$0xff] %vm352, 0.0
        %393 = vst.msk [vmem:[#allocation3 + $0x40] sm:$0xff] %vm352, 0.0
        %394 = vst.msk [vmem:[#allocation3 + $0x48] sm:$0xff] %vm352, 0.0
        %395 = vst.msk [vmem:[#allocation3 + $0x50] sm:$0xff] %vm352, 0.0
        %396 = vst.msk [vmem:[#allocation3 + $0x58] sm:$0xff] %vm352, 0.0
        %397 = vst.msk [vmem:[#allocation3 + $0x60] sm:$0xff] %vm352, 0.0
        %398 = vst.msk [vmem:[#allocation3 + $0x68] sm:$0xff] %vm352, 0.0
        %399 = vst.msk [vmem:[#allocation3 + $0x70] sm:$0xff] %vm352, 0.0
        %400 = vst.msk [vmem:[#allocation3 + $0x78] sm:$0xff] %vm352, 0.0
        %401 = vst.msk [vmem:[#allocation3 + $0x80] sm:$0xff] %vm352, 0.0
        %402 = vst.msk [vmem:[#allocation3 + $0x88] sm:$0xff] %vm352, 0.0
        %403 = vst.msk [vmem:[#allocation3 + $0x90] sm:$0xff] %vm352, 0.0
        %404 = vst.msk [vmem:[#allocation3 + $0x98] sm:$0xff] %vm352, 0.0
        %405 = vst.msk [vmem:[#allocation3 + $0xa0] sm:$0xff] %vm352, 0.0
        %406 = vst.msk [vmem:[#allocation3 + $0xa8] sm:$0xff] %vm352, 0.0
        %407 = vst.msk [vmem:[#allocation3 + $0xb0] sm:$0xff] %vm352, 0.0
        %408 = vst.msk [vmem:[#allocation3 + $0xb8] sm:$0xff] %vm352, 0.0
        %409 = vst.msk [vmem:[#allocation3 + $0xc0] sm:$0xff] %vm352, 0.0
        %410 = vst.msk [vmem:[#allocation3 + $0xc8] sm:$0xff] %vm352, 0.0
        %411 = vst.msk [vmem:[#allocation3 + $0xd0] sm:$0xff] %vm352, 0.0
        %412 = vst.msk [vmem:[#allocation3 + $0xd8] sm:$0xff] %vm352, 0.0
        %413 = vst.msk [vmem:[#allocation3 + $0xe0] sm:$0xff] %vm352, 0.0
        %414 = vst.msk [vmem:[#allocation3 + $0xe8] sm:$0xff] %vm352, 0.0
        %415 = vst.msk [vmem:[#allocation3 + $0xf0] sm:$0xff] %vm352, 0.0
        %416 = vst.msk [vmem:[#allocation3 + $0xf8] sm:$0xff] %vm352, 0.0
        %417 = vst [vmem:[#allocation4] sm:$0xff] 0.0
        %418 = vst [vmem:[#allocation4 + $0x8] sm:$0xff] 0.0
        %419 = vst [vmem:[#allocation4 + $0x10] sm:$0xff] 0.0
        %420 = vst [vmem:[#allocation4 + $0x18] sm:$0xff] 0.0
        %421 = vst [vmem:[#allocation4 + $0x20] sm:$0xff] 0.0
        %422 = vst [vmem:[#allocation4 + $0x28] sm:$0xff] 0.0
        %423 = vst [vmem:[#allocation4 + $0x30] sm:$0xff] 0.0
        %424 = vst [vmem:[#allocation4 + $0x38] sm:$0xff] 0.0
        %425 = vst [vmem:[#allocation4 + $0x40] sm:$0xff] 0.0
        %426 = vst [vmem:[#allocation4 + $0x48] sm:$0xff] 0.0
        %427 = vst [vmem:[#allocation4 + $0x50] sm:$0xff] 0.0
        %428 = vst [vmem:[#allocation4 + $0x58] sm:$0xff] 0.0
        %429 = vst [vmem:[#allocation4 + $0x60] sm:$0xff] 0.0
        %430 = vst [vmem:[#allocation4 + $0x68] sm:$0xff] 0.0
        %431 = vst [vmem:[#allocation4 + $0x70] sm:$0xff] 0.0
        %432 = vst [vmem:[#allocation4 + $0x78] sm:$0xff] 0.0
        %433 = vst [vmem:[#allocation4 + $0x80] sm:$0xff] 0.0
        %434 = vst [vmem:[#allocation4 + $0x88] sm:$0xff] 0.0
        %435 = vst [vmem:[#allocation4 + $0x90] sm:$0xff] 0.0
        %436 = vst [vmem:[#allocation4 + $0x98] sm:$0xff] 0.0
        %437 = vst [vmem:[#allocation4 + $0xa0] sm:$0xff] 0.0
        %438 = vst [vmem:[#allocation4 + $0xa8] sm:$0xff] 0.0
        %439 = vst [vmem:[#allocation4 + $0xb0] sm:$0xff] 0.0
        %440 = vst [vmem:[#allocation4 + $0xb8] sm:$0xff] 0.0
        %441 = vst [vmem:[#allocation4 + $0xc0] sm:$0xff] 0.0
        %442 = vst [vmem:[#allocation4 + $0xc8] sm:$0xff] 0.0
        %443 = vst [vmem:[#allocation4 + $0xd0] sm:$0xff] 0.0
        %444 = vst [vmem:[#allocation4 + $0xd8] sm:$0xff] 0.0
        %445 = vst [vmem:[#allocation4 + $0xe0] sm:$0xff] 0.0
        %446 = vst [vmem:[#allocation4 + $0xe8] sm:$0xff] 0.0
        %447 = vst [vmem:[#allocation4 + $0xf0] sm:$0xff] 0.0
        %448 = vst [vmem:[#allocation4 + $0xf8] sm:$0xff] 0.0
      $region36: #{multi_headed_attention.8} parent=31 // pred_fallthru
        _
      %v449 = vld [vmem:[%s304] sm:$0xff]
      %v450 = vld [vmem:[%s304 + $0x8] sm:$0xff]
      %v451 = vld [vmem:[%s304 + $0x10] sm:$0xff]
      %v452 = vld [vmem:[%s304 + $0x18] sm:$0xff]
      %v453 = vld [vmem:[%s304 + $0x20] sm:$0xff]
      %v454 = vld [vmem:[%s304 + $0x28] sm:$0xff]
      %v455 = vld [vmem:[%s304 + $0x30] sm:$0xff]
      %v456 = vld [vmem:[%s304 + $0x38] sm:$0xff]
      %v457 = vld [vmem:[%s304 + $0x40] sm:$0xff]
      %v458 = vld [vmem:[%s304 + $0x48] sm:$0xff]
      %v459 = vld [vmem:[%s304 + $0x50] sm:$0xff]
      %v460 = vld [vmem:[%s304 + $0x58] sm:$0xff]
      %v461 = vld [vmem:[%s304 + $0x60] sm:$0xff]
      %v462 = vld [vmem:[%s304 + $0x68] sm:$0xff]
      %v463 = vld [vmem:[%s304 + $0x70] sm:$0xff]
      %v464 = vld [vmem:[%s304 + $0x78] sm:$0xff]
      %v465 = vld [vmem:[%s304 + $0x80] sm:$0xff]
      %v466 = vld [vmem:[%s304 + $0x88] sm:$0xff]
      %v467 = vld [vmem:[%s304 + $0x90] sm:$0xff]
      %v468 = vld [vmem:[%s304 + $0x98] sm:$0xff]
      %v469 = vld [vmem:[%s304 + $0xa0] sm:$0xff]
      %v470 = vld [vmem:[%s304 + $0xa8] sm:$0xff]
      %v471 = vld [vmem:[%s304 + $0xb0] sm:$0xff]
      %v472 = vld [vmem:[%s304 + $0xb8] sm:$0xff]
      %v473 = vld [vmem:[%s304 + $0xc0] sm:$0xff]
      %v474 = vld [vmem:[%s304 + $0xc8] sm:$0xff]
      %v475 = vld [vmem:[%s304 + $0xd0] sm:$0xff]
      %v476 = vld [vmem:[%s304 + $0xd8] sm:$0xff]
      %v477 = vld [vmem:[%s304 + $0xe0] sm:$0xff]
      %v478 = vld [vmem:[%s304 + $0xe8] sm:$0xff]
      %v479 = vld [vmem:[%s304 + $0xf0] sm:$0xff]
      %v480 = vld [vmem:[%s304 + $0xf8] sm:$0xff]
      %v481 = vmul.f32 %v449, 0.088388346
      %v482 = vmul.f32 %v450, 0.088388346
      %v483 = vmul.f32 %v451, 0.088388346
      %v484 = vmul.f32 %v452, 0.088388346
      %v485 = vmul.f32 %v453, 0.088388346
      %v486 = vmul.f32 %v454, 0.088388346
      %v487 = vmul.f32 %v455, 0.088388346
      %v488 = vmul.f32 %v456, 0.088388346
      %v489 = vmul.f32 %v457, 0.088388346
      %v490 = vmul.f32 %v458, 0.088388346
      %v491 = vmul.f32 %v459, 0.088388346
      %v492 = vmul.f32 %v460, 0.088388346
      %v493 = vmul.f32 %v461, 0.088388346
      %v494 = vmul.f32 %v462, 0.088388346
      %v495 = vmul.f32 %v463, 0.088388346
      %v496 = vmul.f32 %v464, 0.088388346
      %v497 = vmul.f32 %v465, 0.088388346
      %v498 = vmul.f32 %v466, 0.088388346
      %v499 = vmul.f32 %v467, 0.088388346
      %v500 = vmul.f32 %v468, 0.088388346
      %v501 = vmul.f32 %v469, 0.088388346
      %v502 = vmul.f32 %v470, 0.088388346
      %v503 = vmul.f32 %v471, 0.088388346
      %v504 = vmul.f32 %v472, 0.088388346
      %v505 = vmul.f32 %v473, 0.088388346
      %v506 = vmul.f32 %v474, 0.088388346
      %v507 = vmul.f32 %v475, 0.088388346
      %v508 = vmul.f32 %v476, 0.088388346
      %v509 = vmul.f32 %v477, 0.088388346
      %v510 = vmul.f32 %v478, 0.088388346
      %v511 = vmul.f32 %v479, 0.088388346
      %v512 = vmul.f32 %v480, 0.088388346
      %v513 = vld [vmem:[%s318] sm:$0xff]
      %v514 = vld [vmem:[%s318 + $0x8] sm:$0xff]
      %v515 = vld [vmem:[%s318 + $0x10] sm:$0xff]
      %v516 = vld [vmem:[%s318 + $0x18] sm:$0xff]
      %v517 = vld [vmem:[%s318 + $0x20] sm:$0xff]
      %v518 = vld [vmem:[%s318 + $0x28] sm:$0xff]
      %v519 = vld [vmem:[%s318 + $0x30] sm:$0xff]
      %v520 = vld [vmem:[%s318 + $0x38] sm:$0xff]
      %v521 = vld [vmem:[%s318 + $0x40] sm:$0xff]
      %v522 = vld [vmem:[%s318 + $0x48] sm:$0xff]
      %v523 = vld [vmem:[%s318 + $0x50] sm:$0xff]
      %v524 = vld [vmem:[%s318 + $0x58] sm:$0xff]
      %v525 = vld [vmem:[%s318 + $0x60] sm:$0xff]
      %v526 = vld [vmem:[%s318 + $0x68] sm:$0xff]
      %v527 = vld [vmem:[%s318 + $0x70] sm:$0xff]
      %v528 = vld [vmem:[%s318 + $0x78] sm:$0xff]
      %v529 = vld [vmem:[%s318 + $0x80] sm:$0xff]
      %v530 = vld [vmem:[%s318 + $0x88] sm:$0xff]
      %v531 = vld [vmem:[%s318 + $0x90] sm:$0xff]
      %v532 = vld [vmem:[%s318 + $0x98] sm:$0xff]
      %v533 = vld [vmem:[%s318 + $0xa0] sm:$0xff]
      %v534 = vld [vmem:[%s318 + $0xa8] sm:$0xff]
      %v535 = vld [vmem:[%s318 + $0xb0] sm:$0xff]
      %v536 = vld [vmem:[%s318 + $0xb8] sm:$0xff]
      %v537 = vld [vmem:[%s318 + $0xc0] sm:$0xff]
      %v538 = vld [vmem:[%s318 + $0xc8] sm:$0xff]
      %v539 = vld [vmem:[%s318 + $0xd0] sm:$0xff]
      %v540 = vld [vmem:[%s318 + $0xd8] sm:$0xff]
      %v541 = vld [vmem:[%s318 + $0xe0] sm:$0xff]
      %v542 = vld [vmem:[%s318 + $0xe8] sm:$0xff]
      %v543 = vld [vmem:[%s318 + $0xf0] sm:$0xff]
      %v544 = vld [vmem:[%s318 + $0xf8] sm:$0xff]
      %v545 = vld [vmem:[%s332] sm:$0xff]
      %v546 = vld [vmem:[%s332 + $0x8] sm:$0xff]
      %v547 = vld [vmem:[%s332 + $0x10] sm:$0xff]
      %v548 = vld [vmem:[%s332 + $0x18] sm:$0xff]
      %v549 = vld [vmem:[%s332 + $0x20] sm:$0xff]
      %v550 = vld [vmem:[%s332 + $0x28] sm:$0xff]
      %v551 = vld [vmem:[%s332 + $0x30] sm:$0xff]
      %v552 = vld [vmem:[%s332 + $0x38] sm:$0xff]
      %v553 = vld [vmem:[%s332 + $0x40] sm:$0xff]
      %v554 = vld [vmem:[%s332 + $0x48] sm:$0xff]
      %v555 = vld [vmem:[%s332 + $0x50] sm:$0xff]
      %v556 = vld [vmem:[%s332 + $0x58] sm:$0xff]
      %v557 = vld [vmem:[%s332 + $0x60] sm:$0xff]
      %v558 = vld [vmem:[%s332 + $0x68] sm:$0xff]
      %v559 = vld [vmem:[%s332 + $0x70] sm:$0xff]
      %v560 = vld [vmem:[%s332 + $0x78] sm:$0xff]
      %v561 = vld [vmem:[%s332 + $0x80] sm:$0xff]
      %v562 = vld [vmem:[%s332 + $0x88] sm:$0xff]
      %v563 = vld [vmem:[%s332 + $0x90] sm:$0xff]
      %v564 = vld [vmem:[%s332 + $0x98] sm:$0xff]
      %v565 = vld [vmem:[%s332 + $0xa0] sm:$0xff]
      %v566 = vld [vmem:[%s332 + $0xa8] sm:$0xff]
      %v567 = vld [vmem:[%s332 + $0xb0] sm:$0xff]
      %v568 = vld [vmem:[%s332 + $0xb8] sm:$0xff]
      %v569 = vld [vmem:[%s332 + $0xc0] sm:$0xff]
      %v570 = vld [vmem:[%s332 + $0xc8] sm:$0xff]
      %v571 = vld [vmem:[%s332 + $0xd0] sm:$0xff]
      %v572 = vld [vmem:[%s332 + $0xd8] sm:$0xff]
      %v573 = vld [vmem:[%s332 + $0xe0] sm:$0xff]
      %v574 = vld [vmem:[%s332 + $0xe8] sm:$0xff]
      %v575 = vld [vmem:[%s332 + $0xf0] sm:$0xff]
      %v576 = vld [vmem:[%s332 + $0xf8] sm:$0xff]
      %577 = vmatprep.subr.mxu0 0.0
      %578 = vmatpush1.xpose.msra.mxu0 %v528
      %579 = vmatprep.subr.mxu0 0.0
      %580 = vmatpush1.xpose.msra.mxu0 %v527
      %581 = vmatprep.subr.mxu0 0.0
      %582 = vmatpush1.xpose.msra.mxu0 %v526
      %583 = vmatprep.subr.mxu0 0.0
      %584 = vmatpush1.xpose.msra.mxu0 %v525
      %585 = vmatprep.subr.mxu0 0.0
      %586 = vmatpush1.xpose.msra.mxu0 %v524
      %587 = vmatprep.subr.mxu0 0.0
      %588 = vmatpush1.xpose.msra.mxu0 %v523
      %589 = vmatprep.subr.mxu0 0.0
      %590 = vmatpush1.xpose.msra.mxu0 %v522
      %591 = vmatprep.subr.mxu0 0.0
      %592 = vmatpush1.xpose.msra.mxu0 %v521
      %593 = vmatprep.subr.mxu0 0.0
      %594 = vmatpush1.xpose.msra.mxu0 %v520
      %595 = vmatprep.subr.mxu0 0.0
      %596 = vmatpush1.xpose.msra.mxu0 %v519
      %597 = vmatprep.subr.mxu0 0.0
      %598 = vmatpush1.xpose.msra.mxu0 %v518
      %599 = vmatprep.subr.mxu0 0.0
      %600 = vmatpush1.xpose.msra.mxu0 %v517
      %601 = vmatprep.subr.mxu0 0.0
      %602 = vmatpush1.xpose.msra.mxu0 %v516
      %603 = vmatprep.subr.mxu0 0.0
      %604 = vmatpush1.xpose.msra.mxu0 %v515
      %605 = vmatprep.subr.mxu0 0.0
      %606 = vmatpush1.xpose.msra.mxu0 %v514
      %607 = vmatprep.subr.mxu0 0.0
      %608 = vmatpush1.xpose.msra.mxu0 %v513
      %609 = vmatprep.subr.mxu0 0.0
      %610 = vmatpush2.xpose.msra.mxu0 %v544
      %611 = vmatprep.subr.mxu0 0.0
      %612 = vmatpush2.xpose.msra.mxu0 %v543
      %613 = vmatprep.subr.mxu0 0.0
      %614 = vmatpush2.xpose.msra.mxu0 %v542
      %615 = vmatprep.subr.mxu0 0.0
      %616 = vmatpush2.xpose.msra.mxu0 %v541
      %617 = vmatprep.subr.mxu0 0.0
      %618 = vmatpush2.xpose.msra.mxu0 %v540
      %619 = vmatprep.subr.mxu0 0.0
      %620 = vmatpush2.xpose.msra.mxu0 %v539
      %621 = vmatprep.subr.mxu0 0.0
      %622 = vmatpush2.xpose.msra.mxu0 %v538
      %623 = vmatprep.subr.mxu0 0.0
      %624 = vmatpush2.xpose.msra.mxu0 %v537
      %625 = vmatprep.subr.mxu0 0.0
      %626 = vmatpush2.xpose.msra.mxu0 %v536
      %627 = vmatprep.subr.mxu0 0.0
      %628 = vmatpush2.xpose.msra.mxu0 %v535
      %629 = vmatprep.subr.mxu0 0.0
      %630 = vmatpush2.xpose.msra.mxu0 %v534
      %631 = vmatprep.subr.mxu0 0.0
      %632 = vmatpush2.xpose.msra.mxu0 %v533
      %633 = vmatprep.subr.mxu0 0.0
      %634 = vmatpush2.xpose.msra.mxu0 %v532
      %635 = vmatprep.subr.mxu0 0.0
      %636 = vmatpush2.xpose.msra.mxu0 %v531
      %637 = vmatprep.subr.mxu0 0.0
      %638 = vmatpush2.xpose.msra.mxu0 %v530
      %639 = vmatprep.subr.mxu0 0.0
      %640 = vmatpush2.xpose.msra.mxu0 %v529
      %641 = vmatprep.mubr.f32.mxu0 0.0
      %642 = vmatmul.mubr.f32.gmra.mxu0 %v481
      %v643 = vpop.f32.mrf.mxu0
      %v644 = vadd.f32 0.0, %v643
      %v645 = vpop.f32.mrf.mxu0
      %v646 = vadd.f32 0.0, %v645
      %647 = vmatprep.mubr.f32.mxu0 0.0
      %648 = vmatmul.mubr.f32.gmra.mxu0 %v482
      %v649 = vpop.f32.mrf.mxu0
      %v650 = vadd.f32 0.0, %v649
      %v651 = vpop.f32.mrf.mxu0
      %v652 = vadd.f32 0.0, %v651
      %653 = vmatprep.mubr.f32.mxu0 0.0
      %654 = vmatmul.mubr.f32.gmra.mxu0 %v483
      %v655 = vpop.f32.mrf.mxu0
      %v656 = vadd.f32 0.0, %v655
      %v657 = vpop.f32.mrf.mxu0
      %v658 = vadd.f32 0.0, %v657
      %659 = vmatprep.mubr.f32.mxu0 0.0
      %660 = vmatmul.mubr.f32.gmra.mxu0 %v484
      %v661 = vpop.f32.mrf.mxu0
      %v662 = vadd.f32 0.0, %v661
      %v663 = vpop.f32.mrf.mxu0
      %v664 = vadd.f32 0.0, %v663
      %665 = vmatprep.mubr.f32.mxu0 0.0
      %666 = vmatmul.mubr.f32.gmra.mxu0 %v485
      %v667 = vpop.f32.mrf.mxu0
      %v668 = vadd.f32 0.0, %v667
      %v669 = vpop.f32.mrf.mxu0
      %v670 = vadd.f32 0.0, %v669
      %671 = vmatprep.mubr.f32.mxu0 0.0
      %672 = vmatmul.mubr.f32.gmra.mxu0 %v486
      %v673 = vpop.f32.mrf.mxu0
      %v674 = vadd.f32 0.0, %v673
      %v675 = vpop.f32.mrf.mxu0
      %v676 = vadd.f32 0.0, %v675
      %677 = vmatprep.mubr.f32.mxu0 0.0
      %678 = vmatmul.mubr.f32.gmra.mxu0 %v487
      %v679 = vpop.f32.mrf.mxu0
      %v680 = vadd.f32 0.0, %v679
      %v681 = vpop.f32.mrf.mxu0
      %v682 = vadd.f32 0.0, %v681
      %683 = vmatprep.mubr.f32.mxu0 0.0
      %684 = vmatmul.mubr.f32.gmra.mxu0 %v488
      %v685 = vpop.f32.mrf.mxu0
      %v686 = vadd.f32 0.0, %v685
      %v687 = vpop.f32.mrf.mxu0
      %v688 = vadd.f32 0.0, %v687
      %689 = vmatprep.mubr.f32.mxu0 0.0
      %690 = vmatmul.mubr.f32.gmra.mxu0 %v489
      %v691 = vpop.f32.mrf.mxu0
      %v692 = vadd.f32 0.0, %v691
      %v693 = vpop.f32.mrf.mxu0
      %v694 = vadd.f32 0.0, %v693
      %695 = vmatprep.mubr.f32.mxu0 0.0
      %696 = vmatmul.mubr.f32.gmra.mxu0 %v490
      %v697 = vpop.f32.mrf.mxu0
      %v698 = vadd.f32 0.0, %v697
      %v699 = vpop.f32.mrf.mxu0
      %v700 = vadd.f32 0.0, %v699
      %701 = vmatprep.mubr.f32.mxu0 0.0
      %702 = vmatmul.mubr.f32.gmra.mxu0 %v491
      %v703 = vpop.f32.mrf.mxu0
      %v704 = vadd.f32 0.0, %v703
      %v705 = vpop.f32.mrf.mxu0
      %v706 = vadd.f32 0.0, %v705
      %707 = vmatprep.mubr.f32.mxu0 0.0
      %708 = vmatmul.mubr.f32.gmra.mxu0 %v492
      %v709 = vpop.f32.mrf.mxu0
      %v710 = vadd.f32 0.0, %v709
      %v711 = vpop.f32.mrf.mxu0
      %v712 = vadd.f32 0.0, %v711
      %713 = vmatprep.mubr.f32.mxu0 0.0
      %714 = vmatmul.mubr.f32.gmra.mxu0 %v493
      %v715 = vpop.f32.mrf.mxu0
      %v716 = vadd.f32 0.0, %v715
      %v717 = vpop.f32.mrf.mxu0
      %v718 = vadd.f32 0.0, %v717
      %719 = vmatprep.mubr.f32.mxu0 0.0
      %720 = vmatmul.mubr.f32.gmra.mxu0 %v494
      %v721 = vpop.f32.mrf.mxu0
      %v722 = vadd.f32 0.0, %v721
      %v723 = vpop.f32.mrf.mxu0
      %v724 = vadd.f32 0.0, %v723
      %725 = vmatprep.mubr.f32.mxu0 0.0
      %726 = vmatmul.mubr.f32.gmra.mxu0 %v495
      %v727 = vpop.f32.mrf.mxu0
      %v728 = vadd.f32 0.0, %v727
      %v729 = vpop.f32.mrf.mxu0
      %v730 = vadd.f32 0.0, %v729
      %731 = vmatprep.mubr.f32.mxu0 0.0
      %732 = vmatmul.mubr.f32.gmra.mxu0 %v496
      %v733 = vpop.f32.mrf.mxu0
      %v734 = vadd.f32 0.0, %v733
      %v735 = vpop.f32.mrf.mxu0
      %v736 = vadd.f32 0.0, %v735
      %737 = vmatprep.mubr.f32.mxu0 0.0
      %738 = vmatmul.mubr.f32.gmra.mxu0 %v497
      %v739 = vpop.f32.mrf.mxu0
      %v740 = vadd.f32 0.0, %v739
      %v741 = vpop.f32.mrf.mxu0
      %v742 = vadd.f32 0.0, %v741
      %743 = vmatprep.mubr.f32.mxu0 0.0
      %744 = vmatmul.mubr.f32.gmra.mxu0 %v498
      %v745 = vpop.f32.mrf.mxu0
      %v746 = vadd.f32 0.0, %v745
      %v747 = vpop.f32.mrf.mxu0
      %v748 = vadd.f32 0.0, %v747
      %749 = vmatprep.mubr.f32.mxu0 0.0
      %750 = vmatmul.mubr.f32.gmra.mxu0 %v499
      %v751 = vpop.f32.mrf.mxu0
      %v752 = vadd.f32 0.0, %v751
      %v753 = vpop.f32.mrf.mxu0
      %v754 = vadd.f32 0.0, %v753
      %755 = vmatprep.mubr.f32.mxu0 0.0
      %756 = vmatmul.mubr.f32.gmra.mxu0 %v500
      %v757 = vpop.f32.mrf.mxu0
      %v758 = vadd.f32 0.0, %v757
      %v759 = vpop.f32.mrf.mxu0
      %v760 = vadd.f32 0.0, %v759
      %761 = vmatprep.mubr.f32.mxu0 0.0
      %762 = vmatmul.mubr.f32.gmra.mxu0 %v501
      %v763 = vpop.f32.mrf.mxu0
      %v764 = vadd.f32 0.0, %v763
      %v765 = vpop.f32.mrf.mxu0
      %v766 = vadd.f32 0.0, %v765
      %767 = vmatprep.mubr.f32.mxu0 0.0
      %768 = vmatmul.mubr.f32.gmra.mxu0 %v502
      %v769 = vpop.f32.mrf.mxu0
      %v770 = vadd.f32 0.0, %v769
      %v771 = vpop.f32.mrf.mxu0
      %v772 = vadd.f32 0.0, %v771
      %773 = vmatprep.mubr.f32.mxu0 0.0
      %774 = vmatmul.mubr.f32.gmra.mxu0 %v503
      %v775 = vpop.f32.mrf.mxu0
      %v776 = vadd.f32 0.0, %v775
      %v777 = vpop.f32.mrf.mxu0
      %v778 = vadd.f32 0.0, %v777
      %779 = vmatprep.mubr.f32.mxu0 0.0
      %780 = vmatmul.mubr.f32.gmra.mxu0 %v504
      %v781 = vpop.f32.mrf.mxu0
      %v782 = vadd.f32 0.0, %v781
      %v783 = vpop.f32.mrf.mxu0
      %v784 = vadd.f32 0.0, %v783
      %785 = vmatprep.mubr.f32.mxu0 0.0
      %786 = vmatmul.mubr.f32.gmra.mxu0 %v505
      %v787 = vpop.f32.mrf.mxu0
      %v788 = vadd.f32 0.0, %v787
      %v789 = vpop.f32.mrf.mxu0
      %v790 = vadd.f32 0.0, %v789
      %791 = vmatprep.mubr.f32.mxu0 0.0
      %792 = vmatmul.mubr.f32.gmra.mxu0 %v506
      %v793 = vpop.f32.mrf.mxu0
      %v794 = vadd.f32 0.0, %v793
      %v795 = vpop.f32.mrf.mxu0
      %v796 = vadd.f32 0.0, %v795
      %797 = vmatprep.mubr.f32.mxu0 0.0
      %798 = vmatmul.mubr.f32.gmra.mxu0 %v507
      %v799 = vpop.f32.mrf.mxu0
      %v800 = vadd.f32 0.0, %v799
      %v801 = vpop.f32.mrf.mxu0
      %v802 = vadd.f32 0.0, %v801
      %803 = vmatprep.mubr.f32.mxu0 0.0
      %804 = vmatmul.mubr.f32.gmra.mxu0 %v508
      %v805 = vpop.f32.mrf.mxu0
      %v806 = vadd.f32 0.0, %v805
      %v807 = vpop.f32.mrf.mxu0
      %v808 = vadd.f32 0.0, %v807
      %809 = vmatprep.mubr.f32.mxu0 0.0
      %810 = vmatmul.mubr.f32.gmra.mxu0 %v509
      %v811 = vpop.f32.mrf.mxu0
      %v812 = vadd.f32 0.0, %v811
      %v813 = vpop.f32.mrf.mxu0
      %v814 = vadd.f32 0.0, %v813
      %815 = vmatprep.mubr.f32.mxu0 0.0
      %816 = vmatmul.mubr.f32.gmra.mxu0 %v510
      %v817 = vpop.f32.mrf.mxu0
      %v818 = vadd.f32 0.0, %v817
      %v819 = vpop.f32.mrf.mxu0
      %v820 = vadd.f32 0.0, %v819
      %821 = vmatprep.mubr.f32.mxu0 0.0
      %822 = vmatmul.mubr.f32.gmra.mxu0 %v511
      %v823 = vpop.f32.mrf.mxu0
      %v824 = vadd.f32 0.0, %v823
      %v825 = vpop.f32.mrf.mxu0
      %v826 = vadd.f32 0.0, %v825
      %827 = vmatprep.mubr.f32.mxu0 0.0
      %828 = vmatmul.mubr.f32.gmra.mxu0 %v512
      %v829 = vpop.f32.mrf.mxu0
      %v830 = vadd.f32 0.0, %v829
      %v831 = vpop.f32.mrf.mxu0
      %v832 = vadd.f32 0.0, %v831
      %833 = vdwg.mxu0
      %v834 = vld [vmem:[#allocation2] sm:$0xff]
      %v835 = vld [vmem:[#allocation2 + $0x8] sm:$0xff]
      %v836 = vld [vmem:[#allocation2 + $0x10] sm:$0xff]
      %v837 = vld [vmem:[#allocation2 + $0x18] sm:$0xff]
      %v838 = vld [vmem:[#allocation2 + $0x20] sm:$0xff]
      %v839 = vld [vmem:[#allocation2 + $0x28] sm:$0xff]
      %v840 = vld [vmem:[#allocation2 + $0x30] sm:$0xff]
      %v841 = vld [vmem:[#allocation2 + $0x38] sm:$0xff]
      %v842 = vld [vmem:[#allocation2 + $0x40] sm:$0xff]
      %v843 = vld [vmem:[#allocation2 + $0x48] sm:$0xff]
      %v844 = vld [vmem:[#allocation2 + $0x50] sm:$0xff]
      %v845 = vld [vmem:[#allocation2 + $0x58] sm:$0xff]
      %v846 = vld [vmem:[#allocation2 + $0x60] sm:$0xff]
      %v847 = vld [vmem:[#allocation2 + $0x68] sm:$0xff]
      %v848 = vld [vmem:[#allocation2 + $0x70] sm:$0xff]
      %v849 = vld [vmem:[#allocation2 + $0x78] sm:$0xff]
      %v850 = vld [vmem:[#allocation2 + $0x80] sm:$0xff]
      %v851 = vld [vmem:[#allocation2 + $0x88] sm:$0xff]
      %v852 = vld [vmem:[#allocation2 + $0x90] sm:$0xff]
      %v853 = vld [vmem:[#allocation2 + $0x98] sm:$0xff]
      %v854 = vld [vmem:[#allocation2 + $0xa0] sm:$0xff]
      %v855 = vld [vmem:[#allocation2 + $0xa8] sm:$0xff]
      %v856 = vld [vmem:[#allocation2 + $0xb0] sm:$0xff]
      %v857 = vld [vmem:[#allocation2 + $0xb8] sm:$0xff]
      %v858 = vld [vmem:[#allocation2 + $0xc0] sm:$0xff]
      %v859 = vld [vmem:[#allocation2 + $0xc8] sm:$0xff]
      %v860 = vld [vmem:[#allocation2 + $0xd0] sm:$0xff]
      %v861 = vld [vmem:[#allocation2 + $0xd8] sm:$0xff]
      %v862 = vld [vmem:[#allocation2 + $0xe0] sm:$0xff]
      %v863 = vld [vmem:[#allocation2 + $0xe8] sm:$0xff]
      %v864 = vld [vmem:[#allocation2 + $0xf0] sm:$0xff]
      %v865 = vld [vmem:[#allocation2 + $0xf8] sm:$0xff]
      %v866 = vmax.f32 %v644, %v646
      %867 = vmax.xlane.f32.xlu0 %v866
      %v868 = vpop.xlane.xlu0 %867
      %v869 = vmax.f32 %v650, %v652
      %870 = vmax.xlane.f32.xlu0 %v869
      %v871 = vpop.xlane.xlu0 %870
      %v872 = vmax.f32 %v656, %v658
      %873 = vmax.xlane.f32.xlu0 %v872
      %v874 = vpop.xlane.xlu0 %873
      %v875 = vmax.f32 %v662, %v664
      %876 = vmax.xlane.f32.xlu0 %v875
      %v877 = vpop.xlane.xlu0 %876
      %v878 = vmax.f32 %v668, %v670
      %879 = vmax.xlane.f32.xlu0 %v878
      %v880 = vpop.xlane.xlu0 %879
      %v881 = vmax.f32 %v674, %v676
      %882 = vmax.xlane.f32.xlu0 %v881
      %v883 = vpop.xlane.xlu0 %882
      %v884 = vmax.f32 %v680, %v682
      %885 = vmax.xlane.f32.xlu0 %v884
      %v886 = vpop.xlane.xlu0 %885
      %v887 = vmax.f32 %v686, %v688
      %888 = vmax.xlane.f32.xlu0 %v887
      %v889 = vpop.xlane.xlu0 %888
      %v890 = vmax.f32 %v692, %v694
      %891 = vmax.xlane.f32.xlu0 %v890
      %v892 = vpop.xlane.xlu0 %891
      %v893 = vmax.f32 %v698, %v700
      %894 = vmax.xlane.f32.xlu0 %v893
      %v895 = vpop.xlane.xlu0 %894
      %v896 = vmax.f32 %v704, %v706
      %897 = vmax.xlane.f32.xlu0 %v896
      %v898 = vpop.xlane.xlu0 %897
      %v899 = vmax.f32 %v710, %v712
      %900 = vmax.xlane.f32.xlu0 %v899
      %v901 = vpop.xlane.xlu0 %900
      %v902 = vmax.f32 %v716, %v718
      %903 = vmax.xlane.f32.xlu0 %v902
      %v904 = vpop.xlane.xlu0 %903
      %v905 = vmax.f32 %v722, %v724
      %906 = vmax.xlane.f32.xlu0 %v905
      %v907 = vpop.xlane.xlu0 %906
      %v908 = vmax.f32 %v728, %v730
      %909 = vmax.xlane.f32.xlu0 %v908
      %v910 = vpop.xlane.xlu0 %909
      %v911 = vmax.f32 %v734, %v736
      %912 = vmax.xlane.f32.xlu0 %v911
      %v913 = vpop.xlane.xlu0 %912
      %v914 = vmax.f32 %v740, %v742
      %915 = vmax.xlane.f32.xlu0 %v914
      %v916 = vpop.xlane.xlu0 %915
      %v917 = vmax.f32 %v746, %v748
      %918 = vmax.xlane.f32.xlu0 %v917
      %v919 = vpop.xlane.xlu0 %918
      %v920 = vmax.f32 %v752, %v754
      %921 = vmax.xlane.f32.xlu0 %v920
      %v922 = vpop.xlane.xlu0 %921
      %v923 = vmax.f32 %v758, %v760
      %924 = vmax.xlane.f32.xlu0 %v923
      %v925 = vpop.xlane.xlu0 %924
      %v926 = vmax.f32 %v764, %v766
      %927 = vmax.xlane.f32.xlu0 %v926
      %v928 = vpop.xlane.xlu0 %927
      %v929 = vmax.f32 %v770, %v772
      %930 = vmax.xlane.f32.xlu0 %v929
      %v931 = vpop.xlane.xlu0 %930
      %v932 = vmax.f32 %v776, %v778
      %933 = vmax.xlane.f32.xlu0 %v932
      %v934 = vpop.xlane.xlu0 %933
      %v935 = vmax.f32 %v782, %v784
      %936 = vmax.xlane.f32.xlu0 %v935
      %v937 = vpop.xlane.xlu0 %936
      %v938 = vmax.f32 %v788, %v790
      %939 = vmax.xlane.f32.xlu0 %v938
      %v940 = vpop.xlane.xlu0 %939
      %v941 = vmax.f32 %v794, %v796
      %942 = vmax.xlane.f32.xlu0 %v941
      %v943 = vpop.xlane.xlu0 %942
      %v944 = vmax.f32 %v800, %v802
      %945 = vmax.xlane.f32.xlu0 %v944
      %v946 = vpop.xlane.xlu0 %945
      %v947 = vmax.f32 %v806, %v808
      %948 = vmax.xlane.f32.xlu0 %v947
      %v949 = vpop.xlane.xlu0 %948
      %v950 = vmax.f32 %v812, %v814
      %951 = vmax.xlane.f32.xlu0 %v950
      %v952 = vpop.xlane.xlu0 %951
      %v953 = vmax.f32 %v818, %v820
      %954 = vmax.xlane.f32.xlu0 %v953
      %v955 = vpop.xlane.xlu0 %954
      %v956 = vmax.f32 %v824, %v826
      %957 = vmax.xlane.f32.xlu0 %v956
      %v958 = vpop.xlane.xlu0 %957
      %v959 = vmax.f32 %v830, %v832
      %960 = vmax.xlane.f32.xlu0 %v959
      %v961 = vpop.xlane.xlu0 %960
      %v962 = vmax.f32 %v834, %v868
      %v963 = vmax.f32 %v835, %v871
      %v964 = vmax.f32 %v836, %v874
      %v965 = vmax.f32 %v837, %v877
      %v966 = vmax.f32 %v838, %v880
      %v967 = vmax.f32 %v839, %v883
      %v968 = vmax.f32 %v840, %v886
      %v969 = vmax.f32 %v841, %v889
      %v970 = vmax.f32 %v842, %v892
      %v971 = vmax.f32 %v843, %v895
      %v972 = vmax.f32 %v844, %v898
      %v973 = vmax.f32 %v845, %v901
      %v974 = vmax.f32 %v846, %v904
      %v975 = vmax.f32 %v847, %v907
      %v976 = vmax.f32 %v848, %v910
      %v977 = vmax.f32 %v849, %v913
      %v978 = vmax.f32 %v850, %v916
      %v979 = vmax.f32 %v851, %v919
      %v980 = vmax.f32 %v852, %v922
      %v981 = vmax.f32 %v853, %v925
      %v982 = vmax.f32 %v854, %v928
      %v983 = vmax.f32 %v855, %v931
      %v984 = vmax.f32 %v856, %v934
      %v985 = vmax.f32 %v857, %v937
      %v986 = vmax.f32 %v858, %v940
      %v987 = vmax.f32 %v859, %v943
      %v988 = vmax.f32 %v860, %v946
      %v989 = vmax.f32 %v861, %v949
      %v990 = vmax.f32 %v862, %v952
      %v991 = vmax.f32 %v863, %v955
      %v992 = vmax.f32 %v864, %v958
      %v993 = vmax.f32 %v865, %v961
      %v994 = vsub.f32 %v834, %v962
      %v995 = vsub.f32 %v835, %v963
      %v996 = vsub.f32 %v836, %v964
      %v997 = vsub.f32 %v837, %v965
      %v998 = vsub.f32 %v838, %v966
      %v999 = vsub.f32 %v839, %v967
      %v1000 = vsub.f32 %v840, %v968
      %v1001 = vsub.f32 %v841, %v969
      %v1002 = vsub.f32 %v842, %v970
      %v1003 = vsub.f32 %v843, %v971
      %v1004 = vsub.f32 %v844, %v972
      %v1005 = vsub.f32 %v845, %v973
      %v1006 = vsub.f32 %v846, %v974
      %v1007 = vsub.f32 %v847, %v975
      %v1008 = vsub.f32 %v848, %v976
      %v1009 = vsub.f32 %v849, %v977
      %v1010 = vsub.f32 %v850, %v978
      %v1011 = vsub.f32 %v851, %v979
      %v1012 = vsub.f32 %v852, %v980
      %v1013 = vsub.f32 %v853, %v981
      %v1014 = vsub.f32 %v854, %v982
      %v1015 = vsub.f32 %v855, %v983
      %v1016 = vsub.f32 %v856, %v984
      %v1017 = vsub.f32 %v857, %v985
      %v1018 = vsub.f32 %v858, %v986
      %v1019 = vsub.f32 %v859, %v987
      %v1020 = vsub.f32 %v860, %v988
      %v1021 = vsub.f32 %v861, %v989
      %v1022 = vsub.f32 %v862, %v990
      %v1023 = vsub.f32 %v863, %v991
      %v1024 = vsub.f32 %v864, %v992
      %v1025 = vsub.f32 %v865, %v993
      %v1026 = vmul.f32 %v994, 1.442695
      %v1027 = vpow.pop %v1026
      %v1028 = vmul.f32 %v995, 1.442695
      %v1029 = vpow.pop %v1028
      %v1030 = vmul.f32 %v996, 1.442695
      %v1031 = vpow.pop %v1030
      %v1032 = vmul.f32 %v997, 1.442695
      %v1033 = vpow.pop %v1032
      %v1034 = vmul.f32 %v998, 1.442695
      %v1035 = vpow.pop %v1034
      %v1036 = vmul.f32 %v999, 1.442695
      %v1037 = vpow.pop %v1036
      %v1038 = vmul.f32 %v1000, 1.442695
      %v1039 = vpow.pop %v1038
      %v1040 = vmul.f32 %v1001, 1.442695
      %v1041 = vpow.pop %v1040
      %v1042 = vmul.f32 %v1002, 1.442695
      %v1043 = vpow.pop %v1042
      %v1044 = vmul.f32 %v1003, 1.442695
      %v1045 = vpow.pop %v1044
      %v1046 = vmul.f32 %v1004, 1.442695
      %v1047 = vpow.pop %v1046
      %v1048 = vmul.f32 %v1005, 1.442695
      %v1049 = vpow.pop %v1048
      %v1050 = vmul.f32 %v1006, 1.442695
      %v1051 = vpow.pop %v1050
      %v1052 = vmul.f32 %v1007, 1.442695
      %v1053 = vpow.pop %v1052
      %v1054 = vmul.f32 %v1008, 1.442695
      %v1055 = vpow.pop %v1054
      %v1056 = vmul.f32 %v1009, 1.442695
      %v1057 = vpow.pop %v1056
      %v1058 = vmul.f32 %v1010, 1.442695
      %v1059 = vpow.pop %v1058
      %v1060 = vmul.f32 %v1011, 1.442695
      %v1061 = vpow.pop %v1060
      %v1062 = vmul.f32 %v1012, 1.442695
      %v1063 = vpow.pop %v1062
      %v1064 = vmul.f32 %v1013, 1.442695
      %v1065 = vpow.pop %v1064
      %v1066 = vmul.f32 %v1014, 1.442695
      %v1067 = vpow.pop %v1066
      %v1068 = vmul.f32 %v1015, 1.442695
      %v1069 = vpow.pop %v1068
      %v1070 = vmul.f32 %v1016, 1.442695
      %v1071 = vpow.pop %v1070
      %v1072 = vmul.f32 %v1017, 1.442695
      %v1073 = vpow.pop %v1072
      %v1074 = vmul.f32 %v1018, 1.442695
      %v1075 = vpow.pop %v1074
      %v1076 = vmul.f32 %v1019, 1.442695
      %v1077 = vpow.pop %v1076
      %v1078 = vmul.f32 %v1020, 1.442695
      %v1079 = vpow.pop %v1078
      %v1080 = vmul.f32 %v1021, 1.442695
      %v1081 = vpow.pop %v1080
      %v1082 = vmul.f32 %v1022, 1.442695
      %v1083 = vpow.pop %v1082
      %v1084 = vmul.f32 %v1023, 1.442695
      %v1085 = vpow.pop %v1084
      %v1086 = vmul.f32 %v1024, 1.442695
      %v1087 = vpow.pop %v1086
      %v1088 = vmul.f32 %v1025, 1.442695
      %v1089 = vpow.pop %v1088
      %1091 = vset.pattern.permute.xlu0 0
      %1092 = vperm.xlu0 %1091, %v962
      %v1093 = vpop.permute.xlu0 %1092
      %1096 = vset.pattern.permute.xlu0 0
      %1097 = vperm.xlu0 %1096, %v963
      %v1098 = vpop.permute.xlu0 %1097
      %1101 = vset.pattern.permute.xlu0 0
      %1102 = vperm.xlu0 %1101, %v964
      %v1103 = vpop.permute.xlu0 %1102
      %1106 = vset.pattern.permute.xlu0 0
      %1107 = vperm.xlu0 %1106, %v965
      %v1108 = vpop.permute.xlu0 %1107
      %1111 = vset.pattern.permute.xlu0 0
      %1112 = vperm.xlu0 %1111, %v966
      %v1113 = vpop.permute.xlu0 %1112
      %1116 = vset.pattern.permute.xlu0 0
      %1117 = vperm.xlu0 %1116, %v967
      %v1118 = vpop.permute.xlu0 %1117
      %1121 = vset.pattern.permute.xlu0 0
      %1122 = vperm.xlu0 %1121, %v968
      %v1123 = vpop.permute.xlu0 %1122
      %1126 = vset.pattern.permute.xlu0 0
      %1127 = vperm.xlu0 %1126, %v969
      %v1128 = vpop.permute.xlu0 %1127
      %1131 = vset.pattern.permute.xlu0 0
      %1132 = vperm.xlu0 %1131, %v970
      %v1133 = vpop.permute.xlu0 %1132
      %1136 = vset.pattern.permute.xlu0 0
      %1137 = vperm.xlu0 %1136, %v971
      %v1138 = vpop.permute.xlu0 %1137
      %1141 = vset.pattern.permute.xlu0 0
      %1142 = vperm.xlu0 %1141, %v972
      %v1143 = vpop.permute.xlu0 %1142
      %1146 = vset.pattern.permute.xlu0 0
      %1147 = vperm.xlu0 %1146, %v973
      %v1148 = vpop.permute.xlu0 %1147
      %1151 = vset.pattern.permute.xlu0 0
      %1152 = vperm.xlu0 %1151, %v974
      %v1153 = vpop.permute.xlu0 %1152
      %1156 = vset.pattern.permute.xlu0 0
      %1157 = vperm.xlu0 %1156, %v975
      %v1158 = vpop.permute.xlu0 %1157
      %1161 = vset.pattern.permute.xlu0 0
      %1162 = vperm.xlu0 %1161, %v976
      %v1163 = vpop.permute.xlu0 %1162
      %1166 = vset.pattern.permute.xlu0 0
      %1167 = vperm.xlu0 %1166, %v977
      %v1168 = vpop.permute.xlu0 %1167
      %1171 = vset.pattern.permute.xlu0 0
      %1172 = vperm.xlu0 %1171, %v978
      %v1173 = vpop.permute.xlu0 %1172
      %1176 = vset.pattern.permute.xlu0 0
      %1177 = vperm.xlu0 %1176, %v979
      %v1178 = vpop.permute.xlu0 %1177
      %1181 = vset.pattern.permute.xlu0 0
      %1182 = vperm.xlu0 %1181, %v980
      %v1183 = vpop.permute.xlu0 %1182
      %1186 = vset.pattern.permute.xlu0 0
      %1187 = vperm.xlu0 %1186, %v981
      %v1188 = vpop.permute.xlu0 %1187
      %1191 = vset.pattern.permute.xlu0 0
      %1192 = vperm.xlu0 %1191, %v982
      %v1193 = vpop.permute.xlu0 %1192
      %1196 = vset.pattern.permute.xlu0 0
      %1197 = vperm.xlu0 %1196, %v983
      %v1198 = vpop.permute.xlu0 %1197
      %1201 = vset.pattern.permute.xlu0 0
      %1202 = vperm.xlu0 %1201, %v984
      %v1203 = vpop.permute.xlu0 %1202
      %1206 = vset.pattern.permute.xlu0 0
      %1207 = vperm.xlu0 %1206, %v985
      %v1208 = vpop.permute.xlu0 %1207
      %1211 = vset.pattern.permute.xlu0 0
      %1212 = vperm.xlu0 %1211, %v986
      %v1213 = vpop.permute.xlu0 %1212
      %1216 = vset.pattern.permute.xlu0 0
      %1217 = vperm.xlu0 %1216, %v987
      %v1218 = vpop.permute.xlu0 %1217
      %1221 = vset.pattern.permute.xlu0 0
      %1222 = vperm.xlu0 %1221, %v988
      %v1223 = vpop.permute.xlu0 %1222
      %1226 = vset.pattern.permute.xlu0 0
      %1227 = vperm.xlu0 %1226, %v989
      %v1228 = vpop.permute.xlu0 %1227
      %1231 = vset.pattern.permute.xlu0 0
      %1232 = vperm.xlu0 %1231, %v990
      %v1233 = vpop.permute.xlu0 %1232
      %1236 = vset.pattern.permute.xlu0 0
      %1237 = vperm.xlu0 %1236, %v991
      %v1238 = vpop.permute.xlu0 %1237
      %1241 = vset.pattern.permute.xlu0 0
      %1242 = vperm.xlu0 %1241, %v992
      %v1243 = vpop.permute.xlu0 %1242
      %1246 = vset.pattern.permute.xlu0 0
      %1247 = vperm.xlu0 %1246, %v993
      %v1248 = vpop.permute.xlu0 %1247
      %v1250 = vsub.f32 %v644, %v1093
      %v1251 = vsub.f32 %v646, %v1093
      %v1252 = vsub.f32 %v650, %v1098
      %v1253 = vsub.f32 %v652, %v1098
      %v1254 = vsub.f32 %v656, %v1103
      %v1255 = vsub.f32 %v658, %v1103
      %v1256 = vsub.f32 %v662, %v1108
      %v1257 = vsub.f32 %v664, %v1108
      %v1258 = vsub.f32 %v668, %v1113
      %v1259 = vsub.f32 %v670, %v1113
      %v1260 = vsub.f32 %v674, %v1118
      %v1261 = vsub.f32 %v676, %v1118
      %v1262 = vsub.f32 %v680, %v1123
      %v1263 = vsub.f32 %v682, %v1123
      %v1264 = vsub.f32 %v686, %v1128
      %v1265 = vsub.f32 %v688, %v1128
      %v1266 = vsub.f32 %v692, %v1133
      %v1267 = vsub.f32 %v694, %v1133
      %v1268 = vsub.f32 %v698, %v1138
      %v1269 = vsub.f32 %v700, %v1138
      %v1270 = vsub.f32 %v704, %v1143
      %v1271 = vsub.f32 %v706, %v1143
      %v1272 = vsub.f32 %v710, %v1148
      %v1273 = vsub.f32 %v712, %v1148
      %v1274 = vsub.f32 %v716, %v1153
      %v1275 = vsub.f32 %v718, %v1153
      %v1276 = vsub.f32 %v722, %v1158
      %v1277 = vsub.f32 %v724, %v1158
      %v1278 = vsub.f32 %v728, %v1163
      %v1279 = vsub.f32 %v730, %v1163
      %v1280 = vsub.f32 %v734, %v1168
      %v1281 = vsub.f32 %v736, %v1168
      %v1282 = vsub.f32 %v740, %v1173
      %v1283 = vsub.f32 %v742, %v1173
      %v1284 = vsub.f32 %v746, %v1178
      %v1285 = vsub.f32 %v748, %v1178
      %v1286 = vsub.f32 %v752, %v1183
      %v1287 = vsub.f32 %v754, %v1183
      %v1288 = vsub.f32 %v758, %v1188
      %v1289 = vsub.f32 %v760, %v1188
      %v1290 = vsub.f32 %v764, %v1193
      %v1291 = vsub.f32 %v766, %v1193
      %v1292 = vsub.f32 %v770, %v1198
      %v1293 = vsub.f32 %v772, %v1198
      %v1294 = vsub.f32 %v776, %v1203
      %v1295 = vsub.f32 %v778, %v1203
      %v1296 = vsub.f32 %v782, %v1208
      %v1297 = vsub.f32 %v784, %v1208
      %v1298 = vsub.f32 %v788, %v1213
      %v1299 = vsub.f32 %v790, %v1213
      %v1300 = vsub.f32 %v794, %v1218
      %v1301 = vsub.f32 %v796, %v1218
      %v1302 = vsub.f32 %v800, %v1223
      %v1303 = vsub.f32 %v802, %v1223
      %v1304 = vsub.f32 %v806, %v1228
      %v1305 = vsub.f32 %v808, %v1228
      %v1306 = vsub.f32 %v812, %v1233
      %v1307 = vsub.f32 %v814, %v1233
      %v1308 = vsub.f32 %v818, %v1238
      %v1309 = vsub.f32 %v820, %v1238
      %v1310 = vsub.f32 %v824, %v1243
      %v1311 = vsub.f32 %v826, %v1243
      %v1312 = vsub.f32 %v830, %v1248
      %v1313 = vsub.f32 %v832, %v1248
      %v1314 = vmul.f32 %v1250, 1.442695
      %v1315 = vpow.pop %v1314
      %v1316 = vmul.f32 %v1251, 1.442695
      %v1317 = vpow.pop %v1316
      %v1318 = vmul.f32 %v1252, 1.442695
      %v1319 = vpow.pop %v1318
      %v1320 = vmul.f32 %v1253, 1.442695
      %v1321 = vpow.pop %v1320
      %v1322 = vmul.f32 %v1254, 1.442695
      %v1323 = vpow.pop %v1322
      %v1324 = vmul.f32 %v1255, 1.442695
      %v1325 = vpow.pop %v1324
      %v1326 = vmul.f32 %v1256, 1.442695
      %v1327 = vpow.pop %v1326
      %v1328 = vmul.f32 %v1257, 1.442695
      %v1329 = vpow.pop %v1328
      %v1330 = vmul.f32 %v1258, 1.442695
      %v1331 = vpow.pop %v1330
      %v1332 = vmul.f32 %v1259, 1.442695
      %v1333 = vpow.pop %v1332
      %v1334 = vmul.f32 %v1260, 1.442695
      %v1335 = vpow.pop %v1334
      %v1336 = vmul.f32 %v1261, 1.442695
      %v1337 = vpow.pop %v1336
      %v1338 = vmul.f32 %v1262, 1.442695
      %v1339 = vpow.pop %v1338
      %v1340 = vmul.f32 %v1263, 1.442695
      %v1341 = vpow.pop %v1340
      %v1342 = vmul.f32 %v1264, 1.442695
      %v1343 = vpow.pop %v1342
      %v1344 = vmul.f32 %v1265, 1.442695
      %v1345 = vpow.pop %v1344
      %v1346 = vmul.f32 %v1266, 1.442695
      %v1347 = vpow.pop %v1346
      %v1348 = vmul.f32 %v1267, 1.442695
      %v1349 = vpow.pop %v1348
      %v1350 = vmul.f32 %v1268, 1.442695
      %v1351 = vpow.pop %v1350
      %v1352 = vmul.f32 %v1269, 1.442695
      %v1353 = vpow.pop %v1352
      %v1354 = vmul.f32 %v1270, 1.442695
      %v1355 = vpow.pop %v1354
      %v1356 = vmul.f32 %v1271, 1.442695
      %v1357 = vpow.pop %v1356
      %v1358 = vmul.f32 %v1272, 1.442695
      %v1359 = vpow.pop %v1358
      %v1360 = vmul.f32 %v1273, 1.442695
      %v1361 = vpow.pop %v1360
      %v1362 = vmul.f32 %v1274, 1.442695
      %v1363 = vpow.pop %v1362
      %v1364 = vmul.f32 %v1275, 1.442695
      %v1365 = vpow.pop %v1364
      %v1366 = vmul.f32 %v1276, 1.442695
      %v1367 = vpow.pop %v1366
      %v1368 = vmul.f32 %v1277, 1.442695
      %v1369 = vpow.pop %v1368
      %v1370 = vmul.f32 %v1278, 1.442695
      %v1371 = vpow.pop %v1370
      %v1372 = vmul.f32 %v1279, 1.442695
      %v1373 = vpow.pop %v1372
      %v1374 = vmul.f32 %v1280, 1.442695
      %v1375 = vpow.pop %v1374
      %v1376 = vmul.f32 %v1281, 1.442695
      %v1377 = vpow.pop %v1376
      %v1378 = vmul.f32 %v1282, 1.442695
      %v1379 = vpow.pop %v1378
      %v1380 = vmul.f32 %v1283, 1.442695
      %v1381 = vpow.pop %v1380
      %v1382 = vmul.f32 %v1284, 1.442695
      %v1383 = vpow.pop %v1382
      %v1384 = vmul.f32 %v1285, 1.442695
      %v1385 = vpow.pop %v1384
      %v1386 = vmul.f32 %v1286, 1.442695
      %v1387 = vpow.pop %v1386
      %v1388 = vmul.f32 %v1287, 1.442695
      %v1389 = vpow.pop %v1388
      %v1390 = vmul.f32 %v1288, 1.442695
      %v1391 = vpow.pop %v1390
      %v1392 = vmul.f32 %v1289, 1.442695
      %v1393 = vpow.pop %v1392
      %v1394 = vmul.f32 %v1290, 1.442695
      %v1395 = vpow.pop %v1394
      %v1396 = vmul.f32 %v1291, 1.442695
      %v1397 = vpow.pop %v1396
      %v1398 = vmul.f32 %v1292, 1.442695
      %v1399 = vpow.pop %v1398
      %v1400 = vmul.f32 %v1293, 1.442695
      %v1401 = vpow.pop %v1400
      %v1402 = vmul.f32 %v1294, 1.442695
      %v1403 = vpow.pop %v1402
      %v1404 = vmul.f32 %v1295, 1.442695
      %v1405 = vpow.pop %v1404
      %v1406 = vmul.f32 %v1296, 1.442695
      %v1407 = vpow.pop %v1406
      %v1408 = vmul.f32 %v1297, 1.442695
      %v1409 = vpow.pop %v1408
      %v1410 = vmul.f32 %v1298, 1.442695
      %v1411 = vpow.pop %v1410
      %v1412 = vmul.f32 %v1299, 1.442695
      %v1413 = vpow.pop %v1412
      %v1414 = vmul.f32 %v1300, 1.442695
      %v1415 = vpow.pop %v1414
      %v1416 = vmul.f32 %v1301, 1.442695
      %v1417 = vpow.pop %v1416
      %v1418 = vmul.f32 %v1302, 1.442695
      %v1419 = vpow.pop %v1418
      %v1420 = vmul.f32 %v1303, 1.442695
      %v1421 = vpow.pop %v1420
      %v1422 = vmul.f32 %v1304, 1.442695
      %v1423 = vpow.pop %v1422
      %v1424 = vmul.f32 %v1305, 1.442695
      %v1425 = vpow.pop %v1424
      %v1426 = vmul.f32 %v1306, 1.442695
      %v1427 = vpow.pop %v1426
      %v1428 = vmul.f32 %v1307, 1.442695
      %v1429 = vpow.pop %v1428
      %v1430 = vmul.f32 %v1308, 1.442695
      %v1431 = vpow.pop %v1430
      %v1432 = vmul.f32 %v1309, 1.442695
      %v1433 = vpow.pop %v1432
      %v1434 = vmul.f32 %v1310, 1.442695
      %v1435 = vpow.pop %v1434
      %v1436 = vmul.f32 %v1311, 1.442695
      %v1437 = vpow.pop %v1436
      %v1438 = vmul.f32 %v1312, 1.442695
      %v1439 = vpow.pop %v1438
      %v1440 = vmul.f32 %v1313, 1.442695
      %v1441 = vpow.pop %v1440
      %v1442 = vld [vmem:[#allocation3] sm:$0xff]
      %v1443 = vld [vmem:[#allocation3 + $0x8] sm:$0xff]
      %v1444 = vld [vmem:[#allocation3 + $0x10] sm:$0xff]
      %v1445 = vld [vmem:[#allocation3 + $0x18] sm:$0xff]
      %v1446 = vld [vmem:[#allocation3 + $0x20] sm:$0xff]
      %v1447 = vld [vmem:[#allocation3 + $0x28] sm:$0xff]
      %v1448 = vld [vmem:[#allocation3 + $0x30] sm:$0xff]
      %v1449 = vld [vmem:[#allocation3 + $0x38] sm:$0xff]
      %v1450 = vld [vmem:[#allocation3 + $0x40] sm:$0xff]
      %v1451 = vld [vmem:[#allocation3 + $0x48] sm:$0xff]
      %v1452 = vld [vmem:[#allocation3 + $0x50] sm:$0xff]
      %v1453 = vld [vmem:[#allocation3 + $0x58] sm:$0xff]
      %v1454 = vld [vmem:[#allocation3 + $0x60] sm:$0xff]
      %v1455 = vld [vmem:[#allocation3 + $0x68] sm:$0xff]
      %v1456 = vld [vmem:[#allocation3 + $0x70] sm:$0xff]
      %v1457 = vld [vmem:[#allocation3 + $0x78] sm:$0xff]
      %v1458 = vld [vmem:[#allocation3 + $0x80] sm:$0xff]
      %v1459 = vld [vmem:[#allocation3 + $0x88] sm:$0xff]
      %v1460 = vld [vmem:[#allocation3 + $0x90] sm:$0xff]
      %v1461 = vld [vmem:[#allocation3 + $0x98] sm:$0xff]
      %v1462 = vld [vmem:[#allocation3 + $0xa0] sm:$0xff]
      %v1463 = vld [vmem:[#allocation3 + $0xa8] sm:$0xff]
      %v1464 = vld [vmem:[#allocation3 + $0xb0] sm:$0xff]
      %v1465 = vld [vmem:[#allocation3 + $0xb8] sm:$0xff]
      %v1466 = vld [vmem:[#allocation3 + $0xc0] sm:$0xff]
      %v1467 = vld [vmem:[#allocation3 + $0xc8] sm:$0xff]
      %v1468 = vld [vmem:[#allocation3 + $0xd0] sm:$0xff]
      %v1469 = vld [vmem:[#allocation3 + $0xd8] sm:$0xff]
      %v1470 = vld [vmem:[#allocation3 + $0xe0] sm:$0xff]
      %v1471 = vld [vmem:[#allocation3 + $0xe8] sm:$0xff]
      %v1472 = vld [vmem:[#allocation3 + $0xf0] sm:$0xff]
      %v1473 = vld [vmem:[#allocation3 + $0xf8] sm:$0xff]
      %v1474 = vmul.f32 %v1027, %v1442
      %v1475 = vmul.f32 %v1029, %v1443
      %v1476 = vmul.f32 %v1031, %v1444
      %v1477 = vmul.f32 %v1033, %v1445
      %v1478 = vmul.f32 %v1035, %v1446
      %v1479 = vmul.f32 %v1037, %v1447
      %v1480 = vmul.f32 %v1039, %v1448
      %v1481 = vmul.f32 %v1041, %v1449
      %v1482 = vmul.f32 %v1043, %v1450
      %v1483 = vmul.f32 %v1045, %v1451
      %v1484 = vmul.f32 %v1047, %v1452
      %v1485 = vmul.f32 %v1049, %v1453
      %v1486 = vmul.f32 %v1051, %v1454
      %v1487 = vmul.f32 %v1053, %v1455
      %v1488 = vmul.f32 %v1055, %v1456
      %v1489 = vmul.f32 %v1057, %v1457
      %v1490 = vmul.f32 %v1059, %v1458
      %v1491 = vmul.f32 %v1061, %v1459
      %v1492 = vmul.f32 %v1063, %v1460
      %v1493 = vmul.f32 %v1065, %v1461
      %v1494 = vmul.f32 %v1067, %v1462
      %v1495 = vmul.f32 %v1069, %v1463
      %v1496 = vmul.f32 %v1071, %v1464
      %v1497 = vmul.f32 %v1073, %v1465
      %v1498 = vmul.f32 %v1075, %v1466
      %v1499 = vmul.f32 %v1077, %v1467
      %v1500 = vmul.f32 %v1079, %v1468
      %v1501 = vmul.f32 %v1081, %v1469
      %v1502 = vmul.f32 %v1083, %v1470
      %v1503 = vmul.f32 %v1085, %v1471
      %v1504 = vmul.f32 %v1087, %v1472
      %v1505 = vmul.f32 %v1089, %v1473
      %v1506 = vadd.f32 %v1315, %v1317
      %1507 = vadd.xlane.f32.xlu0 %v1506
      %v1508 = vpop.xlane.xlu0 %1507
      %v1509 = vadd.f32 %v1319, %v1321
      %1510 = vadd.xlane.f32.xlu0 %v1509
      %v1511 = vpop.xlane.xlu0 %1510
      %v1512 = vadd.f32 %v1323, %v1325
      %1513 = vadd.xlane.f32.xlu0 %v1512
      %v1514 = vpop.xlane.xlu0 %1513
      %v1515 = vadd.f32 %v1327, %v1329
      %1516 = vadd.xlane.f32.xlu0 %v1515
      %v1517 = vpop.xlane.xlu0 %1516
      %v1518 = vadd.f32 %v1331, %v1333
      %1519 = vadd.xlane.f32.xlu0 %v1518
      %v1520 = vpop.xlane.xlu0 %1519
      %v1521 = vadd.f32 %v1335, %v1337
      %1522 = vadd.xlane.f32.xlu0 %v1521
      %v1523 = vpop.xlane.xlu0 %1522
      %v1524 = vadd.f32 %v1339, %v1341
      %1525 = vadd.xlane.f32.xlu0 %v1524
      %v1526 = vpop.xlane.xlu0 %1525
      %v1527 = vadd.f32 %v1343, %v1345
      %1528 = vadd.xlane.f32.xlu0 %v1527
      %v1529 = vpop.xlane.xlu0 %1528
      %v1530 = vadd.f32 %v1347, %v1349
      %1531 = vadd.xlane.f32.xlu0 %v1530
      %v1532 = vpop.xlane.xlu0 %1531
      %v1533 = vadd.f32 %v1351, %v1353
      %1534 = vadd.xlane.f32.xlu0 %v1533
      %v1535 = vpop.xlane.xlu0 %1534
      %v1536 = vadd.f32 %v1355, %v1357
      %1537 = vadd.xlane.f32.xlu0 %v1536
      %v1538 = vpop.xlane.xlu0 %1537
      %v1539 = vadd.f32 %v1359, %v1361
      %1540 = vadd.xlane.f32.xlu0 %v1539
      %v1541 = vpop.xlane.xlu0 %1540
      %v1542 = vadd.f32 %v1363, %v1365
      %1543 = vadd.xlane.f32.xlu0 %v1542
      %v1544 = vpop.xlane.xlu0 %1543
      %v1545 = vadd.f32 %v1367, %v1369
      %1546 = vadd.xlane.f32.xlu0 %v1545
      %v1547 = vpop.xlane.xlu0 %1546
      %v1548 = vadd.f32 %v1371, %v1373
      %1549 = vadd.xlane.f32.xlu0 %v1548
      %v1550 = vpop.xlane.xlu0 %1549
      %v1551 = vadd.f32 %v1375, %v1377
      %1552 = vadd.xlane.f32.xlu0 %v1551
      %v1553 = vpop.xlane.xlu0 %1552
      %v1554 = vadd.f32 %v1379, %v1381
      %1555 = vadd.xlane.f32.xlu0 %v1554
      %v1556 = vpop.xlane.xlu0 %1555
      %v1557 = vadd.f32 %v1383, %v1385
      %1558 = vadd.xlane.f32.xlu0 %v1557
      %v1559 = vpop.xlane.xlu0 %1558
      %v1560 = vadd.f32 %v1387, %v1389
      %1561 = vadd.xlane.f32.xlu0 %v1560
      %v1562 = vpop.xlane.xlu0 %1561
      %v1563 = vadd.f32 %v1391, %v1393
      %1564 = vadd.xlane.f32.xlu0 %v1563
      %v1565 = vpop.xlane.xlu0 %1564
      %v1566 = vadd.f32 %v1395, %v1397
      %1567 = vadd.xlane.f32.xlu0 %v1566
      %v1568 = vpop.xlane.xlu0 %1567
      %v1569 = vadd.f32 %v1399, %v1401
      %1570 = vadd.xlane.f32.xlu0 %v1569
      %v1571 = vpop.xlane.xlu0 %1570
      %v1572 = vadd.f32 %v1403, %v1405
      %1573 = vadd.xlane.f32.xlu0 %v1572
      %v1574 = vpop.xlane.xlu0 %1573
      %v1575 = vadd.f32 %v1407, %v1409
      %1576 = vadd.xlane.f32.xlu0 %v1575
      %v1577 = vpop.xlane.xlu0 %1576
      %v1578 = vadd.f32 %v1411, %v1413
      %1579 = vadd.xlane.f32.xlu0 %v1578
      %v1580 = vpop.xlane.xlu0 %1579
      %v1581 = vadd.f32 %v1415, %v1417
      %1582 = vadd.xlane.f32.xlu0 %v1581
      %v1583 = vpop.xlane.xlu0 %1582
      %v1584 = vadd.f32 %v1419, %v1421
      %1585 = vadd.xlane.f32.xlu0 %v1584
      %v1586 = vpop.xlane.xlu0 %1585
      %v1587 = vadd.f32 %v1423, %v1425
      %1588 = vadd.xlane.f32.xlu0 %v1587
      %v1589 = vpop.xlane.xlu0 %1588
      %v1590 = vadd.f32 %v1427, %v1429
      %1591 = vadd.xlane.f32.xlu0 %v1590
      %v1592 = vpop.xlane.xlu0 %1591
      %v1593 = vadd.f32 %v1431, %v1433
      %1594 = vadd.xlane.f32.xlu0 %v1593
      %v1595 = vpop.xlane.xlu0 %1594
      %v1596 = vadd.f32 %v1435, %v1437
      %1597 = vadd.xlane.f32.xlu0 %v1596
      %v1598 = vpop.xlane.xlu0 %1597
      %v1599 = vadd.f32 %v1439, %v1441
      %1600 = vadd.xlane.f32.xlu0 %v1599
      %v1601 = vpop.xlane.xlu0 %1600
      %v1602 = vadd.f32 %v1474, %v1508
      %v1603 = vadd.f32 %v1475, %v1511
      %v1604 = vadd.f32 %v1476, %v1514
      %v1605 = vadd.f32 %v1477, %v1517
      %v1606 = vadd.f32 %v1478, %v1520
      %v1607 = vadd.f32 %v1479, %v1523
      %v1608 = vadd.f32 %v1480, %v1526
      %v1609 = vadd.f32 %v1481, %v1529
      %v1610 = vadd.f32 %v1482, %v1532
      %v1611 = vadd.f32 %v1483, %v1535
      %v1612 = vadd.f32 %v1484, %v1538
      %v1613 = vadd.f32 %v1485, %v1541
      %v1614 = vadd.f32 %v1486, %v1544
      %v1615 = vadd.f32 %v1487, %v1547
      %v1616 = vadd.f32 %v1488, %v1550
      %v1617 = vadd.f32 %v1489, %v1553
      %v1618 = vadd.f32 %v1490, %v1556
      %v1619 = vadd.f32 %v1491, %v1559
      %v1620 = vadd.f32 %v1492, %v1562
      %v1621 = vadd.f32 %v1493, %v1565
      %v1622 = vadd.f32 %v1494, %v1568
      %v1623 = vadd.f32 %v1495, %v1571
      %v1624 = vadd.f32 %v1496, %v1574
      %v1625 = vadd.f32 %v1497, %v1577
      %v1626 = vadd.f32 %v1498, %v1580
      %v1627 = vadd.f32 %v1499, %v1583
      %v1628 = vadd.f32 %v1500, %v1586
      %v1629 = vadd.f32 %v1501, %v1589
      %v1630 = vadd.f32 %v1502, %v1592
      %v1631 = vadd.f32 %v1503, %v1595
      %v1632 = vadd.f32 %v1504, %v1598
      %v1633 = vadd.f32 %v1505, %v1601
      %vm1634 = vcmask 7168
      %1635 = vst.msk [vmem:[#allocation3] sm:$0xff] %vm1634, %v1602
      %1636 = vst.msk [vmem:[#allocation3 + $0x8] sm:$0xff] %vm1634, %v1603
      %1637 = vst.msk [vmem:[#allocation3 + $0x10] sm:$0xff] %vm1634, %v1604
      %1638 = vst.msk [vmem:[#allocation3 + $0x18] sm:$0xff] %vm1634, %v1605
      %1639 = vst.msk [vmem:[#allocation3 + $0x20] sm:$0xff] %vm1634, %v1606
      %1640 = vst.msk [vmem:[#allocation3 + $0x28] sm:$0xff] %vm1634, %v1607
      %1641 = vst.msk [vmem:[#allocation3 + $0x30] sm:$0xff] %vm1634, %v1608
      %1642 = vst.msk [vmem:[#allocation3 + $0x38] sm:$0xff] %vm1634, %v1609
      %1643 = vst.msk [vmem:[#allocation3 + $0x40] sm:$0xff] %vm1634, %v1610
      %1644 = vst.msk [vmem:[#allocation3 + $0x48] sm:$0xff] %vm1634, %v1611
      %1645 = vst.msk [vmem:[#allocation3 + $0x50] sm:$0xff] %vm1634, %v1612
      %1646 = vst.msk [vmem:[#allocation3 + $0x58] sm:$0xff] %vm1634, %v1613
      %1647 = vst.msk [vmem:[#allocation3 + $0x60] sm:$0xff] %vm1634, %v1614
      %1648 = vst.msk [vmem:[#allocation3 + $0x68] sm:$0xff] %vm1634, %v1615
      %1649 = vst.msk [vmem:[#allocation3 + $0x70] sm:$0xff] %vm1634, %v1616
      %1650 = vst.msk [vmem:[#allocation3 + $0x78] sm:$0xff] %vm1634, %v1617
      %1651 = vst.msk [vmem:[#allocation3 + $0x80] sm:$0xff] %vm1634, %v1618
      %1652 = vst.msk [vmem:[#allocation3 + $0x88] sm:$0xff] %vm1634, %v1619
      %1653 = vst.msk [vmem:[#allocation3 + $0x90] sm:$0xff] %vm1634, %v1620
      %1654 = vst.msk [vmem:[#allocation3 + $0x98] sm:$0xff] %vm1634, %v1621
      %1655 = vst.msk [vmem:[#allocation3 + $0xa0] sm:$0xff] %vm1634, %v1622
      %1656 = vst.msk [vmem:[#allocation3 + $0xa8] sm:$0xff] %vm1634, %v1623
      %1657 = vst.msk [vmem:[#allocation3 + $0xb0] sm:$0xff] %vm1634, %v1624
      %1658 = vst.msk [vmem:[#allocation3 + $0xb8] sm:$0xff] %vm1634, %v1625
      %1659 = vst.msk [vmem:[#allocation3 + $0xc0] sm:$0xff] %vm1634, %v1626
      %1660 = vst.msk [vmem:[#allocation3 + $0xc8] sm:$0xff] %vm1634, %v1627
      %1661 = vst.msk [vmem:[#allocation3 + $0xd0] sm:$0xff] %vm1634, %v1628
      %1662 = vst.msk [vmem:[#allocation3 + $0xd8] sm:$0xff] %vm1634, %v1629
      %1663 = vst.msk [vmem:[#allocation3 + $0xe0] sm:$0xff] %vm1634, %v1630
      %1664 = vst.msk [vmem:[#allocation3 + $0xe8] sm:$0xff] %vm1634, %v1631
      %1665 = vst.msk [vmem:[#allocation3 + $0xf0] sm:$0xff] %vm1634, %v1632
      %1666 = vst.msk [vmem:[#allocation3 + $0xf8] sm:$0xff] %vm1634, %v1633
      %v1667 = vld [vmem:[#allocation4] sm:$0xff]
      %v1668 = vld [vmem:[#allocation4 + $0x8] sm:$0xff]
      %v1669 = vld [vmem:[#allocation4 + $0x10] sm:$0xff]
      %v1670 = vld [vmem:[#allocation4 + $0x18] sm:$0xff]
      %v1671 = vld [vmem:[#allocation4 + $0x20] sm:$0xff]
      %v1672 = vld [vmem:[#allocation4 + $0x28] sm:$0xff]
      %v1673 = vld [vmem:[#allocation4 + $0x30] sm:$0xff]
      %v1674 = vld [vmem:[#allocation4 + $0x38] sm:$0xff]
      %v1675 = vld [vmem:[#allocation4 + $0x40] sm:$0xff]
      %v1676 = vld [vmem:[#allocation4 + $0x48] sm:$0xff]
      %v1677 = vld [vmem:[#allocation4 + $0x50] sm:$0xff]
      %v1678 = vld [vmem:[#allocation4 + $0x58] sm:$0xff]
      %v1679 = vld [vmem:[#allocation4 + $0x60] sm:$0xff]
      %v1680 = vld [vmem:[#allocation4 + $0x68] sm:$0xff]
      %v1681 = vld [vmem:[#allocation4 + $0x70] sm:$0xff]
      %v1682 = vld [vmem:[#allocation4 + $0x78] sm:$0xff]
      %v1683 = vld [vmem:[#allocation4 + $0x80] sm:$0xff]
      %v1684 = vld [vmem:[#allocation4 + $0x88] sm:$0xff]
      %v1685 = vld [vmem:[#allocation4 + $0x90] sm:$0xff]
      %v1686 = vld [vmem:[#allocation4 + $0x98] sm:$0xff]
      %v1687 = vld [vmem:[#allocation4 + $0xa0] sm:$0xff]
      %v1688 = vld [vmem:[#allocation4 + $0xa8] sm:$0xff]
      %v1689 = vld [vmem:[#allocation4 + $0xb0] sm:$0xff]
      %v1690 = vld [vmem:[#allocation4 + $0xb8] sm:$0xff]
      %v1691 = vld [vmem:[#allocation4 + $0xc0] sm:$0xff]
      %v1692 = vld [vmem:[#allocation4 + $0xc8] sm:$0xff]
      %v1693 = vld [vmem:[#allocation4 + $0xd0] sm:$0xff]
      %v1694 = vld [vmem:[#allocation4 + $0xd8] sm:$0xff]
      %v1695 = vld [vmem:[#allocation4 + $0xe0] sm:$0xff]
      %v1696 = vld [vmem:[#allocation4 + $0xe8] sm:$0xff]
      %v1697 = vld [vmem:[#allocation4 + $0xf0] sm:$0xff]
      %v1698 = vld [vmem:[#allocation4 + $0xf8] sm:$0xff]
      %1700 = vset.pattern.permute.xlu0 0
      %1701 = vperm.xlu0 %1700, %v1027
      %v1702 = vpop.permute.xlu0 %1701
      %1705 = vset.pattern.permute.xlu0 0
      %1706 = vperm.xlu0 %1705, %v1029
      %v1707 = vpop.permute.xlu0 %1706
      %1710 = vset.pattern.permute.xlu0 0
      %1711 = vperm.xlu0 %1710, %v1031
      %v1712 = vpop.permute.xlu0 %1711
      %1715 = vset.pattern.permute.xlu0 0
      %1716 = vperm.xlu0 %1715, %v1033
      %v1717 = vpop.permute.xlu0 %1716
      %1720 = vset.pattern.permute.xlu0 0
      %1721 = vperm.xlu0 %1720, %v1035
      %v1722 = vpop.permute.xlu0 %1721
      %1725 = vset.pattern.permute.xlu0 0
      %1726 = vperm.xlu0 %1725, %v1037
      %v1727 = vpop.permute.xlu0 %1726
      %1730 = vset.pattern.permute.xlu0 0
      %1731 = vperm.xlu0 %1730, %v1039
      %v1732 = vpop.permute.xlu0 %1731
      %1735 = vset.pattern.permute.xlu0 0
      %1736 = vperm.xlu0 %1735, %v1041
      %v1737 = vpop.permute.xlu0 %1736
      %1740 = vset.pattern.permute.xlu0 0
      %1741 = vperm.xlu0 %1740, %v1043
      %v1742 = vpop.permute.xlu0 %1741
      %1745 = vset.pattern.permute.xlu0 0
      %1746 = vperm.xlu0 %1745, %v1045
      %v1747 = vpop.permute.xlu0 %1746
      %1750 = vset.pattern.permute.xlu0 0
      %1751 = vperm.xlu0 %1750, %v1047
      %v1752 = vpop.permute.xlu0 %1751
      %1755 = vset.pattern.permute.xlu0 0
      %1756 = vperm.xlu0 %1755, %v1049
      %v1757 = vpop.permute.xlu0 %1756
      %1760 = vset.pattern.permute.xlu0 0
      %1761 = vperm.xlu0 %1760, %v1051
      %v1762 = vpop.permute.xlu0 %1761
      %1765 = vset.pattern.permute.xlu0 0
      %1766 = vperm.xlu0 %1765, %v1053
      %v1767 = vpop.permute.xlu0 %1766
      %1770 = vset.pattern.permute.xlu0 0
      %1771 = vperm.xlu0 %1770, %v1055
      %v1772 = vpop.permute.xlu0 %1771
      %1775 = vset.pattern.permute.xlu0 0
      %1776 = vperm.xlu0 %1775, %v1057
      %v1777 = vpop.permute.xlu0 %1776
      %1780 = vset.pattern.permute.xlu0 0
      %1781 = vperm.xlu0 %1780, %v1059
      %v1782 = vpop.permute.xlu0 %1781
      %1785 = vset.pattern.permute.xlu0 0
      %1786 = vperm.xlu0 %1785, %v1061
      %v1787 = vpop.permute.xlu0 %1786
      %1790 = vset.pattern.permute.xlu0 0
      %1791 = vperm.xlu0 %1790, %v1063
      %v1792 = vpop.permute.xlu0 %1791
      %1795 = vset.pattern.permute.xlu0 0
      %1796 = vperm.xlu0 %1795, %v1065
      %v1797 = vpop.permute.xlu0 %1796
      %1800 = vset.pattern.permute.xlu0 0
      %1801 = vperm.xlu0 %1800, %v1067
      %v1802 = vpop.permute.xlu0 %1801
      %1805 = vset.pattern.permute.xlu0 0
      %1806 = vperm.xlu0 %1805, %v1069
      %v1807 = vpop.permute.xlu0 %1806
      %1810 = vset.pattern.permute.xlu0 0
      %1811 = vperm.xlu0 %1810, %v1071
      %v1812 = vpop.permute.xlu0 %1811
      %1815 = vset.pattern.permute.xlu0 0
      %1816 = vperm.xlu0 %1815, %v1073
      %v1817 = vpop.permute.xlu0 %1816
      %1820 = vset.pattern.permute.xlu0 0
      %1821 = vperm.xlu0 %1820, %v1075
      %v1822 = vpop.permute.xlu0 %1821
      %1825 = vset.pattern.permute.xlu0 0
      %1826 = vperm.xlu0 %1825, %v1077
      %v1827 = vpop.permute.xlu0 %1826
      %1830 = vset.pattern.permute.xlu0 0
      %1831 = vperm.xlu0 %1830, %v1079
      %v1832 = vpop.permute.xlu0 %1831
      %1835 = vset.pattern.permute.xlu0 0
      %1836 = vperm.xlu0 %1835, %v1081
      %v1837 = vpop.permute.xlu0 %1836
      %1840 = vset.pattern.permute.xlu0 0
      %1841 = vperm.xlu0 %1840, %v1083
      %v1842 = vpop.permute.xlu0 %1841
      %1845 = vset.pattern.permute.xlu0 0
      %1846 = vperm.xlu0 %1845, %v1085
      %v1847 = vpop.permute.xlu0 %1846
      %1850 = vset.pattern.permute.xlu0 0
      %1851 = vperm.xlu0 %1850, %v1087
      %v1852 = vpop.permute.xlu0 %1851
      %1855 = vset.pattern.permute.xlu0 0
      %1856 = vperm.xlu0 %1855, %v1089
      %v1857 = vpop.permute.xlu0 %1856
      %v1859 = vmul.f32 %v1702, %v1667
      %v1860 = vmul.f32 %v1707, %v1668
      %v1861 = vmul.f32 %v1712, %v1669
      %v1862 = vmul.f32 %v1717, %v1670
      %v1863 = vmul.f32 %v1722, %v1671
      %v1864 = vmul.f32 %v1727, %v1672
      %v1865 = vmul.f32 %v1732, %v1673
      %v1866 = vmul.f32 %v1737, %v1674
      %v1867 = vmul.f32 %v1742, %v1675
      %v1868 = vmul.f32 %v1747, %v1676
      %v1869 = vmul.f32 %v1752, %v1677
      %v1870 = vmul.f32 %v1757, %v1678
      %v1871 = vmul.f32 %v1762, %v1679
      %v1872 = vmul.f32 %v1767, %v1680
      %v1873 = vmul.f32 %v1772, %v1681
      %v1874 = vmul.f32 %v1777, %v1682
      %v1875 = vmul.f32 %v1782, %v1683
      %v1876 = vmul.f32 %v1787, %v1684
      %v1877 = vmul.f32 %v1792, %v1685
      %v1878 = vmul.f32 %v1797, %v1686
      %v1879 = vmul.f32 %v1802, %v1687
      %v1880 = vmul.f32 %v1807, %v1688
      %v1881 = vmul.f32 %v1812, %v1689
      %v1882 = vmul.f32 %v1817, %v1690
      %v1883 = vmul.f32 %v1822, %v1691
      %v1884 = vmul.f32 %v1827, %v1692
      %v1885 = vmul.f32 %v1832, %v1693
      %v1886 = vmul.f32 %v1837, %v1694
      %v1887 = vmul.f32 %v1842, %v1695
      %v1888 = vmul.f32 %v1847, %v1696
      %v1889 = vmul.f32 %v1852, %v1697
      %v1890 = vmul.f32 %v1857, %v1698
      %1891 = vmatprep.subr.mxu0 0.0
      %1892 = vmatpush1.msra.mxu0 %v560
      %1893 = vmatprep.subr.mxu0 0.0
      %1894 = vmatpush1.msra.mxu0 %v559
      %1895 = vmatprep.subr.mxu0 0.0
      %1896 = vmatpush1.msra.mxu0 %v558
      %1897 = vmatprep.subr.mxu0 0.0
      %1898 = vmatpush1.msra.mxu0 %v557
      %1899 = vmatprep.subr.mxu0 0.0
      %1900 = vmatpush1.msra.mxu0 %v556
      %1901 = vmatprep.subr.mxu0 0.0
      %1902 = vmatpush1.msra.mxu0 %v555
      %1903 = vmatprep.subr.mxu0 0.0
      %1904 = vmatpush1.msra.mxu0 %v554
      %1905 = vmatprep.subr.mxu0 0.0
      %1906 = vmatpush1.msra.mxu0 %v553
      %1907 = vmatprep.subr.mxu0 0.0
      %1908 = vmatpush1.msra.mxu0 %v552
      %1909 = vmatprep.subr.mxu0 0.0
      %1910 = vmatpush1.msra.mxu0 %v551
      %1911 = vmatprep.subr.mxu0 0.0
      %1912 = vmatpush1.msra.mxu0 %v550
      %1913 = vmatprep.subr.mxu0 0.0
      %1914 = vmatpush1.msra.mxu0 %v549
      %1915 = vmatprep.subr.mxu0 0.0
      %1916 = vmatpush1.msra.mxu0 %v548
      %1917 = vmatprep.subr.mxu0 0.0
      %1918 = vmatpush1.msra.mxu0 %v547
      %1919 = vmatprep.subr.mxu0 0.0
      %1920 = vmatpush1.msra.mxu0 %v546
      %1921 = vmatprep.subr.mxu0 0.0
      %1922 = vmatpush1.msra.mxu0 %v545
      %1923 = vmatprep.subr.mxu0 0.0
      %1924 = vmatpush2.msra.mxu0 %v576
      %1925 = vmatprep.subr.mxu0 0.0
      %1926 = vmatpush2.msra.mxu0 %v575
      %1927 = vmatprep.subr.mxu0 0.0
      %1928 = vmatpush2.msra.mxu0 %v574
      %1929 = vmatprep.subr.mxu0 0.0
      %1930 = vmatpush2.msra.mxu0 %v573
      %1931 = vmatprep.subr.mxu0 0.0
      %1932 = vmatpush2.msra.mxu0 %v572
      %1933 = vmatprep.subr.mxu0 0.0
      %1934 = vmatpush2.msra.mxu0 %v571
      %1935 = vmatprep.subr.mxu0 0.0
      %1936 = vmatpush2.msra.mxu0 %v570
      %1937 = vmatprep.subr.mxu0 0.0
      %1938 = vmatpush2.msra.mxu0 %v569
      %1939 = vmatprep.subr.mxu0 0.0
      %1940 = vmatpush2.msra.mxu0 %v568
      %1941 = vmatprep.subr.mxu0 0.0
      %1942 = vmatpush2.msra.mxu0 %v567
      %1943 = vmatprep.subr.mxu0 0.0
      %1944 = vmatpush2.msra.mxu0 %v566
      %1945 = vmatprep.subr.mxu0 0.0
      %1946 = vmatpush2.msra.mxu0 %v565
      %1947 = vmatprep.subr.mxu0 0.0
      %1948 = vmatpush2.msra.mxu0 %v564
      %1949 = vmatprep.subr.mxu0 0.0
      %1950 = vmatpush2.msra.mxu0 %v563
      %1951 = vmatprep.subr.mxu0 0.0
      %1952 = vmatpush2.msra.mxu0 %v562
      %1953 = vmatprep.subr.mxu0 0.0
      %1954 = vmatpush2.msra.mxu0 %v561
      %1955 = vmatprep.mubr.f32.mxu0 %v1317
      %1956 = vmatmul.mubr.f32.gmra.mxu0 %v1315
      %v1957 = vpop.f32.mrf.mxu0
      %v1958 = vadd.f32 0.0, %v1957
      %v1959 = vpop.f32.mrf.mxu0
      %1960 = vmatprep.mubr.f32.mxu0 %v1321
      %1961 = vmatmul.mubr.f32.gmra.mxu0 %v1319
      %v1962 = vpop.f32.mrf.mxu0
      %v1963 = vadd.f32 0.0, %v1962
      %v1964 = vpop.f32.mrf.mxu0
      %1965 = vmatprep.mubr.f32.mxu0 %v1325
      %1966 = vmatmul.mubr.f32.gmra.mxu0 %v1323
      %v1967 = vpop.f32.mrf.mxu0
      %v1968 = vadd.f32 0.0, %v1967
      %v1969 = vpop.f32.mrf.mxu0
      %1970 = vmatprep.mubr.f32.mxu0 %v1329
      %1971 = vmatmul.mubr.f32.gmra.mxu0 %v1327
      %v1972 = vpop.f32.mrf.mxu0
      %v1973 = vadd.f32 0.0, %v1972
      %v1974 = vpop.f32.mrf.mxu0
      %1975 = vmatprep.mubr.f32.mxu0 %v1333
      %1976 = vmatmul.mubr.f32.gmra.mxu0 %v1331
      %v1977 = vpop.f32.mrf.mxu0
      %v1978 = vadd.f32 0.0, %v1977
      %v1979 = vpop.f32.mrf.mxu0
      %1980 = vmatprep.mubr.f32.mxu0 %v1337
      %1981 = vmatmul.mubr.f32.gmra.mxu0 %v1335
      %v1982 = vpop.f32.mrf.mxu0
      %v1983 = vadd.f32 0.0, %v1982
      %v1984 = vpop.f32.mrf.mxu0
      %1985 = vmatprep.mubr.f32.mxu0 %v1341
      %1986 = vmatmul.mubr.f32.gmra.mxu0 %v1339
      %v1987 = vpop.f32.mrf.mxu0
      %v1988 = vadd.f32 0.0, %v1987
      %v1989 = vpop.f32.mrf.mxu0
      %1990 = vmatprep.mubr.f32.mxu0 %v1345
      %1991 = vmatmul.mubr.f32.gmra.mxu0 %v1343
      %v1992 = vpop.f32.mrf.mxu0
      %v1993 = vadd.f32 0.0, %v1992
      %v1994 = vpop.f32.mrf.mxu0
      %1995 = vmatprep.mubr.f32.mxu0 %v1349
      %1996 = vmatmul.mubr.f32.gmra.mxu0 %v1347
      %v1997 = vpop.f32.mrf.mxu0
      %v1998 = vadd.f32 0.0, %v1997
      %v1999 = vpop.f32.mrf.mxu0
      %2000 = vmatprep.mubr.f32.mxu0 %v1353
      %2001 = vmatmul.mubr.f32.gmra.mxu0 %v1351
      %v2002 = vpop.f32.mrf.mxu0
      %v2003 = vadd.f32 0.0, %v2002
      %v2004 = vpop.f32.mrf.mxu0
      %2005 = vmatprep.mubr.f32.mxu0 %v1357
      %2006 = vmatmul.mubr.f32.gmra.mxu0 %v1355
      %v2007 = vpop.f32.mrf.mxu0
      %v2008 = vadd.f32 0.0, %v2007
      %v2009 = vpop.f32.mrf.mxu0
      %2010 = vmatprep.mubr.f32.mxu0 %v1361
      %2011 = vmatmul.mubr.f32.gmra.mxu0 %v1359
      %v2012 = vpop.f32.mrf.mxu0
      %v2013 = vadd.f32 0.0, %v2012
      %v2014 = vpop.f32.mrf.mxu0
      %2015 = vmatprep.mubr.f32.mxu0 %v1365
      %2016 = vmatmul.mubr.f32.gmra.mxu0 %v1363
      %v2017 = vpop.f32.mrf.mxu0
      %v2018 = vadd.f32 0.0, %v2017
      %v2019 = vpop.f32.mrf.mxu0
      %2020 = vmatprep.mubr.f32.mxu0 %v1369
      %2021 = vmatmul.mubr.f32.gmra.mxu0 %v1367
      %v2022 = vpop.f32.mrf.mxu0
      %v2023 = vadd.f32 0.0, %v2022
      %v2024 = vpop.f32.mrf.mxu0
      %2025 = vmatprep.mubr.f32.mxu0 %v1373
      %2026 = vmatmul.mubr.f32.gmra.mxu0 %v1371
      %v2027 = vpop.f32.mrf.mxu0
      %v2028 = vadd.f32 0.0, %v2027
      %v2029 = vpop.f32.mrf.mxu0
      %2030 = vmatprep.mubr.f32.mxu0 %v1377
      %2031 = vmatmul.mubr.f32.gmra.mxu0 %v1375
      %v2032 = vpop.f32.mrf.mxu0
      %v2033 = vadd.f32 0.0, %v2032
      %v2034 = vpop.f32.mrf.mxu0
      %2035 = vmatprep.mubr.f32.mxu0 %v1381
      %2036 = vmatmul.mubr.f32.gmra.mxu0 %v1379
      %v2037 = vpop.f32.mrf.mxu0
      %v2038 = vadd.f32 0.0, %v2037
      %v2039 = vpop.f32.mrf.mxu0
      %2040 = vmatprep.mubr.f32.mxu0 %v1385
      %2041 = vmatmul.mubr.f32.gmra.mxu0 %v1383
      %v2042 = vpop.f32.mrf.mxu0
      %v2043 = vadd.f32 0.0, %v2042
      %v2044 = vpop.f32.mrf.mxu0
      %2045 = vmatprep.mubr.f32.mxu0 %v1389
      %2046 = vmatmul.mubr.f32.gmra.mxu0 %v1387
      %v2047 = vpop.f32.mrf.mxu0
      %v2048 = vadd.f32 0.0, %v2047
      %v2049 = vpop.f32.mrf.mxu0
      %2050 = vmatprep.mubr.f32.mxu0 %v1393
      %2051 = vmatmul.mubr.f32.gmra.mxu0 %v1391
      %v2052 = vpop.f32.mrf.mxu0
      %v2053 = vadd.f32 0.0, %v2052
      %v2054 = vpop.f32.mrf.mxu0
      %2055 = vmatprep.mubr.f32.mxu0 %v1397
      %2056 = vmatmul.mubr.f32.gmra.mxu0 %v1395
      %v2057 = vpop.f32.mrf.mxu0
      %v2058 = vadd.f32 0.0, %v2057
      %v2059 = vpop.f32.mrf.mxu0
      %2060 = vmatprep.mubr.f32.mxu0 %v1401
      %2061 = vmatmul.mubr.f32.gmra.mxu0 %v1399
      %v2062 = vpop.f32.mrf.mxu0
      %v2063 = vadd.f32 0.0, %v2062
      %v2064 = vpop.f32.mrf.mxu0
      %2065 = vmatprep.mubr.f32.mxu0 %v1405
      %2066 = vmatmul.mubr.f32.gmra.mxu0 %v1403
      %v2067 = vpop.f32.mrf.mxu0
      %v2068 = vadd.f32 0.0, %v2067
      %v2069 = vpop.f32.mrf.mxu0
      %2070 = vmatprep.mubr.f32.mxu0 %v1409
      %2071 = vmatmul.mubr.f32.gmra.mxu0 %v1407
      %v2072 = vpop.f32.mrf.mxu0
      %v2073 = vadd.f32 0.0, %v2072
      %v2074 = vpop.f32.mrf.mxu0
      %2075 = vmatprep.mubr.f32.mxu0 %v1413
      %2076 = vmatmul.mubr.f32.gmra.mxu0 %v1411
      %v2077 = vpop.f32.mrf.mxu0
      %v2078 = vadd.f32 0.0, %v2077
      %v2079 = vpop.f32.mrf.mxu0
      %2080 = vmatprep.mubr.f32.mxu0 %v1417
      %2081 = vmatmul.mubr.f32.gmra.mxu0 %v1415
      %v2082 = vpop.f32.mrf.mxu0
      %v2083 = vadd.f32 0.0, %v2082
      %v2084 = vpop.f32.mrf.mxu0
      %2085 = vmatprep.mubr.f32.mxu0 %v1421
      %2086 = vmatmul.mubr.f32.gmra.mxu0 %v1419
      %v2087 = vpop.f32.mrf.mxu0
      %v2088 = vadd.f32 0.0, %v2087
      %v2089 = vpop.f32.mrf.mxu0
      %2090 = vmatprep.mubr.f32.mxu0 %v1425
      %2091 = vmatmul.mubr.f32.gmra.mxu0 %v1423
      %v2092 = vpop.f32.mrf.mxu0
      %v2093 = vadd.f32 0.0, %v2092
      %v2094 = vpop.f32.mrf.mxu0
      %2095 = vmatprep.mubr.f32.mxu0 %v1429
      %2096 = vmatmul.mubr.f32.gmra.mxu0 %v1427
      %v2097 = vpop.f32.mrf.mxu0
      %v2098 = vadd.f32 0.0, %v2097
      %v2099 = vpop.f32.mrf.mxu0
      %2100 = vmatprep.mubr.f32.mxu0 %v1433
      %2101 = vmatmul.mubr.f32.gmra.mxu0 %v1431
      %v2102 = vpop.f32.mrf.mxu0
      %v2103 = vadd.f32 0.0, %v2102
      %v2104 = vpop.f32.mrf.mxu0
      %2105 = vmatprep.mubr.f32.mxu0 %v1437
      %2106 = vmatmul.mubr.f32.gmra.mxu0 %v1435
      %v2107 = vpop.f32.mrf.mxu0
      %v2108 = vadd.f32 0.0, %v2107
      %v2109 = vpop.f32.mrf.mxu0
      %2110 = vmatprep.mubr.f32.mxu0 %v1441
      %2111 = vmatmul.mubr.f32.gmra.mxu0 %v1439
      %v2112 = vpop.f32.mrf.mxu0
      %v2113 = vadd.f32 0.0, %v2112
      %v2114 = vpop.f32.mrf.mxu0
      %2115 = vdwg.mxu0
      %v2116 = vadd.f32 %v1859, %v1958
      %v2117 = vadd.f32 %v1860, %v1963
      %v2118 = vadd.f32 %v1861, %v1968
      %v2119 = vadd.f32 %v1862, %v1973
      %v2120 = vadd.f32 %v1863, %v1978
      %v2121 = vadd.f32 %v1864, %v1983
      %v2122 = vadd.f32 %v1865, %v1988
      %v2123 = vadd.f32 %v1866, %v1993
      %v2124 = vadd.f32 %v1867, %v1998
      %v2125 = vadd.f32 %v1868, %v2003
      %v2126 = vadd.f32 %v1869, %v2008
      %v2127 = vadd.f32 %v1870, %v2013
      %v2128 = vadd.f32 %v1871, %v2018
      %v2129 = vadd.f32 %v1872, %v2023
      %v2130 = vadd.f32 %v1873, %v2028
      %v2131 = vadd.f32 %v1874, %v2033
      %v2132 = vadd.f32 %v1875, %v2038
      %v2133 = vadd.f32 %v1876, %v2043
      %v2134 = vadd.f32 %v1877, %v2048
      %v2135 = vadd.f32 %v1878, %v2053
      %v2136 = vadd.f32 %v1879, %v2058
      %v2137 = vadd.f32 %v1880, %v2063
      %v2138 = vadd.f32 %v1881, %v2068
      %v2139 = vadd.f32 %v1882, %v2073
      %v2140 = vadd.f32 %v1883, %v2078
      %v2141 = vadd.f32 %v1884, %v2083
      %v2142 = vadd.f32 %v1885, %v2088
      %v2143 = vadd.f32 %v1886, %v2093
      %v2144 = vadd.f32 %v1887, %v2098
      %v2145 = vadd.f32 %v1888, %v2103
      %v2146 = vadd.f32 %v1889, %v2108
      %v2147 = vadd.f32 %v1890, %v2113
      %2148 = vst [vmem:[#allocation4] sm:$0xff] %v2116
      %2149 = vst [vmem:[#allocation4 + $0x8] sm:$0xff] %v2117
      %2150 = vst [vmem:[#allocation4 + $0x10] sm:$0xff] %v2118
      %2151 = vst [vmem:[#allocation4 + $0x18] sm:$0xff] %v2119
      %2152 = vst [vmem:[#allocation4 + $0x20] sm:$0xff] %v2120
      %2153 = vst [vmem:[#allocation4 + $0x28] sm:$0xff] %v2121
      %2154 = vst [vmem:[#allocation4 + $0x30] sm:$0xff] %v2122
      %2155 = vst [vmem:[#allocation4 + $0x38] sm:$0xff] %v2123
      %2156 = vst [vmem:[#allocation4 + $0x40] sm:$0xff] %v2124
      %2157 = vst [vmem:[#allocation4 + $0x48] sm:$0xff] %v2125
      %2158 = vst [vmem:[#allocation4 + $0x50] sm:$0xff] %v2126
      %2159 = vst [vmem:[#allocation4 + $0x58] sm:$0xff] %v2127
      %2160 = vst [vmem:[#allocation4 + $0x60] sm:$0xff] %v2128
      %2161 = vst [vmem:[#allocation4 + $0x68] sm:$0xff] %v2129
      %2162 = vst [vmem:[#allocation4 + $0x70] sm:$0xff] %v2130
      %2163 = vst [vmem:[#allocation4 + $0x78] sm:$0xff] %v2131
      %2164 = vst [vmem:[#allocation4 + $0x80] sm:$0xff] %v2132
      %2165 = vst [vmem:[#allocation4 + $0x88] sm:$0xff] %v2133
      %2166 = vst [vmem:[#allocation4 + $0x90] sm:$0xff] %v2134
      %2167 = vst [vmem:[#allocation4 + $0x98] sm:$0xff] %v2135
      %2168 = vst [vmem:[#allocation4 + $0xa0] sm:$0xff] %v2136
      %2169 = vst [vmem:[#allocation4 + $0xa8] sm:$0xff] %v2137
      %2170 = vst [vmem:[#allocation4 + $0xb0] sm:$0xff] %v2138
      %2171 = vst [vmem:[#allocation4 + $0xb8] sm:$0xff] %v2139
      %2172 = vst [vmem:[#allocation4 + $0xc0] sm:$0xff] %v2140
      %2173 = vst [vmem:[#allocation4 + $0xc8] sm:$0xff] %v2141
      %2174 = vst [vmem:[#allocation4 + $0xd0] sm:$0xff] %v2142
      %2175 = vst [vmem:[#allocation4 + $0xd8] sm:$0xff] %v2143
      %2176 = vst [vmem:[#allocation4 + $0xe0] sm:$0xff] %v2144
      %2177 = vst [vmem:[#allocation4 + $0xe8] sm:$0xff] %v2145
      %2178 = vst [vmem:[#allocation4 + $0xf0] sm:$0xff] %v2146
      %2179 = vst [vmem:[#allocation4 + $0xf8] sm:$0xff] %v2147
      %2180 = vst.msk [vmem:[#allocation2] sm:$0xff] %vm1634, %v962
      %2181 = vst.msk [vmem:[#allocation2 + $0x8] sm:$0xff] %vm1634, %v963
      %2182 = vst.msk [vmem:[#allocation2 + $0x10] sm:$0xff] %vm1634, %v964
      %2183 = vst.msk [vmem:[#allocation2 + $0x18] sm:$0xff] %vm1634, %v965
      %2184 = vst.msk [vmem:[#allocation2 + $0x20] sm:$0xff] %vm1634, %v966
      %2185 = vst.msk [vmem:[#allocation2 + $0x28] sm:$0xff] %vm1634, %v967
      %2186 = vst.msk [vmem:[#allocation2 + $0x30] sm:$0xff] %vm1634, %v968
      %2187 = vst.msk [vmem:[#allocation2 + $0x38] sm:$0xff] %vm1634, %v969
      %2188 = vst.msk [vmem:[#allocation2 + $0x40] sm:$0xff] %vm1634, %v970
      %2189 = vst.msk [vmem:[#allocation2 + $0x48] sm:$0xff] %vm1634, %v971
      %2190 = vst.msk [vmem:[#allocation2 + $0x50] sm:$0xff] %vm1634, %v972
      %2191 = vst.msk [vmem:[#allocation2 + $0x58] sm:$0xff] %vm1634, %v973
      %2192 = vst.msk [vmem:[#allocation2 + $0x60] sm:$0xff] %vm1634, %v974
      %2193 = vst.msk [vmem:[#allocation2 + $0x68] sm:$0xff] %vm1634, %v975
      %2194 = vst.msk [vmem:[#allocation2 + $0x70] sm:$0xff] %vm1634, %v976
      %2195 = vst.msk [vmem:[#allocation2 + $0x78] sm:$0xff] %vm1634, %v977
      %2196 = vst.msk [vmem:[#allocation2 + $0x80] sm:$0xff] %vm1634, %v978
      %2197 = vst.msk [vmem:[#allocation2 + $0x88] sm:$0xff] %vm1634, %v979
      %2198 = vst.msk [vmem:[#allocation2 + $0x90] sm:$0xff] %vm1634, %v980
      %2199 = vst.msk [vmem:[#allocation2 + $0x98] sm:$0xff] %vm1634, %v981
      %2200 = vst.msk [vmem:[#allocation2 + $0xa0] sm:$0xff] %vm1634, %v982
      %2201 = vst.msk [vmem:[#allocation2 + $0xa8] sm:$0xff] %vm1634, %v983
      %2202 = vst.msk [vmem:[#allocation2 + $0xb0] sm:$0xff] %vm1634, %v984
      %2203 = vst.msk [vmem:[#allocation2 + $0xb8] sm:$0xff] %vm1634, %v985
      %2204 = vst.msk [vmem:[#allocation2 + $0xc0] sm:$0xff] %vm1634, %v986
      %2205 = vst.msk [vmem:[#allocation2 + $0xc8] sm:$0xff] %vm1634, %v987
      %2206 = vst.msk [vmem:[#allocation2 + $0xd0] sm:$0xff] %vm1634, %v988
      %2207 = vst.msk [vmem:[#allocation2 + $0xd8] sm:$0xff] %vm1634, %v989
      %2208 = vst.msk [vmem:[#allocation2 + $0xe0] sm:$0xff] %vm1634, %v990
      %2209 = vst.msk [vmem:[#allocation2 + $0xe8] sm:$0xff] %vm1634, %v991
      %2210 = vst.msk [vmem:[#allocation2 + $0xf0] sm:$0xff] %vm1634, %v992
      %2211 = vst.msk [vmem:[#allocation2 + $0xf8] sm:$0xff] %vm1634, %v993
      // Predicated region
      $region37: #{multi_headed_attention.8} parent=31 // pred_check
        %p2212 = pneg %p348
      $region38: #{multi_headed_attention.8} parent=31 // pred_check_branch
        %2214 = sbr.rel (%p2212) target = $region40
      $region39: #{multi_headed_attention.8} parent=31 // pred_region
        %v2215 = vld [vmem:[#allocation4] sm:$0xff]
        %v2216 = vld [vmem:[#allocation4 + $0x8] sm:$0xff]
        %v2217 = vld [vmem:[#allocation4 + $0x10] sm:$0xff]
        %v2218 = vld [vmem:[#allocation4 + $0x18] sm:$0xff]
        %v2219 = vld [vmem:[#allocation4 + $0x20] sm:$0xff]
        %v2220 = vld [vmem:[#allocation4 + $0x28] sm:$0xff]
        %v2221 = vld [vmem:[#allocation4 + $0x30] sm:$0xff]
        %v2222 = vld [vmem:[#allocation4 + $0x38] sm:$0xff]
        %v2223 = vld [vmem:[#allocation4 + $0x40] sm:$0xff]
        %v2224 = vld [vmem:[#allocation4 + $0x48] sm:$0xff]
        %v2225 = vld [vmem:[#allocation4 + $0x50] sm:$0xff]
        %v2226 = vld [vmem:[#allocation4 + $0x58] sm:$0xff]
        %v2227 = vld [vmem:[#allocation4 + $0x60] sm:$0xff]
        %v2228 = vld [vmem:[#allocation4 + $0x68] sm:$0xff]
        %v2229 = vld [vmem:[#allocation4 + $0x70] sm:$0xff]
        %v2230 = vld [vmem:[#allocation4 + $0x78] sm:$0xff]
        %v2231 = vld [vmem:[#allocation4 + $0x80] sm:$0xff]
        %v2232 = vld [vmem:[#allocation4 + $0x88] sm:$0xff]
        %v2233 = vld [vmem:[#allocation4 + $0x90] sm:$0xff]
        %v2234 = vld [vmem:[#allocation4 + $0x98] sm:$0xff]
        %v2235 = vld [vmem:[#allocation4 + $0xa0] sm:$0xff]
        %v2236 = vld [vmem:[#allocation4 + $0xa8] sm:$0xff]
        %v2237 = vld [vmem:[#allocation4 + $0xb0] sm:$0xff]
        %v2238 = vld [vmem:[#allocation4 + $0xb8] sm:$0xff]
        %v2239 = vld [vmem:[#allocation4 + $0xc0] sm:$0xff]
        %v2240 = vld [vmem:[#allocation4 + $0xc8] sm:$0xff]
        %v2241 = vld [vmem:[#allocation4 + $0xd0] sm:$0xff]
        %v2242 = vld [vmem:[#allocation4 + $0xd8] sm:$0xff]
        %v2243 = vld [vmem:[#allocation4 + $0xe0] sm:$0xff]
        %v2244 = vld [vmem:[#allocation4 + $0xe8] sm:$0xff]
        %v2245 = vld [vmem:[#allocation4 + $0xf0] sm:$0xff]
        %v2246 = vld [vmem:[#allocation4 + $0xf8] sm:$0xff]
        %v2247 = vld [vmem:[#allocation3] sm:$0xff]
        %v2248 = vld [vmem:[#allocation3 + $0x8] sm:$0xff]
        %v2249 = vld [vmem:[#allocation3 + $0x10] sm:$0xff]
        %v2250 = vld [vmem:[#allocation3 + $0x18] sm:$0xff]
        %v2251 = vld [vmem:[#allocation3 + $0x20] sm:$0xff]
        %v2252 = vld [vmem:[#allocation3 + $0x28] sm:$0xff]
        %v2253 = vld [vmem:[#allocation3 + $0x30] sm:$0xff]
        %v2254 = vld [vmem:[#allocation3 + $0x38] sm:$0xff]
        %v2255 = vld [vmem:[#allocation3 + $0x40] sm:$0xff]
        %v2256 = vld [vmem:[#allocation3 + $0x48] sm:$0xff]
        %v2257 = vld [vmem:[#allocation3 + $0x50] sm:$0xff]
        %v2258 = vld [vmem:[#allocation3 + $0x58] sm:$0xff]
        %v2259 = vld [vmem:[#allocation3 + $0x60] sm:$0xff]
        %v2260 = vld [vmem:[#allocation3 + $0x68] sm:$0xff]
        %v2261 = vld [vmem:[#allocation3 + $0x70] sm:$0xff]
        %v2262 = vld [vmem:[#allocation3 + $0x78] sm:$0xff]
        %v2263 = vld [vmem:[#allocation3 + $0x80] sm:$0xff]
        %v2264 = vld [vmem:[#allocation3 + $0x88] sm:$0xff]
        %v2265 = vld [vmem:[#allocation3 + $0x90] sm:$0xff]
        %v2266 = vld [vmem:[#allocation3 + $0x98] sm:$0xff]
        %v2267 = vld [vmem:[#allocation3 + $0xa0] sm:$0xff]
        %v2268 = vld [vmem:[#allocation3 + $0xa8] sm:$0xff]
        %v2269 = vld [vmem:[#allocation3 + $0xb0] sm:$0xff]
        %v2270 = vld [vmem:[#allocation3 + $0xb8] sm:$0xff]
        %v2271 = vld [vmem:[#allocation3 + $0xc0] sm:$0xff]
        %v2272 = vld [vmem:[#allocation3 + $0xc8] sm:$0xff]
        %v2273 = vld [vmem:[#allocation3 + $0xd0] sm:$0xff]
        %v2274 = vld [vmem:[#allocation3 + $0xd8] sm:$0xff]
        %v2275 = vld [vmem:[#allocation3 + $0xe0] sm:$0xff]
        %v2276 = vld [vmem:[#allocation3 + $0xe8] sm:$0xff]
        %v2277 = vld [vmem:[#allocation3 + $0xf0] sm:$0xff]
        %v2278 = vld [vmem:[#allocation3 + $0xf8] sm:$0xff]
        %2280 = vset.pattern.permute.xlu0 0
        %2281 = vperm.xlu0 %2280, %v2247
        %v2282 = vpop.permute.xlu0 %2281
        %2285 = vset.pattern.permute.xlu0 0
        %2286 = vperm.xlu0 %2285, %v2248
        %v2287 = vpop.permute.xlu0 %2286
        %2290 = vset.pattern.permute.xlu0 0
        %2291 = vperm.xlu0 %2290, %v2249
        %v2292 = vpop.permute.xlu0 %2291
        %2295 = vset.pattern.permute.xlu0 0
        %2296 = vperm.xlu0 %2295, %v2250
        %v2297 = vpop.permute.xlu0 %2296
        %2300 = vset.pattern.permute.xlu0 0
        %2301 = vperm.xlu0 %2300, %v2251
        %v2302 = vpop.permute.xlu0 %2301
        %2305 = vset.pattern.permute.xlu0 0
        %2306 = vperm.xlu0 %2305, %v2252
        %v2307 = vpop.permute.xlu0 %2306
        %2310 = vset.pattern.permute.xlu0 0
        %2311 = vperm.xlu0 %2310, %v2253
        %v2312 = vpop.permute.xlu0 %2311
        %2315 = vset.pattern.permute.xlu0 0
        %2316 = vperm.xlu0 %2315, %v2254
        %v2317 = vpop.permute.xlu0 %2316
        %2320 = vset.pattern.permute.xlu0 0
        %2321 = vperm.xlu0 %2320, %v2255
        %v2322 = vpop.permute.xlu0 %2321
        %2325 = vset.pattern.permute.xlu0 0
        %2326 = vperm.xlu0 %2325, %v2256
        %v2327 = vpop.permute.xlu0 %2326
        %2330 = vset.pattern.permute.xlu0 0
        %2331 = vperm.xlu0 %2330, %v2257
        %v2332 = vpop.permute.xlu0 %2331
        %2335 = vset.pattern.permute.xlu0 0
        %2336 = vperm.xlu0 %2335, %v2258
        %v2337 = vpop.permute.xlu0 %2336
        %2340 = vset.pattern.permute.xlu0 0
        %2341 = vperm.xlu0 %2340, %v2259
        %v2342 = vpop.permute.xlu0 %2341
        %2345 = vset.pattern.permute.xlu0 0
        %2346 = vperm.xlu0 %2345, %v2260
        %v2347 = vpop.permute.xlu0 %2346
        %2350 = vset.pattern.permute.xlu0 0
        %2351 = vperm.xlu0 %2350, %v2261
        %v2352 = vpop.permute.xlu0 %2351
        %2355 = vset.pattern.permute.xlu0 0
        %2356 = vperm.xlu0 %2355, %v2262
        %v2357 = vpop.permute.xlu0 %2356
        %2360 = vset.pattern.permute.xlu0 0
        %2361 = vperm.xlu0 %2360, %v2263
        %v2362 = vpop.permute.xlu0 %2361
        %2365 = vset.pattern.permute.xlu0 0
        %2366 = vperm.xlu0 %2365, %v2264
        %v2367 = vpop.permute.xlu0 %2366
        %2370 = vset.pattern.permute.xlu0 0
        %2371 = vperm.xlu0 %2370, %v2265
        %v2372 = vpop.permute.xlu0 %2371
        %2375 = vset.pattern.permute.xlu0 0
        %2376 = vperm.xlu0 %2375, %v2266
        %v2377 = vpop.permute.xlu0 %2376
        %2380 = vset.pattern.permute.xlu0 0
        %2381 = vperm.xlu0 %2380, %v2267
        %v2382 = vpop.permute.xlu0 %2381
        %2385 = vset.pattern.permute.xlu0 0
        %2386 = vperm.xlu0 %2385, %v2268
        %v2387 = vpop.permute.xlu0 %2386
        %2390 = vset.pattern.permute.xlu0 0
        %2391 = vperm.xlu0 %2390, %v2269
        %v2392 = vpop.permute.xlu0 %2391
        %2395 = vset.pattern.permute.xlu0 0
        %2396 = vperm.xlu0 %2395, %v2270
        %v2397 = vpop.permute.xlu0 %2396
        %2400 = vset.pattern.permute.xlu0 0
        %2401 = vperm.xlu0 %2400, %v2271
        %v2402 = vpop.permute.xlu0 %2401
        %2405 = vset.pattern.permute.xlu0 0
        %2406 = vperm.xlu0 %2405, %v2272
        %v2407 = vpop.permute.xlu0 %2406
        %2410 = vset.pattern.permute.xlu0 0
        %2411 = vperm.xlu0 %2410, %v2273
        %v2412 = vpop.permute.xlu0 %2411
        %2415 = vset.pattern.permute.xlu0 0
        %2416 = vperm.xlu0 %2415, %v2274
        %v2417 = vpop.permute.xlu0 %2416
        %2420 = vset.pattern.permute.xlu0 0
        %2421 = vperm.xlu0 %2420, %v2275
        %v2422 = vpop.permute.xlu0 %2421
        %2425 = vset.pattern.permute.xlu0 0
        %2426 = vperm.xlu0 %2425, %v2276
        %v2427 = vpop.permute.xlu0 %2426
        %2430 = vset.pattern.permute.xlu0 0
        %2431 = vperm.xlu0 %2430, %v2277
        %v2432 = vpop.permute.xlu0 %2431
        %2435 = vset.pattern.permute.xlu0 0
        %2436 = vperm.xlu0 %2435, %v2278
        %v2437 = vpop.permute.xlu0 %2436
        %v2439 = vrcp.pop %v2282
        %v2440 = vmul.f32 %v2215, %v2439
        %v2441 = vrcp.pop %v2287
        %v2442 = vmul.f32 %v2216, %v2441
        %v2443 = vrcp.pop %v2292
        %v2444 = vmul.f32 %v2217, %v2443
        %v2445 = vrcp.pop %v2297
        %v2446 = vmul.f32 %v2218, %v2445
        %v2447 = vrcp.pop %v2302
        %v2448 = vmul.f32 %v2219, %v2447
        %v2449 = vrcp.pop %v2307
        %v2450 = vmul.f32 %v2220, %v2449
        %v2451 = vrcp.pop %v2312
        %v2452 = vmul.f32 %v2221, %v2451
        %v2453 = vrcp.pop %v2317
        %v2454 = vmul.f32 %v2222, %v2453
        %v2455 = vrcp.pop %v2322
        %v2456 = vmul.f32 %v2223, %v2455
        %v2457 = vrcp.pop %v2327
        %v2458 = vmul.f32 %v2224, %v2457
        %v2459 = vrcp.pop %v2332
        %v2460 = vmul.f32 %v2225, %v2459
        %v2461 = vrcp.pop %v2337
        %v2462 = vmul.f32 %v2226, %v2461
        %v2463 = vrcp.pop %v2342
        %v2464 = vmul.f32 %v2227, %v2463
        %v2465 = vrcp.pop %v2347
        %v2466 = vmul.f32 %v2228, %v2465
        %v2467 = vrcp.pop %v2352
        %v2468 = vmul.f32 %v2229, %v2467
        %v2469 = vrcp.pop %v2357
        %v2470 = vmul.f32 %v2230, %v2469
        %v2471 = vrcp.pop %v2362
        %v2472 = vmul.f32 %v2231, %v2471
        %v2473 = vrcp.pop %v2367
        %v2474 = vmul.f32 %v2232, %v2473
        %v2475 = vrcp.pop %v2372
        %v2476 = vmul.f32 %v2233, %v2475
        %v2477 = vrcp.pop %v2377
        %v2478 = vmul.f32 %v2234, %v2477
        %v2479 = vrcp.pop %v2382
        %v2480 = vmul.f32 %v2235, %v2479
        %v2481 = vrcp.pop %v2387
        %v2482 = vmul.f32 %v2236, %v2481
        %v2483 = vrcp.pop %v2392
        %v2484 = vmul.f32 %v2237, %v2483
        %v2485 = vrcp.pop %v2397
        %v2486 = vmul.f32 %v2238, %v2485
        %v2487 = vrcp.pop %v2402
        %v2488 = vmul.f32 %v2239, %v2487
        %v2489 = vrcp.pop %v2407
        %v2490 = vmul.f32 %v2240, %v2489
        %v2491 = vrcp.pop %v2412
        %v2492 = vmul.f32 %v2241, %v2491
        %v2493 = vrcp.pop %v2417
        %v2494 = vmul.f32 %v2242, %v2493
        %v2495 = vrcp.pop %v2422
        %v2496 = vmul.f32 %v2243, %v2495
        %v2497 = vrcp.pop %v2427
        %v2498 = vmul.f32 %v2244, %v2497
        %v2499 = vrcp.pop %v2432
        %v2500 = vmul.f32 %v2245, %v2499
        %v2501 = vrcp.pop %v2437
        %v2502 = vmul.f32 %v2246, %v2501
        %2503 = vst [vmem:[%s346] sm:$0xff] %v2440
        %2504 = vst [vmem:[%s346 + $0x8] sm:$0xff] %v2442
        %2505 = vst [vmem:[%s346 + $0x10] sm:$0xff] %v2444
        %2506 = vst [vmem:[%s346 + $0x18] sm:$0xff] %v2446
        %2507 = vst [vmem:[%s346 + $0x20] sm:$0xff] %v2448
        %2508 = vst [vmem:[%s346 + $0x28] sm:$0xff] %v2450
        %2509 = vst [vmem:[%s346 + $0x30] sm:$0xff] %v2452
        %2510 = vst [vmem:[%s346 + $0x38] sm:$0xff] %v2454
        %2511 = vst [vmem:[%s346 + $0x40] sm:$0xff] %v2456
        %2512 = vst [vmem:[%s346 + $0x48] sm:$0xff] %v2458
        %2513 = vst [vmem:[%s346 + $0x50] sm:$0xff] %v2460
        %2514 = vst [vmem:[%s346 + $0x58] sm:$0xff] %v2462
        %2515 = vst [vmem:[%s346 + $0x60] sm:$0xff] %v2464
        %2516 = vst [vmem:[%s346 + $0x68] sm:$0xff] %v2466
        %2517 = vst [vmem:[%s346 + $0x70] sm:$0xff] %v2468
        %2518 = vst [vmem:[%s346 + $0x78] sm:$0xff] %v2470
        %2519 = vst [vmem:[%s346 + $0x80] sm:$0xff] %v2472
        %2520 = vst [vmem:[%s346 + $0x88] sm:$0xff] %v2474
        %2521 = vst [vmem:[%s346 + $0x90] sm:$0xff] %v2476
        %2522 = vst [vmem:[%s346 + $0x98] sm:$0xff] %v2478
        %2523 = vst [vmem:[%s346 + $0xa0] sm:$0xff] %v2480
        %2524 = vst [vmem:[%s346 + $0xa8] sm:$0xff] %v2482
        %2525 = vst [vmem:[%s346 + $0xb0] sm:$0xff] %v2484
        %2526 = vst [vmem:[%s346 + $0xb8] sm:$0xff] %v2486
        %2527 = vst [vmem:[%s346 + $0xc0] sm:$0xff] %v2488
        %2528 = vst [vmem:[%s346 + $0xc8] sm:$0xff] %v2490
        %2529 = vst [vmem:[%s346 + $0xd0] sm:$0xff] %v2492
        %2530 = vst [vmem:[%s346 + $0xd8] sm:$0xff] %v2494
        %2531 = vst [vmem:[%s346 + $0xe0] sm:$0xff] %v2496
        %2532 = vst [vmem:[%s346 + $0xe8] sm:$0xff] %v2498
        %2533 = vst [vmem:[%s346 + $0xf0] sm:$0xff] %v2500
        %2534 = vst [vmem:[%s346 + $0xf8] sm:$0xff] %v2502
      $region40: #{multi_headed_attention.8} parent=31 // pred_fallthru
        _
      %s2535 = smul.u32 32, %s22
      %p2536 = scmp.lt.s32.totalorder %s20, 1
      %s2537 = scalar_select %p2536, %s20, 1
      %p2538 = scmp.lt.s32.totalorder %s21, 1
      %s2539 = scalar_select %p2538, %s21, 1
      %p2540 = scmp.lt.s32.totalorder %s2535, 31
      %s2541 = scalar_select %p2540, %s2535, 31
      %s2542 = smul.addr %s2539, 32
      %s2543 = sadd.s32 %s2541, %s2542
      %s2544 = smul.addr %s2537, 64
      %s2545 = sadd.s32 %s2543, %s2544
      %s2546 = smul.addr %s2545, 8
      %s2547 = scalar_lea.vmem %s3, %s2546
      // Predicated region
      $region41: #{multi_headed_attention.8} parent=31 // pred_check
        %p2548 = pneg %p152
      $region42: #{multi_headed_attention.8} parent=31 // pred_check_branch
        %2550 = sbr.rel (%p2548) target = $region44
      $region43: #{multi_headed_attention.8} parent=31 // pred_region
        %s2551 = smul.u32 32, %s22
      $region44: #{multi_headed_attention.8} parent=31 // pred_fallthru
        _
    $region32: #{multi_headed_attention.8} parent=5 // pred_fallthru
      _
    %p2552 = scmp.le.s32.totalorder 2, %s9
    // Predicated region
    $region45: #{multi_headed_attention.8} parent=5 // pred_check
      %p2553 = pneg %p2552
    $region46: #{multi_headed_attention.8} parent=5 // pred_check_branch
      %2555 = sbr.rel (%p2553) target = $region48
    $region47: #{multi_headed_attention.8} parent=5 // pred_region
      %s2556 = ssub.s32 %s9, 2
      // Predicated region
      $region49: #{multi_headed_attention.8} parent=47 // pred_check
        %p2557 = pneg %p158
      $region50: #{multi_headed_attention.8} parent=47 // pred_check_branch
        %2559 = sbr.rel (%p2557) target = $region52
      $region51: #{multi_headed_attention.8} parent=47 // pred_region
        %s2560 = smul.u32 32, %s26
        %p2561 = scmp.lt.s32.totalorder %s24, 1
        %s2562 = scalar_select %p2561, %s24, 1
        %p2563 = scmp.lt.s32.totalorder %s25, 1
        %s2564 = scalar_select %p2563, %s25, 1
        %p2565 = scmp.lt.s32.totalorder %s2560, 31
        %s2566 = scalar_select %p2565, %s2560, 31
        %s2567 = smul.addr %s2564, 32
        %s2568 = sadd.s32 %s2566, %s2567
        %s2569 = smul.addr %s2562, 64
        %s2570 = sadd.s32 %s2568, %s2569
        %s2571 = smul.addr %s2570, 8
        %s2572 = scalar_lea.vmem %s3, %s2571
      $region52: #{multi_headed_attention.8} parent=47 // pred_fallthru
        _
    $region48: #{multi_headed_attention.8} parent=5 // pred_fallthru
      _
  $region6: #{multi_headed_attention.8} parent=0 // loop_footer
    %s13 = sadd.s32 1, %s9
  $region7: #{multi_headed_attention.8} parent=0 // loop_footer_branch
    %8 = sbr.rel target = $region3
  $region8: #{multi_headed_attention.8} parent=0 // loop_exit
    _

</llo_original>
